<compile_context>
chip_gen: v5e
topology: v5e:2x2
jax: 0.10.0
libtpu: 0.0.40
codegen_flags: <defaults>
</compile_context>

<pallas_src>
import functools

import jax
import jax.numpy as jnp
from jax.experimental import pallas as pl
from jax.experimental.pallas import tpu as pltpu


# ---------------------------------------------------------------------------
# Fused kernel: conv1..conv5 -> (folded) BatchNorm -> mean pool,
# `graphs` graphs per grid step.
# ---------------------------------------------------------------------------
def _fused_gcn_kernel(
    x_ref,                                   # (1, G*n, F) bf16 node features (G graphs)
    adj_ref,                                 # (n, n)      bf16 shared binary adjacency
    w1s_ref, w1n_ref, b1_ref,
    w2s_ref, w2n_ref, b2_ref,
    w3s_ref, w3n_ref, b3_ref,
    w4s_ref, w4n_ref, b4_ref,
    w5s_ref, w5n_ref, b5_ref,                # conv5 with BatchNorm(eval) folded in
    out_ref,                                 # (1, G, H) f32 pooled per-graph features
    xcat_ref,                                # VMEM scratch (G*n, 4H) bf16
    *, hidden, node_num, graphs, conv1_neigh_first):
    H = hidden
    n = node_num
    G = graphs

    def spmm(hb):
        # Per-graph aggregation A @ h_g for g = 0..G-1 with the SHARED adjacency;
        # the (G*n)^2 block-diagonal matrix is never materialized.  adj_ref is
        # read at each matmul site (not hoisted) to avoid pinning vregs.
        parts = [
            jnp.dot(adj_ref[...], hb[g * n:(g + 1) * n, :],
                    preferred_element_type=jnp.float32)
            for g in range(G)
        ]
        return parts[0] if G == 1 else jnp.concatenate(parts, axis=0)

    def gconv(hb, ws_ref, wn_ref, b_ref, neigh_first):
        """PyG GraphConv: h @ W_self + (A @ h) @ W_neigh + b  (bf16 MXU, f32 acc)."""
        root = jnp.dot(hb, ws_ref[...], preferred_element_type=jnp.float32)
        if neigh_first:                      # fan_in <= fan_out: (A @ h) @ Wn
            agg = spmm(hb)
            neigh = jnp.dot(agg.astype(jnp.bfloat16), wn_ref[...],
                            preferred_element_type=jnp.float32)
        else:                                # fan_in > fan_out: A @ (h @ Wn)
            hw = jnp.dot(hb, wn_ref[...], preferred_element_type=jnp.float32)
            neigh = spmm(hw.astype(jnp.bfloat16))
        return root + neigh + b_ref[...]     # bias/relu stay f32 (no bf16 VPU on v5e)

    h = x_ref[0]                             # (G*n, F) bf16 (cast on host)

    # conv1..conv4 (+ReLU): one bf16 cast per layer; the bf16 result both feeds
    # the next layer and is written into the xcat scratch (no separate concat op).
    convs = ((w1s_ref, w1n_ref, b1_ref, conv1_neigh_first),
             (w2s_ref, w2n_ref, b2_ref, True),
             (w3s_ref, w3n_ref, b3_ref, True),
             (w4s_ref, w4n_ref, b4_ref, True))
    for k, (ws, wn, b, nf) in enumerate(convs):
        h = jnp.maximum(gconv(h, ws, wn, b, nf), 0.0).astype(jnp.bfloat16)
        xcat_ref[:, k * H:(k + 1) * H] = h

    # conv5 on the concatenation (K = 4H), split into 4 accumulated chunks so only
    # one (G*n, H) operand is live at a time.  fan_in (4H) > fan_out (H), so the
    # adjacency aggregation is applied after the weight matmul.  BatchNorm(eval)
    # is already folded into w5s/w5n/b5 on the host.
    root = jnp.zeros((G * n, H), jnp.float32)
    hw = jnp.zeros((G * n, H), jnp.float32)
    for k in range(4):
        chunk = xcat_ref[:, k * H:(k + 1) * H]                       # bf16 (G*n, H)
        root = root + jnp.dot(chunk, w5s_ref[k * H:(k + 1) * H, :],
                              preferred_element_type=jnp.float32)
        hw = hw + jnp.dot(chunk, w5n_ref[k * H:(k + 1) * H, :],
                          preferred_element_type=jnp.float32)
    x5 = root + spmm(hw.astype(jnp.bfloat16)) + b5_ref[...]          # (G*n, H) f32

    # global_mean_pool per graph (dropout(p=0.5, eval) = identity).  The tiny
    # (H -> class_num) Linear is done in XLA in the wrapper to keep the kernel
    # output lane-dense.
    for g in range(G):
        out_ref[0, g:g + 1, :] = jnp.mean(x5[g * n:(g + 1) * n, :],
                                          axis=0, keepdims=True)


# ---------------------------------------------------------------------------
# Wrapper: one fused pallas_call for conv1..conv5 + BN + pooling, then the
# final Linear in plain XLA.
# ---------------------------------------------------------------------------
def fc_based_gcn_forward(x3d, adj, params, *, graphs_per_step=None):
    """x3d: (B, node_num, F) f32 node features; adj: (node_num, node_num) shared adjacency."""
    batch, node_num, feat = x3d.shape
    hidden = params["lin_w"].shape[0]

    if graphs_per_step is None:
        # Largest power-of-two divisor of batch (capped so per-step buffers stay
        # far under scoped-VMEM defaults), preferring >= 2 grid steps so both
        # TensorCores get work where megacore applies (v7x).
        g = 1
        while g * 2 <= min(batch, 64) and batch % (g * 2) == 0:
            g *= 2
        if g > 1 and batch // g < 2:
            g //= 2
        graphs_per_step = g
    assert batch % graphs_per_step == 0
    num_steps = batch // graphs_per_step

    # Fold eval-mode BatchNorm into conv5: (x@Ws + A@x@Wn + b)*scale + shift
    #   == x@(Ws*scale) + A@x@(Wn*scale) + (b*scale + shift).
    w5s, w5n, b5 = params["conv5"]
    scale, shift = params["bn_scale"], params["bn_shift"]
    w5s = w5s * scale
    w5n = w5n * scale
    b5 = b5 * scale + shift

    conv_inputs = []
    for ws, wn, b in (params["conv1"], params["conv2"], params["conv3"],
                      params["conv4"], (w5s, w5n, b5)):
        conv_inputs += [ws.astype(jnp.bfloat16), wn.astype(jnp.bfloat16), b]

    # bf16 node features, grouped so each grid step owns `graphs_per_step` graphs.
    x_grp = x3d.astype(jnp.bfloat16).reshape(
        num_steps, graphs_per_step * node_num, feat)

    inputs = [x_grp, adj.astype(jnp.bfloat16)] + conv_inputs

    def _resident(arr):
        # Full-array block with a constant block index: DMA'd once, VMEM-resident.
        zeros = (0,) * arr.ndim
        return pl.BlockSpec(arr.shape, lambda s, _z=zeros: _z)

    in_specs = ([pl.BlockSpec((1, graphs_per_step * node_num, feat),
                              lambda s: (s, 0, 0))]
                + [_resident(a) for a in inputs[1:]])

    pooled = pl.pallas_call(
        functools.partial(_fused_gcn_kernel,
                          hidden=hidden,
                          node_num=node_num,
                          graphs=graphs_per_step,
                          conv1_neigh_first=(feat <= hidden)),
        out_shape=jax.ShapeDtypeStruct((num_steps, graphs_per_step, hidden),
                                       jnp.float32),
        grid_spec=pltpu.PrefetchScalarGridSpec(
            num_scalar_prefetch=0,
            grid=(num_steps,),
            in_specs=in_specs,
            out_specs=pl.BlockSpec((1, graphs_per_step, hidden),
                                   lambda s: (s, 0, 0)),
            scratch_shapes=[pltpu.VMEM(
                (graphs_per_step * node_num, 4 * hidden), jnp.bfloat16)],
        ),
        compiler_params=pltpu.CompilerParams(
            dimension_semantics=("parallel",)),      # megacore batch split on v7x
    )(*inputs)

    pooled = pooled.reshape(batch, hidden)
    # Final Linear (hidden -> class_num=2) is 2 lanes wide; run it in XLA so the
    # kernel's output store stays lane-dense.  Dropout(p=0.5, eval) = identity.
    return pooled @ params["lin_w"] + params["lin_b"]


# ---------------------------------------------------------------------------
# Pure-JAX reference (same eval-mode semantics) for a correctness check.
# ---------------------------------------------------------------------------
def _reference_forward(x3d, adj, params):
    def gconv(h, ws, wn, b):
        agg = jnp.einsum("ij,bjf->bif", adj, h)
        return (jnp.einsum("bnf,fh->bnh", h, ws)
                + jnp.einsum("bnf,fh->bnh", agg, wn) + b)

    x1 = jax.nn.relu(gconv(x3d, *params["conv1"]))
    x2 = jax.nn.relu(gconv(x1, *params["conv2"]))
    x3 = jax.nn.relu(gconv(x2, *params["conv3"]))
    x4 = jax.nn.relu(gconv(x3, *params["conv4"]))
    xcat = jnp.concatenate((x1, x2, x3, x4), axis=-1)
    x5 = gconv(xcat, *params["conv5"])
    x5 = x5 * params["bn_scale"] + params["bn_shift"]
    pooled = jnp.mean(x5, axis=1)
    return pooled @ params["lin_w"] + params["lin_b"]


def _init_graphconv(key, fan_in, fan_out):
    k1, k2, k3 = jax.random.split(key, 3)
    lim = 1.0 / jnp.sqrt(float(fan_in))
    w_self = jax.random.uniform(k1, (fan_in, fan_out), jnp.float32, -lim, lim)
    w_neigh = jax.random.uniform(k2, (fan_in, fan_out), jnp.float32, -lim, lim)
    bias = jax.random.uniform(k3, (1, fan_out), jnp.float32, -lim, lim)
    return (w_self, w_neigh, bias)


if __name__ == "__main__":
    # Small shapes consistent with the module (real model: node_num=140, hidden=128).
    node_num = 16          # feature dim == nodes per graph (connectome rows)
    hidden = 32
    class_num = 2
    batch_size = 16        # -> 2 grid steps of 8 graphs each

    key = jax.random.PRNGKey(0)
    keys = jax.random.split(key, 16)

    # Node features: each node's feature vector is its connectome row.
    x = jax.random.normal(keys[0], (batch_size, node_num, node_num), jnp.float32)

    # Shared binary adjacency (symmetric, no self loops): in the reference model
    # edge_index is built once from the mean connectome and reused for every graph.
    conn = jax.random.uniform(keys[1], (node_num, node_num), jnp.float32)
    conn = (conn + conn.T) * 0.5
    adj = (conn > 0.5).astype(jnp.float32)
    adj = adj * (1.0 - jnp.eye(node_num, dtype=jnp.float32))

    # Deterministic synthetic parameters (not a checkpoint load).
    params = {
        "conv1": _init_graphconv(keys[2], node_num, hidden),
        "conv2": _init_graphconv(keys[3], hidden, hidden),
        "conv3": _init_graphconv(keys[4], hidden, hidden),
        "conv4": _init_graphconv(keys[5], hidden, hidden),
        "conv5": _init_graphconv(keys[6], 4 * hidden, hidden),
    }
    # BatchNorm (eval mode): general fold of running stats + affine params.
    gamma = jax.random.uniform(keys[7], (1, hidden), jnp.float32, 0.5, 1.5)
    beta = jax.random.uniform(keys[8], (1, hidden), jnp.float32, -0.1, 0.1)
    running_mean = 0.1 * jax.random.normal(keys[9], (1, hidden), jnp.float32)
    running_var = jax.random.uniform(keys[10], (1, hidden), jnp.float32, 0.5, 1.5)
    eps = 1e-5
    bn_scale = gamma / jnp.sqrt(running_var + eps)
    params["bn_scale"] = bn_scale
    params["bn_shift"] = beta - running_mean * bn_scale
    # Linear(hidden -> class_num), stored transposed as (hidden, class_num).
    lim = 1.0 / jnp.sqrt(float(hidden))
    params["lin_w"] = jax.random.uniform(keys[11], (hidden, class_num),
                                         jnp.float32, -lim, lim)
    params["lin_b"] = jax.random.uniform(keys[12], (1, class_num),
                                         jnp.float32, -lim, lim)

    fwd = jax.jit(fc_based_gcn_forward)
    out = jax.block_until_ready(fwd(x, adj, params))

    ref = _reference_forward(x, adj, params)
    assert out.shape == (batch_size, class_num)
    assert bool(jnp.all(jnp.isfinite(out)))
    # bf16 MXU operands with f32 accumulation -> loose tolerance vs f32 reference.
    assert bool(jnp.allclose(out, ref, rtol=1e-1, atol=1e-1)), (out, ref)
    print("KERNEL_OK")
</pallas_src>

<mosaic_0001>
module attributes {stable_mosaic.version = 11 : i64} {
  func.func @_fused_gcn_kernel(%arg0: i32, %arg1: memref<1x128x16xbf16, #tpu.memory_space<vmem>>, %arg2: memref<16x16xbf16, #tpu.memory_space<vmem>>, %arg3: memref<16x32xbf16, #tpu.memory_space<vmem>>, %arg4: memref<16x32xbf16, #tpu.memory_space<vmem>>, %arg5: memref<1x32xf32, #tpu.memory_space<vmem>>, %arg6: memref<32x32xbf16, #tpu.memory_space<vmem>>, %arg7: memref<32x32xbf16, #tpu.memory_space<vmem>>, %arg8: memref<1x32xf32, #tpu.memory_space<vmem>>, %arg9: memref<32x32xbf16, #tpu.memory_space<vmem>>, %arg10: memref<32x32xbf16, #tpu.memory_space<vmem>>, %arg11: memref<1x32xf32, #tpu.memory_space<vmem>>, %arg12: memref<32x32xbf16, #tpu.memory_space<vmem>>, %arg13: memref<32x32xbf16, #tpu.memory_space<vmem>>, %arg14: memref<1x32xf32, #tpu.memory_space<vmem>>, %arg15: memref<128x32xbf16, #tpu.memory_space<vmem>>, %arg16: memref<128x32xbf16, #tpu.memory_space<vmem>>, %arg17: memref<1x32xf32, #tpu.memory_space<vmem>>, %arg18: memref<1x8x32xf32, #tpu.memory_space<vmem>>, %arg19: memref<128x128xbf16, #tpu.memory_space<vmem>>) attributes {dimension_semantics = [#tpu.dimension_semantics<parallel>], iteration_bounds = array<i64: 2>, scalar_prefetch = 0 : i64, scratch_operands = 1 : i64, tpu.core_type = #tpu.core_type<tc>, window_params = [{transform_indices = @transform_0, window_bounds = array<i64: 1, 128, 16>}, {pipeline_mode = #tpu.pipeline_mode<synchronous>, transform_indices = @transform_1, window_bounds = array<i64: 16, 16>}, {pipeline_mode = #tpu.pipeline_mode<synchronous>, transform_indices = @transform_2, window_bounds = array<i64: 16, 32>}, {pipeline_mode = #tpu.pipeline_mode<synchronous>, transform_indices = @transform_3, window_bounds = array<i64: 16, 32>}, {pipeline_mode = #tpu.pipeline_mode<synchronous>, transform_indices = @transform_4, window_bounds = array<i64: 1, 32>}, {pipeline_mode = #tpu.pipeline_mode<synchronous>, transform_indices = @transform_5, window_bounds = array<i64: 32, 32>}, {pipeline_mode = #tpu.pipeline_mode<synchronous>, transform_indices = @transform_6, window_bounds = array<i64: 32, 32>}, {pipeline_mode = #tpu.pipeline_mode<synchronous>, transform_indices = @transform_7, window_bounds = array<i64: 1, 32>}, {pipeline_mode = #tpu.pipeline_mode<synchronous>, transform_indices = @transform_8, window_bounds = array<i64: 32, 32>}, {pipeline_mode = #tpu.pipeline_mode<synchronous>, transform_indices = @transform_9, window_bounds = array<i64: 32, 32>}, {pipeline_mode = #tpu.pipeline_mode<synchronous>, transform_indices = @transform_10, window_bounds = array<i64: 1, 32>}, {pipeline_mode = #tpu.pipeline_mode<synchronous>, transform_indices = @transform_11, window_bounds = array<i64: 32, 32>}, {pipeline_mode = #tpu.pipeline_mode<synchronous>, transform_indices = @transform_12, window_bounds = array<i64: 32, 32>}, {pipeline_mode = #tpu.pipeline_mode<synchronous>, transform_indices = @transform_13, window_bounds = array<i64: 1, 32>}, {pipeline_mode = #tpu.pipeline_mode<synchronous>, transform_indices = @transform_14, window_bounds = array<i64: 128, 32>}, {pipeline_mode = #tpu.pipeline_mode<synchronous>, transform_indices = @transform_15, window_bounds = array<i64: 128, 32>}, {pipeline_mode = #tpu.pipeline_mode<synchronous>, transform_indices = @transform_16, window_bounds = array<i64: 1, 32>}, {transform_indices = @transform_17, window_bounds = array<i64: 1, 8, 32>}]} {
    %c0 = arith.constant 0 : index
    %c0_0 = arith.constant 0 : index
    %c0_1 = arith.constant 0 : index
    %0 = vector.load %arg1[%c0, %c0_0, %c0_1] : memref<1x128x16xbf16, #tpu.memory_space<vmem>>, vector<1x128x16xbf16>
    %1 = vector.shape_cast %0 : vector<1x128x16xbf16> to vector<128x16xbf16>
    %c0_2 = arith.constant 0 : index
    %c0_3 = arith.constant 0 : index
    %2 = vector.load %arg3[%c0_2, %c0_3] : memref<16x32xbf16, #tpu.memory_space<vmem>>, vector<16x32xbf16>
    %cst = arith.constant dense<0.000000e+00> : vector<128x32xf32>
    %3 = tpu.matmul %1, %2, %cst {dimension_numbers = #tpu.dot_dimension_numbers<[1], [0], [0], [1], [0, 0, 1, 1], [], []>} : vector<128x16xbf16>, vector<16x32xbf16>, vector<128x32xf32> -> vector<128x32xf32>
    %c0_4 = arith.constant 0 : index
    %c0_5 = arith.constant 0 : index
    %4 = vector.load %arg2[%c0_4, %c0_5] : memref<16x16xbf16, #tpu.memory_space<vmem>>, vector<16x16xbf16>
    %5 = vector.extract_strided_slice %1 {offsets = [0, 0], sizes = [16, 16], strides = [1, 1]} : vector<128x16xbf16> to vector<16x16xbf16>
    %cst_6 = arith.constant dense<0.000000e+00> : vector<16x16xf32>
    %6 = tpu.matmul %4, %5, %cst_6 {dimension_numbers = #tpu.dot_dimension_numbers<[1], [0], [0], [1], [0, 0, 1, 1], [], []>} : vector<16x16xbf16>, vector<16x16xbf16>, vector<16x16xf32> -> vector<16x16xf32>
    %c0_7 = arith.constant 0 : index
    %c0_8 = arith.constant 0 : index
    %7 = vector.load %arg2[%c0_7, %c0_8] : memref<16x16xbf16, #tpu.memory_space<vmem>>, vector<16x16xbf16>
    %8 = vector.extract_strided_slice %1 {offsets = [16, 0], sizes = [16, 16], strides = [1, 1]} : vector<128x16xbf16> to vector<16x16xbf16>
    %cst_9 = arith.constant dense<0.000000e+00> : vector<16x16xf32>
    %9 = tpu.matmul %7, %8, %cst_9 {dimension_numbers = #tpu.dot_dimension_numbers<[1], [0], [0], [1], [0, 0, 1, 1], [], []>} : vector<16x16xbf16>, vector<16x16xbf16>, vector<16x16xf32> -> vector<16x16xf32>
    %c0_10 = arith.constant 0 : index
    %c0_11 = arith.constant 0 : index
    %10 = vector.load %arg2[%c0_10, %c0_11] : memref<16x16xbf16, #tpu.memory_space<vmem>>, vector<16x16xbf16>
    %11 = vector.extract_strided_slice %1 {offsets = [32, 0], sizes = [16, 16], strides = [1, 1]} : vector<128x16xbf16> to vector<16x16xbf16>
    %cst_12 = arith.constant dense<0.000000e+00> : vector<16x16xf32>
    %12 = tpu.matmul %10, %11, %cst_12 {dimension_numbers = #tpu.dot_dimension_numbers<[1], [0], [0], [1], [0, 0, 1, 1], [], []>} : vector<16x16xbf16>, vector<16x16xbf16>, vector<16x16xf32> -> vector<16x16xf32>
    %c0_13 = arith.constant 0 : index
    %c0_14 = arith.constant 0 : index
    %13 = vector.load %arg2[%c0_13, %c0_14] : memref<16x16xbf16, #tpu.memory_space<vmem>>, vector<16x16xbf16>
    %14 = vector.extract_strided_slice %1 {offsets = [48, 0], sizes = [16, 16], strides = [1, 1]} : vector<128x16xbf16> to vector<16x16xbf16>
    %cst_15 = arith.constant dense<0.000000e+00> : vector<16x16xf32>
    %15 = tpu.matmul %13, %14, %cst_15 {dimension_numbers = #tpu.dot_dimension_numbers<[1], [0], [0], [1], [0, 0, 1, 1], [], []>} : vector<16x16xbf16>, vector<16x16xbf16>, vector<16x16xf32> -> vector<16x16xf32>
    %c0_16 = arith.constant 0 : index
    %c0_17 = arith.constant 0 : index
    %16 = vector.load %arg2[%c0_16, %c0_17] : memref<16x16xbf16, #tpu.memory_space<vmem>>, vector<16x16xbf16>
    %17 = vector.extract_strided_slice %1 {offsets = [64, 0], sizes = [16, 16], strides = [1, 1]} : vector<128x16xbf16> to vector<16x16xbf16>
    %cst_18 = arith.constant dense<0.000000e+00> : vector<16x16xf32>
    %18 = tpu.matmul %16, %17, %cst_18 {dimension_numbers = #tpu.dot_dimension_numbers<[1], [0], [0], [1], [0, 0, 1, 1], [], []>} : vector<16x16xbf16>, vector<16x16xbf16>, vector<16x16xf32> -> vector<16x16xf32>
    %c0_19 = arith.constant 0 : index
    %c0_20 = arith.constant 0 : index
    %19 = vector.load %arg2[%c0_19, %c0_20] : memref<16x16xbf16, #tpu.memory_space<vmem>>, vector<16x16xbf16>
    %20 = vector.extract_strided_slice %1 {offsets = [80, 0], sizes = [16, 16], strides = [1, 1]} : vector<128x16xbf16> to vector<16x16xbf16>
    %cst_21 = arith.constant dense<0.000000e+00> : vector<16x16xf32>
    %21 = tpu.matmul %19, %20, %cst_21 {dimension_numbers = #tpu.dot_dimension_numbers<[1], [0], [0], [1], [0, 0, 1, 1], [], []>} : vector<16x16xbf16>, vector<16x16xbf16>, vector<16x16xf32> -> vector<16x16xf32>
    %c0_22 = arith.constant 0 : index
    %c0_23 = arith.constant 0 : index
    %22 = vector.load %arg2[%c0_22, %c0_23] : memref<16x16xbf16, #tpu.memory_space<vmem>>, vector<16x16xbf16>
    %23 = vector.extract_strided_slice %1 {offsets = [96, 0], sizes = [16, 16], strides = [1, 1]} : vector<128x16xbf16> to vector<16x16xbf16>
    %cst_24 = arith.constant dense<0.000000e+00> : vector<16x16xf32>
    %24 = tpu.matmul %22, %23, %cst_24 {dimension_numbers = #tpu.dot_dimension_numbers<[1], [0], [0], [1], [0, 0, 1, 1], [], []>} : vector<16x16xbf16>, vector<16x16xbf16>, vector<16x16xf32> -> vector<16x16xf32>
    %c0_25 = arith.constant 0 : index
    %c0_26 = arith.constant 0 : index
    %25 = vector.load %arg2[%c0_25, %c0_26] : memref<16x16xbf16, #tpu.memory_space<vmem>>, vector<16x16xbf16>
    %26 = vector.extract_strided_slice %1 {offsets = [112, 0], sizes = [16, 16], strides = [1, 1]} : vector<128x16xbf16> to vector<16x16xbf16>
    %cst_27 = arith.constant dense<0.000000e+00> : vector<16x16xf32>
    %27 = tpu.matmul %25, %26, %cst_27 {dimension_numbers = #tpu.dot_dimension_numbers<[1], [0], [0], [1], [0, 0, 1, 1], [], []>} : vector<16x16xbf16>, vector<16x16xbf16>, vector<16x16xf32> -> vector<16x16xf32>
    %28 = tpu.concatenate %6, %9, %12, %15, %18, %21, %24, %27 in 0 : vector<16x16xf32>, vector<16x16xf32>, vector<16x16xf32>, vector<16x16xf32>, vector<16x16xf32>, vector<16x16xf32>, vector<16x16xf32>, vector<16x16xf32> -> vector<128x16xf32>
    %29 = arith.truncf %28 : vector<128x16xf32> to vector<128x16xbf16>
    %c0_28 = arith.constant 0 : index
    %c0_29 = arith.constant 0 : index
    %30 = vector.load %arg4[%c0_28, %c0_29] : memref<16x32xbf16, #tpu.memory_space<vmem>>, vector<16x32xbf16>
    %cst_30 = arith.constant dense<0.000000e+00> : vector<128x32xf32>
    %31 = tpu.matmul %29, %30, %cst_30 {dimension_numbers = #tpu.dot_dimension_numbers<[1], [0], [0], [1], [0, 0, 1, 1], [], []>} : vector<128x16xbf16>, vector<16x32xbf16>, vector<128x32xf32> -> vector<128x32xf32>
    %32 = arith.addf %3, %31 : vector<128x32xf32>
    %c0_31 = arith.constant 0 : index
    %c0_32 = arith.constant 0 : index
    %33 = vector.load %arg5[%c0_31, %c0_32] : memref<1x32xf32, #tpu.memory_space<vmem>>, vector<1x32xf32>
    %34 = vector.broadcast %33 : vector<1x32xf32> to vector<128x32xf32>
    %35 = arith.addf %32, %34 : vector<128x32xf32>
    %cst_33 = arith.constant 0.000000e+00 : f32
    %36 = vector.broadcast %cst_33 : f32 to vector<128x32xf32>
    %37 = arith.maximumf %35, %36 : vector<128x32xf32>
    %38 = arith.truncf %37 : vector<128x32xf32> to vector<128x32xbf16>
    %c0_34 = arith.constant 0 : index
    %c0_35 = arith.constant 0 : index
    %39 = vector.load %arg19[%c0_34, %c0_35] : memref<128x128xbf16, #tpu.memory_space<vmem>>, vector<128x32xbf16>
    tpu.vector_store %arg19[%c0_34, %c0_35], %38 {strides = array<i32>} : memref<128x128xbf16, #tpu.memory_space<vmem>>, vector<128x32xbf16>,
    %c0_36 = arith.constant 0 : index
    %c0_37 = arith.constant 0 : index
    %40 = vector.load %arg6[%c0_36, %c0_37] : memref<32x32xbf16, #tpu.memory_space<vmem>>, vector<32x32xbf16>
    %cst_38 = arith.constant dense<0.000000e+00> : vector<128x32xf32>
    %41 = tpu.matmul %38, %40, %cst_38 {dimension_numbers = #tpu.dot_dimension_numbers<[1], [0], [0], [1], [0, 0, 1, 1], [], []>} : vector<128x32xbf16>, vector<32x32xbf16>, vector<128x32xf32> -> vector<128x32xf32>
    %c0_39 = arith.constant 0 : index
    %c0_40 = arith.constant 0 : index
    %42 = vector.load %arg2[%c0_39, %c0_40] : memref<16x16xbf16, #tpu.memory_space<vmem>>, vector<16x16xbf16>
    %43 = vector.extract_strided_slice %38 {offsets = [0, 0], sizes = [16, 32], strides = [1, 1]} : vector<128x32xbf16> to vector<16x32xbf16>
    %cst_41 = arith.constant dense<0.000000e+00> : vector<16x32xf32>
    %44 = tpu.matmul %42, %43, %cst_41 {dimension_numbers = #tpu.dot_dimension_numbers<[1], [0], [0], [1], [0, 0, 1, 1], [], []>} : vector<16x16xbf16>, vector<16x32xbf16>, vector<16x32xf32> -> vector<16x32xf32>
    %c0_42 = arith.constant 0 : index
    %c0_43 = arith.constant 0 : index
    %45 = vector.load %arg2[%c0_42, %c0_43] : memref<16x16xbf16, #tpu.memory_space<vmem>>, vector<16x16xbf16>
    %46 = vector.extract_strided_slice %38 {offsets = [16, 0], sizes = [16, 32], strides = [1, 1]} : vector<128x32xbf16> to vector<16x32xbf16>
    %cst_44 = arith.constant dense<0.000000e+00> : vector<16x32xf32>
    %47 = tpu.matmul %45, %46, %cst_44 {dimension_numbers = #tpu.dot_dimension_numbers<[1], [0], [0], [1], [0, 0, 1, 1], [], []>} : vector<16x16xbf16>, vector<16x32xbf16>, vector<16x32xf32> -> vector<16x32xf32>
    %c0_45 = arith.constant 0 : index
    %c0_46 = arith.constant 0 : index
    %48 = vector.load %arg2[%c0_45, %c0_46] : memref<16x16xbf16, #tpu.memory_space<vmem>>, vector<16x16xbf16>
    %49 = vector.extract_strided_slice %38 {offsets = [32, 0], sizes = [16, 32], strides = [1, 1]} : vector<128x32xbf16> to vector<16x32xbf16>
    %cst_47 = arith.constant dense<0.000000e+00> : vector<16x32xf32>
    %50 = tpu.matmul %48, %49, %cst_47 {dimension_numbers = #tpu.dot_dimension_numbers<[1], [0], [0], [1], [0, 0, 1, 1], [], []>} : vector<16x16xbf16>, vector<16x32xbf16>, vector<16x32xf32> -> vector<16x32xf32>
    %c0_48 = arith.constant 0 : index
    %c0_49 = arith.constant 0 : index
    %51 = vector.load %arg2[%c0_48, %c0_49] : memref<16x16xbf16, #tpu.memory_space<vmem>>, vector<16x16xbf16>
    %52 = vector.extract_strided_slice %38 {offsets = [48, 0], sizes = [16, 32], strides = [1, 1]} : vector<128x32xbf16> to vector<16x32xbf16>
    %cst_50 = arith.constant dense<0.000000e+00> : vector<16x32xf32>
    %53 = tpu.matmul %51, %52, %cst_50 {dimension_numbers = #tpu.dot_dimension_numbers<[1], [0], [0], [1], [0, 0, 1, 1], [], []>} : vector<16x16xbf16>, vector<16x32xbf16>, vector<16x32xf32> -> vector<16x32xf32>
    %c0_51 = arith.constant 0 : index
    %c0_52 = arith.constant 0 : index
    %54 = vector.load %arg2[%c0_51, %c0_52] : memref<16x16xbf16, #tpu.memory_space<vmem>>, vector<16x16xbf16>
    %55 = vector.extract_strided_slice %38 {offsets = [64, 0], sizes = [16, 32], strides = [1, 1]} : vector<128x32xbf16> to vector<16x32xbf16>
    %cst_53 = arith.constant dense<0.000000e+00> : vector<16x32xf32>
    %56 = tpu.matmul %54, %55, %cst_53 {dimension_numbers = #tpu.dot_dimension_numbers<[1], [0], [0], [1], [0, 0, 1, 1], [], []>} : vector<16x16xbf16>, vector<16x32xbf16>, vector<16x32xf32> -> vector<16x32xf32>
    %c0_54 = arith.constant 0 : index
    %c0_55 = arith.constant 0 : index
    %57 = vector.load %arg2[%c0_54, %c0_55] : memref<16x16xbf16, #tpu.memory_space<vmem>>, vector<16x16xbf16>
    %58 = vector.extract_strided_slice %38 {offsets = [80, 0], sizes = [16, 32], strides = [1, 1]} : vector<128x32xbf16> to vector<16x32xbf16>
    %cst_56 = arith.constant dense<0.000000e+00> : vector<16x32xf32>
    %59 = tpu.matmul %57, %58, %cst_56 {dimension_numbers = #tpu.dot_dimension_numbers<[1], [0], [0], [1], [0, 0, 1, 1], [], []>} : vector<16x16xbf16>, vector<16x32xbf16>, vector<16x32xf32> -> vector<16x32xf32>
    %c0_57 = arith.constant 0 : index
    %c0_58 = arith.constant 0 : index
    %60 = vector.load %arg2[%c0_57, %c0_58] : memref<16x16xbf16, #tpu.memory_space<vmem>>, vector<16x16xbf16>
    %61 = vector.extract_strided_slice %38 {offsets = [96, 0], sizes = [16, 32], strides = [1, 1]} : vector<128x32xbf16> to vector<16x32xbf16>
    %cst_59 = arith.constant dense<0.000000e+00> : vector<16x32xf32>
    %62 = tpu.matmul %60, %61, %cst_59 {dimension_numbers = #tpu.dot_dimension_numbers<[1], [0], [0], [1], [0, 0, 1, 1], [], []>} : vector<16x16xbf16>, vector<16x32xbf16>, vector<16x32xf32> -> vector<16x32xf32>
    %c0_60 = arith.constant 0 : index
    %c0_61 = arith.constant 0 : index
    %63 = vector.load %arg2[%c0_60, %c0_61] : memref<16x16xbf16, #tpu.memory_space<vmem>>, vector<16x16xbf16>
    %64 = vector.extract_strided_slice %38 {offsets = [112, 0], sizes = [16, 32], strides = [1, 1]} : vector<128x32xbf16> to vector<16x32xbf16>
    %cst_62 = arith.constant dense<0.000000e+00> : vector<16x32xf32>
    %65 = tpu.matmul %63, %64, %cst_62 {dimension_numbers = #tpu.dot_dimension_numbers<[1], [0], [0], [1], [0, 0, 1, 1], [], []>} : vector<16x16xbf16>, vector<16x32xbf16>, vector<16x32xf32> -> vector<16x32xf32>
    %66 = tpu.concatenate %44, %47, %50, %53, %56, %59, %62, %65 in 0 : vector<16x32xf32>, vector<16x32xf32>, vector<16x32xf32>, vector<16x32xf32>, vector<16x32xf32>, vector<16x32xf32>, vector<16x32xf32>, vector<16x32xf32> -> vector<128x32xf32>
    %67 = arith.truncf %66 : vector<128x32xf32> to vector<128x32xbf16>
    %c0_63 = arith.constant 0 : index
    %c0_64 = arith.constant 0 : index
    %68 = vector.load %arg7[%c0_63, %c0_64] : memref<32x32xbf16, #tpu.memory_space<vmem>>, vector<32x32xbf16>
    %cst_65 = arith.constant dense<0.000000e+00> : vector<128x32xf32>
    %69 = tpu.matmul %67, %68, %cst_65 {dimension_numbers = #tpu.dot_dimension_numbers<[1], [0], [0], [1], [0, 0, 1, 1], [], []>} : vector<128x32xbf16>, vector<32x32xbf16>, vector<128x32xf32> -> vector<128x32xf32>
    %70 = arith.addf %41, %69 : vector<128x32xf32>
    %c0_66 = arith.constant 0 : index
    %c0_67 = arith.constant 0 : index
    %71 = vector.load %arg8[%c0_66, %c0_67] : memref<1x32xf32, #tpu.memory_space<vmem>>, vector<1x32xf32>
    %72 = vector.broadcast %71 : vector<1x32xf32> to vector<128x32xf32>
    %73 = arith.addf %70, %72 : vector<128x32xf32>
    %cst_68 = arith.constant 0.000000e+00 : f32
    %74 = vector.broadcast %cst_68 : f32 to vector<128x32xf32>
    %75 = arith.maximumf %73, %74 : vector<128x32xf32>
    %76 = arith.truncf %75 : vector<128x32xf32> to vector<128x32xbf16>
    %c0_69 = arith.constant 0 : index
    %c32 = arith.constant 32 : index
    %77 = vector.load %arg19[%c0_69, %c32] : memref<128x128xbf16, #tpu.memory_space<vmem>>, vector<128x32xbf16>
    tpu.vector_store %arg19[%c0_69, %c32], %76 {strides = array<i32>} : memref<128x128xbf16, #tpu.memory_space<vmem>>, vector<128x32xbf16>,
    %c0_70 = arith.constant 0 : index
    %c0_71 = arith.constant 0 : index
    %78 = vector.load %arg9[%c0_70, %c0_71] : memref<32x32xbf16, #tpu.memory_space<vmem>>, vector<32x32xbf16>
    %cst_72 = arith.constant dense<0.000000e+00> : vector<128x32xf32>
    %79 = tpu.matmul %76, %78, %cst_72 {dimension_numbers = #tpu.dot_dimension_numbers<[1], [0], [0], [1], [0, 0, 1, 1], [], []>} : vector<128x32xbf16>, vector<32x32xbf16>, vector<128x32xf32> -> vector<128x32xf32>
    %c0_73 = arith.constant 0 : index
    %c0_74 = arith.constant 0 : index
    %80 = vector.load %arg2[%c0_73, %c0_74] : memref<16x16xbf16, #tpu.memory_space<vmem>>, vector<16x16xbf16>
    %81 = vector.extract_strided_slice %76 {offsets = [0, 0], sizes = [16, 32], strides = [1, 1]} : vector<128x32xbf16> to vector<16x32xbf16>
    %cst_75 = arith.constant dense<0.000000e+00> : vector<16x32xf32>
    %82 = tpu.matmul %80, %81, %cst_75 {dimension_numbers = #tpu.dot_dimension_numbers<[1], [0], [0], [1], [0, 0, 1, 1], [], []>} : vector<16x16xbf16>, vector<16x32xbf16>, vector<16x32xf32> -> vector<16x32xf32>
    %c0_76 = arith.constant 0 : index
    %c0_77 = arith.constant 0 : index
    %83 = vector.load %arg2[%c0_76, %c0_77] : memref<16x16xbf16, #tpu.memory_space<vmem>>, vector<16x16xbf16>
    %84 = vector.extract_strided_slice %76 {offsets = [16, 0], sizes = [16, 32], strides = [1, 1]} : vector<128x32xbf16> to vector<16x32xbf16>
    %cst_78 = arith.constant dense<0.000000e+00> : vector<16x32xf32>
    %85 = tpu.matmul %83, %84, %cst_78 {dimension_numbers = #tpu.dot_dimension_numbers<[1], [0], [0], [1], [0, 0, 1, 1], [], []>} : vector<16x16xbf16>, vector<16x32xbf16>, vector<16x32xf32> -> vector<16x32xf32>
    %c0_79 = arith.constant 0 : index
    %c0_80 = arith.constant 0 : index
    %86 = vector.load %arg2[%c0_79, %c0_80] : memref<16x16xbf16, #tpu.memory_space<vmem>>, vector<16x16xbf16>
    %87 = vector.extract_strided_slice %76 {offsets = [32, 0], sizes = [16, 32], strides = [1, 1]} : vector<128x32xbf16> to vector<16x32xbf16>
    %cst_81 = arith.constant dense<0.000000e+00> : vector<16x32xf32>
    %88 = tpu.matmul %86, %87, %cst_81 {dimension_numbers = #tpu.dot_dimension_numbers<[1], [0], [0], [1], [0, 0, 1, 1], [], []>} : vector<16x16xbf16>, vector<16x32xbf16>, vector<16x32xf32> -> vector<16x32xf32>
    %c0_82 = arith.constant 0 : index
    %c0_83 = arith.constant 0 : index
    %89 = vector.load %arg2[%c0_82, %c0_83] : memref<16x16xbf16, #tpu.memory_space<vmem>>, vector<16x16xbf16>
    %90 = vector.extract_strided_slice %76 {offsets = [48, 0], sizes = [16, 32], strides = [1, 1]} : vector<128x32xbf16> to vector<16x32xbf16>
    %cst_84 = arith.constant dense<0.000000e+00> : vector<16x32xf32>
    %91 = tpu.matmul %89, %90, %cst_84 {dimension_numbers = #tpu.dot_dimension_numbers<[1], [0], [0], [1], [0, 0, 1, 1], [], []>} : vector<16x16xbf16>, vector<16x32xbf16>, vector<16x32xf32> -> vector<16x32xf32>
    %c0_85 = arith.constant 0 : index
    %c0_86 = arith.constant 0 : index
    %92 = vector.load %arg2[%c0_85, %c0_86] : memref<16x16xbf16, #tpu.memory_space<vmem>>, vector<16x16xbf16>
    %93 = vector.extract_strided_slice %76 {offsets = [64, 0], sizes = [16, 32], strides = [1, 1]} : vector<128x32xbf16> to vector<16x32xbf16>
    %cst_87 = arith.constant dense<0.000000e+00> : vector<16x32xf32>
    %94 = tpu.matmul %92, %93, %cst_87 {dimension_numbers = #tpu.dot_dimension_numbers<[1], [0], [0], [1], [0, 0, 1, 1], [], []>} : vector<16x16xbf16>, vector<16x32xbf16>, vector<16x32xf32> -> vector<16x32xf32>
    %c0_88 = arith.constant 0 : index
    %c0_89 = arith.constant 0 : index
    %95 = vector.load %arg2[%c0_88, %c0_89] : memref<16x16xbf16, #tpu.memory_space<vmem>>, vector<16x16xbf16>
    %96 = vector.extract_strided_slice %76 {offsets = [80, 0], sizes = [16, 32], strides = [1, 1]} : vector<128x32xbf16> to vector<16x32xbf16>
    %cst_90 = arith.constant dense<0.000000e+00> : vector<16x32xf32>
    %97 = tpu.matmul %95, %96, %cst_90 {dimension_numbers = #tpu.dot_dimension_numbers<[1], [0], [0], [1], [0, 0, 1, 1], [], []>} : vector<16x16xbf16>, vector<16x32xbf16>, vector<16x32xf32> -> vector<16x32xf32>
    %c0_91 = arith.constant 0 : index
    %c0_92 = arith.constant 0 : index
    %98 = vector.load %arg2[%c0_91, %c0_92] : memref<16x16xbf16, #tpu.memory_space<vmem>>, vector<16x16xbf16>
    %99 = vector.extract_strided_slice %76 {offsets = [96, 0], sizes = [16, 32], strides = [1, 1]} : vector<128x32xbf16> to vector<16x32xbf16>
    %cst_93 = arith.constant dense<0.000000e+00> : vector<16x32xf32>
    %100 = tpu.matmul %98, %99, %cst_93 {dimension_numbers = #tpu.dot_dimension_numbers<[1], [0], [0], [1], [0, 0, 1, 1], [], []>} : vector<16x16xbf16>, vector<16x32xbf16>, vector<16x32xf32> -> vector<16x32xf32>
    %c0_94 = arith.constant 0 : index
    %c0_95 = arith.constant 0 : index
    %101 = vector.load %arg2[%c0_94, %c0_95] : memref<16x16xbf16, #tpu.memory_space<vmem>>, vector<16x16xbf16>
    %102 = vector.extract_strided_slice %76 {offsets = [112, 0], sizes = [16, 32], strides = [1, 1]} : vector<128x32xbf16> to vector<16x32xbf16>
    %cst_96 = arith.constant dense<0.000000e+00> : vector<16x32xf32>
    %103 = tpu.matmul %101, %102, %cst_96 {dimension_numbers = #tpu.dot_dimension_numbers<[1], [0], [0], [1], [0, 0, 1, 1], [], []>} : vector<16x16xbf16>, vector<16x32xbf16>, vector<16x32xf32> -> vector<16x32xf32>
    %104 = tpu.concatenate %82, %85, %88, %91, %94, %97, %100, %103 in 0 : vector<16x32xf32>, vector<16x32xf32>, vector<16x32xf32>, vector<16x32xf32>, vector<16x32xf32>, vector<16x32xf32>, vector<16x32xf32>, vector<16x32xf32> -> vector<128x32xf32>
    %105 = arith.truncf %104 : vector<128x32xf32> to vector<128x32xbf16>
    %c0_97 = arith.constant 0 : index
    %c0_98 = arith.constant 0 : index
    %106 = vector.load %arg10[%c0_97, %c0_98] : memref<32x32xbf16, #tpu.memory_space<vmem>>, vector<32x32xbf16>
    %cst_99 = arith.constant dense<0.000000e+00> : vector<128x32xf32>
    %107 = tpu.matmul %105, %106, %cst_99 {dimension_numbers = #tpu.dot_dimension_numbers<[1], [0], [0], [1], [0, 0, 1, 1], [], []>} : vector<128x32xbf16>, vector<32x32xbf16>, vector<128x32xf32> -> vector<128x32xf32>
    %108 = arith.addf %79, %107 : vector<128x32xf32>
    %c0_100 = arith.constant 0 : index
    %c0_101 = arith.constant 0 : index
    %109 = vector.load %arg11[%c0_100, %c0_101] : memref<1x32xf32, #tpu.memory_space<vmem>>, vector<1x32xf32>
    %110 = vector.broadcast %109 : vector<1x32xf32> to vector<128x32xf32>
    %111 = arith.addf %108, %110 : vector<128x32xf32>
    %cst_102 = arith.constant 0.000000e+00 : f32
    %112 = vector.broadcast %cst_102 : f32 to vector<128x32xf32>
    %113 = arith.maximumf %111, %112 : vector<128x32xf32>
    %114 = arith.truncf %113 : vector<128x32xf32> to vector<128x32xbf16>
    %c0_103 = arith.constant 0 : index
    %c64 = arith.constant 64 : index
    %115 = vector.load %arg19[%c0_103, %c64] : memref<128x128xbf16, #tpu.memory_space<vmem>>, vector<128x32xbf16>
    tpu.vector_store %arg19[%c0_103, %c64], %114 {strides = array<i32>} : memref<128x128xbf16, #tpu.memory_space<vmem>>, vector<128x32xbf16>,
    %c0_104 = arith.constant 0 : index
    %c0_105 = arith.constant 0 : index
    %116 = vector.load %arg12[%c0_104, %c0_105] : memref<32x32xbf16, #tpu.memory_space<vmem>>, vector<32x32xbf16>
    %cst_106 = arith.constant dense<0.000000e+00> : vector<128x32xf32>
    %117 = tpu.matmul %114, %116, %cst_106 {dimension_numbers = #tpu.dot_dimension_numbers<[1], [0], [0], [1], [0, 0, 1, 1], [], []>} : vector<128x32xbf16>, vector<32x32xbf16>, vector<128x32xf32> -> vector<128x32xf32>
    %c0_107 = arith.constant 0 : index
    %c0_108 = arith.constant 0 : index
    %118 = vector.load %arg2[%c0_107, %c0_108] : memref<16x16xbf16, #tpu.memory_space<vmem>>, vector<16x16xbf16>
    %119 = vector.extract_strided_slice %114 {offsets = [0, 0], sizes = [16, 32], strides = [1, 1]} : vector<128x32xbf16> to vector<16x32xbf16>
    %cst_109 = arith.constant dense<0.000000e+00> : vector<16x32xf32>
    %120 = tpu.matmul %118, %119, %cst_109 {dimension_numbers = #tpu.dot_dimension_numbers<[1], [0], [0], [1], [0, 0, 1, 1], [], []>} : vector<16x16xbf16>, vector<16x32xbf16>, vector<16x32xf32> -> vector<16x32xf32>
    %c0_110 = arith.constant 0 : index
    %c0_111 = arith.constant 0 : index
    %121 = vector.load %arg2[%c0_110, %c0_111] : memref<16x16xbf16, #tpu.memory_space<vmem>>, vector<16x16xbf16>
    %122 = vector.extract_strided_slice %114 {offsets = [16, 0], sizes = [16, 32], strides = [1, 1]} : vector<128x32xbf16> to vector<16x32xbf16>
    %cst_112 = arith.constant dense<0.000000e+00> : vector<16x32xf32>
    %123 = tpu.matmul %121, %122, %cst_112 {dimension_numbers = #tpu.dot_dimension_numbers<[1], [0], [0], [1], [0, 0, 1, 1], [], []>} : vector<16x16xbf16>, vector<16x32xbf16>, vector<16x32xf32> -> vector<16x32xf32>
    %c0_113 = arith.constant 0 : index
    %c0_114 = arith.constant 0 : index
    %124 = vector.load %arg2[%c0_113, %c0_114] : memref<16x16xbf16, #tpu.memory_space<vmem>>, vector<16x16xbf16>
    %125 = vector.extract_strided_slice %114 {offsets = [32, 0], sizes = [16, 32], strides = [1, 1]} : vector<128x32xbf16> to vector<16x32xbf16>
    %cst_115 = arith.constant dense<0.000000e+00> : vector<16x32xf32>
    %126 = tpu.matmul %124, %125, %cst_115 {dimension_numbers = #tpu.dot_dimension_numbers<[1], [0], [0], [1], [0, 0, 1, 1], [], []>} : vector<16x16xbf16>, vector<16x32xbf16>, vector<16x32xf32> -> vector<16x32xf32>
    %c0_116 = arith.constant 0 : index
    %c0_117 = arith.constant 0 : index
    %127 = vector.load %arg2[%c0_116, %c0_117] : memref<16x16xbf16, #tpu.memory_space<vmem>>, vector<16x16xbf16>
    %128 = vector.extract_strided_slice %114 {offsets = [48, 0], sizes = [16, 32], strides = [1, 1]} : vector<128x32xbf16> to vector<16x32xbf16>
    %cst_118 = arith.constant dense<0.000000e+00> : vector<16x32xf32>
    %129 = tpu.matmul %127, %128, %cst_118 {dimension_numbers = #tpu.dot_dimension_numbers<[1], [0], [0], [1], [0, 0, 1, 1], [], []>} : vector<16x16xbf16>, vector<16x32xbf16>, vector<16x32xf32> -> vector<16x32xf32>
    %c0_119 = arith.constant 0 : index
    %c0_120 = arith.constant 0 : index
    %130 = vector.load %arg2[%c0_119, %c0_120] : memref<16x16xbf16, #tpu.memory_space<vmem>>, vector<16x16xbf16>
    %131 = vector.extract_strided_slice %114 {offsets = [64, 0], sizes = [16, 32], strides = [1, 1]} : vector<128x32xbf16> to vector<16x32xbf16>
    %cst_121 = arith.constant dense<0.000000e+00> : vector<16x32xf32>
    %132 = tpu.matmul %130, %131, %cst_121 {dimension_numbers = #tpu.dot_dimension_numbers<[1], [0], [0], [1], [0, 0, 1, 1], [], []>} : vector<16x16xbf16>, vector<16x32xbf16>, vector<16x32xf32> -> vector<16x32xf32>
    %c0_122 = arith.constant 0 : index
    %c0_123 = arith.constant 0 : index
    %133 = vector.load %arg2[%c0_122, %c0_123] : memref<16x16xbf16, #tpu.memory_space<vmem>>, vector<16x16xbf16>
    %134 = vector.extract_strided_slice %114 {offsets = [80, 0], sizes = [16, 32], strides = [1, 1]} : vector<128x32xbf16> to vector<16x32xbf16>
    %cst_124 = arith.constant dense<0.000000e+00> : vector<16x32xf32>
    %135 = tpu.matmul %133, %134, %cst_124 {dimension_numbers = #tpu.dot_dimension_numbers<[1], [0], [0], [1], [0, 0, 1, 1], [], []>} : vector<16x16xbf16>, vector<16x32xbf16>, vector<16x32xf32> -> vector<16x32xf32>
    %c0_125 = arith.constant 0 : index
    %c0_126 = arith.constant 0 : index
    %136 = vector.load %arg2[%c0_125, %c0_126] : memref<16x16xbf16, #tpu.memory_space<vmem>>, vector<16x16xbf16>
    %137 = vector.extract_strided_slice %114 {offsets = [96, 0], sizes = [16, 32], strides = [1, 1]} : vector<128x32xbf16> to vector<16x32xbf16>
    %cst_127 = arith.constant dense<0.000000e+00> : vector<16x32xf32>
    %138 = tpu.matmul %136, %137, %cst_127 {dimension_numbers = #tpu.dot_dimension_numbers<[1], [0], [0], [1], [0, 0, 1, 1], [], []>} : vector<16x16xbf16>, vector<16x32xbf16>, vector<16x32xf32> -> vector<16x32xf32>
    %c0_128 = arith.constant 0 : index
    %c0_129 = arith.constant 0 : index
    %139 = vector.load %arg2[%c0_128, %c0_129] : memref<16x16xbf16, #tpu.memory_space<vmem>>, vector<16x16xbf16>
    %140 = vector.extract_strided_slice %114 {offsets = [112, 0], sizes = [16, 32], strides = [1, 1]} : vector<128x32xbf16> to vector<16x32xbf16>
    %cst_130 = arith.constant dense<0.000000e+00> : vector<16x32xf32>
    %141 = tpu.matmul %139, %140, %cst_130 {dimension_numbers = #tpu.dot_dimension_numbers<[1], [0], [0], [1], [0, 0, 1, 1], [], []>} : vector<16x16xbf16>, vector<16x32xbf16>, vector<16x32xf32> -> vector<16x32xf32>
    %142 = tpu.concatenate %120, %123, %126, %129, %132, %135, %138, %141 in 0 : vector<16x32xf32>, vector<16x32xf32>, vector<16x32xf32>, vector<16x32xf32>, vector<16x32xf32>, vector<16x32xf32>, vector<16x32xf32>, vector<16x32xf32> -> vector<128x32xf32>
    %143 = arith.truncf %142 : vector<128x32xf32> to vector<128x32xbf16>
    %c0_131 = arith.constant 0 : index
    %c0_132 = arith.constant 0 : index
    %144 = vector.load %arg13[%c0_131, %c0_132] : memref<32x32xbf16, #tpu.memory_space<vmem>>, vector<32x32xbf16>
    %cst_133 = arith.constant dense<0.000000e+00> : vector<128x32xf32>
    %145 = tpu.matmul %143, %144, %cst_133 {dimension_numbers = #tpu.dot_dimension_numbers<[1], [0], [0], [1], [0, 0, 1, 1], [], []>} : vector<128x32xbf16>, vector<32x32xbf16>, vector<128x32xf32> -> vector<128x32xf32>
    %146 = arith.addf %117, %145 : vector<128x32xf32>
    %c0_134 = arith.constant 0 : index
    %c0_135 = arith.constant 0 : index
    %147 = vector.load %arg14[%c0_134, %c0_135] : memref<1x32xf32, #tpu.memory_space<vmem>>, vector<1x32xf32>
    %148 = vector.broadcast %147 : vector<1x32xf32> to vector<128x32xf32>
    %149 = arith.addf %146, %148 : vector<128x32xf32>
    %cst_136 = arith.constant 0.000000e+00 : f32
    %150 = vector.broadcast %cst_136 : f32 to vector<128x32xf32>
    %151 = arith.maximumf %149, %150 : vector<128x32xf32>
    %152 = arith.truncf %151 : vector<128x32xf32> to vector<128x32xbf16>
    %c0_137 = arith.constant 0 : index
    %c96 = arith.constant 96 : index
    %153 = vector.load %arg19[%c0_137, %c96] : memref<128x128xbf16, #tpu.memory_space<vmem>>, vector<128x32xbf16>
    tpu.vector_store %arg19[%c0_137, %c96], %152 {strides = array<i32>} : memref<128x128xbf16, #tpu.memory_space<vmem>>, vector<128x32xbf16>,
    %cst_138 = arith.constant 0.000000e+00 : f32
    %154 = vector.broadcast %cst_138 : f32 to vector<128x32xf32>
    %cst_139 = arith.constant 0.000000e+00 : f32
    %155 = vector.broadcast %cst_139 : f32 to vector<128x32xf32>
    %c0_140 = arith.constant 0 : index
    %c0_141 = arith.constant 0 : index
    %156 = vector.load %arg19[%c0_140, %c0_141] : memref<128x128xbf16, #tpu.memory_space<vmem>>, vector<128x32xbf16>
    %c0_142 = arith.constant 0 : index
    %c0_143 = arith.constant 0 : index
    %157 = vector.load %arg15[%c0_142, %c0_143] : memref<128x32xbf16, #tpu.memory_space<vmem>>, vector<32x32xbf16>
    %cst_144 = arith.constant dense<0.000000e+00> : vector<128x32xf32>
    %158 = tpu.matmul %156, %157, %cst_144 {dimension_numbers = #tpu.dot_dimension_numbers<[1], [0], [0], [1], [0, 0, 1, 1], [], []>} : vector<128x32xbf16>, vector<32x32xbf16>, vector<128x32xf32> -> vector<128x32xf32>
    %159 = arith.addf %154, %158 : vector<128x32xf32>
    %c0_145 = arith.constant 0 : index
    %c0_146 = arith.constant 0 : index
    %160 = vector.load %arg16[%c0_145, %c0_146] : memref<128x32xbf16, #tpu.memory_space<vmem>>, vector<32x32xbf16>
    %cst_147 = arith.constant dense<0.000000e+00> : vector<128x32xf32>
    %161 = tpu.matmul %156, %160, %cst_147 {dimension_numbers = #tpu.dot_dimension_numbers<[1], [0], [0], [1], [0, 0, 1, 1], [], []>} : vector<128x32xbf16>, vector<32x32xbf16>, vector<128x32xf32> -> vector<128x32xf32>
    %162 = arith.addf %155, %161 : vector<128x32xf32>
    %c0_148 = arith.constant 0 : index
    %c32_149 = arith.constant 32 : index
    %163 = vector.load %arg19[%c0_148, %c32_149] : memref<128x128xbf16, #tpu.memory_space<vmem>>, vector<128x32xbf16>
    %c32_150 = arith.constant 32 : index
    %c0_151 = arith.constant 0 : index
    %164 = vector.load %arg15[%c32_150, %c0_151] : memref<128x32xbf16, #tpu.memory_space<vmem>>, vector<32x32xbf16>
    %cst_152 = arith.constant dense<0.000000e+00> : vector<128x32xf32>
    %165 = tpu.matmul %163, %164, %cst_152 {dimension_numbers = #tpu.dot_dimension_numbers<[1], [0], [0], [1], [0, 0, 1, 1], [], []>} : vector<128x32xbf16>, vector<32x32xbf16>, vector<128x32xf32> -> vector<128x32xf32>
    %166 = arith.addf %159, %165 : vector<128x32xf32>
    %c32_153 = arith.constant 32 : index
    %c0_154 = arith.constant 0 : index
    %167 = vector.load %arg16[%c32_153, %c0_154] : memref<128x32xbf16, #tpu.memory_space<vmem>>, vector<32x32xbf16>
    %cst_155 = arith.constant dense<0.000000e+00> : vector<128x32xf32>
    %168 = tpu.matmul %163, %167, %cst_155 {dimension_numbers = #tpu.dot_dimension_numbers<[1], [0], [0], [1], [0, 0, 1, 1], [], []>} : vector<128x32xbf16>, vector<32x32xbf16>, vector<128x32xf32> -> vector<128x32xf32>
    %169 = arith.addf %162, %168 : vector<128x32xf32>
    %c0_156 = arith.constant 0 : index
    %c64_157 = arith.constant 64 : index
    %170 = vector.load %arg19[%c0_156, %c64_157] : memref<128x128xbf16, #tpu.memory_space<vmem>>, vector<128x32xbf16>
    %c64_158 = arith.constant 64 : index
    %c0_159 = arith.constant 0 : index
    %171 = vector.load %arg15[%c64_158, %c0_159] : memref<128x32xbf16, #tpu.memory_space<vmem>>, vector<32x32xbf16>
    %cst_160 = arith.constant dense<0.000000e+00> : vector<128x32xf32>
    %172 = tpu.matmul %170, %171, %cst_160 {dimension_numbers = #tpu.dot_dimension_numbers<[1], [0], [0], [1], [0, 0, 1, 1], [], []>} : vector<128x32xbf16>, vector<32x32xbf16>, vector<128x32xf32> -> vector<128x32xf32>
    %173 = arith.addf %166, %172 : vector<128x32xf32>
    %c64_161 = arith.constant 64 : index
    %c0_162 = arith.constant 0 : index
    %174 = vector.load %arg16[%c64_161, %c0_162] : memref<128x32xbf16, #tpu.memory_space<vmem>>, vector<32x32xbf16>
    %cst_163 = arith.constant dense<0.000000e+00> : vector<128x32xf32>
    %175 = tpu.matmul %170, %174, %cst_163 {dimension_numbers = #tpu.dot_dimension_numbers<[1], [0], [0], [1], [0, 0, 1, 1], [], []>} : vector<128x32xbf16>, vector<32x32xbf16>, vector<128x32xf32> -> vector<128x32xf32>
    %176 = arith.addf %169, %175 : vector<128x32xf32>
    %c0_164 = arith.constant 0 : index
    %c96_165 = arith.constant 96 : index
    %177 = vector.load %arg19[%c0_164, %c96_165] : memref<128x128xbf16, #tpu.memory_space<vmem>>, vector<128x32xbf16>
    %c96_166 = arith.constant 96 : index
    %c0_167 = arith.constant 0 : index
    %178 = vector.load %arg15[%c96_166, %c0_167] : memref<128x32xbf16, #tpu.memory_space<vmem>>, vector<32x32xbf16>
    %cst_168 = arith.constant dense<0.000000e+00> : vector<128x32xf32>
    %179 = tpu.matmul %177, %178, %cst_168 {dimension_numbers = #tpu.dot_dimension_numbers<[1], [0], [0], [1], [0, 0, 1, 1], [], []>} : vector<128x32xbf16>, vector<32x32xbf16>, vector<128x32xf32> -> vector<128x32xf32>
    %180 = arith.addf %173, %179 : vector<128x32xf32>
    %c96_169 = arith.constant 96 : index
    %c0_170 = arith.constant 0 : index
    %181 = vector.load %arg16[%c96_169, %c0_170] : memref<128x32xbf16, #tpu.memory_space<vmem>>, vector<32x32xbf16>
    %cst_171 = arith.constant dense<0.000000e+00> : vector<128x32xf32>
    %182 = tpu.matmul %177, %181, %cst_171 {dimension_numbers = #tpu.dot_dimension_numbers<[1], [0], [0], [1], [0, 0, 1, 1], [], []>} : vector<128x32xbf16>, vector<32x32xbf16>, vector<128x32xf32> -> vector<128x32xf32>
    %183 = arith.addf %176, %182 : vector<128x32xf32>
    %184 = arith.truncf %183 : vector<128x32xf32> to vector<128x32xbf16>
    %c0_172 = arith.constant 0 : index
    %c0_173 = arith.constant 0 : index
    %185 = vector.load %arg2[%c0_172, %c0_173] : memref<16x16xbf16, #tpu.memory_space<vmem>>, vector<16x16xbf16>
    %186 = vector.extract_strided_slice %184 {offsets = [0, 0], sizes = [16, 32], strides = [1, 1]} : vector<128x32xbf16> to vector<16x32xbf16>
    %cst_174 = arith.constant dense<0.000000e+00> : vector<16x32xf32>
    %187 = tpu.matmul %185, %186, %cst_174 {dimension_numbers = #tpu.dot_dimension_numbers<[1], [0], [0], [1], [0, 0, 1, 1], [], []>} : vector<16x16xbf16>, vector<16x32xbf16>, vector<16x32xf32> -> vector<16x32xf32>
    %c0_175 = arith.constant 0 : index
    %c0_176 = arith.constant 0 : index
    %188 = vector.load %arg2[%c0_175, %c0_176] : memref<16x16xbf16, #tpu.memory_space<vmem>>, vector<16x16xbf16>
    %189 = vector.extract_strided_slice %184 {offsets = [16, 0], sizes = [16, 32], strides = [1, 1]} : vector<128x32xbf16> to vector<16x32xbf16>
    %cst_177 = arith.constant dense<0.000000e+00> : vector<16x32xf32>
    %190 = tpu.matmul %188, %189, %cst_177 {dimension_numbers = #tpu.dot_dimension_numbers<[1], [0], [0], [1], [0, 0, 1, 1], [], []>} : vector<16x16xbf16>, vector<16x32xbf16>, vector<16x32xf32> -> vector<16x32xf32>
    %c0_178 = arith.constant 0 : index
    %c0_179 = arith.constant 0 : index
    %191 = vector.load %arg2[%c0_178, %c0_179] : memref<16x16xbf16, #tpu.memory_space<vmem>>, vector<16x16xbf16>
    %192 = vector.extract_strided_slice %184 {offsets = [32, 0], sizes = [16, 32], strides = [1, 1]} : vector<128x32xbf16> to vector<16x32xbf16>
    %cst_180 = arith.constant dense<0.000000e+00> : vector<16x32xf32>
    %193 = tpu.matmul %191, %192, %cst_180 {dimension_numbers = #tpu.dot_dimension_numbers<[1], [0], [0], [1], [0, 0, 1, 1], [], []>} : vector<16x16xbf16>, vector<16x32xbf16>, vector<16x32xf32> -> vector<16x32xf32>
    %c0_181 = arith.constant 0 : index
    %c0_182 = arith.constant 0 : index
    %194 = vector.load %arg2[%c0_181, %c0_182] : memref<16x16xbf16, #tpu.memory_space<vmem>>, vector<16x16xbf16>
    %195 = vector.extract_strided_slice %184 {offsets = [48, 0], sizes = [16, 32], strides = [1, 1]} : vector<128x32xbf16> to vector<16x32xbf16>
    %cst_183 = arith.constant dense<0.000000e+00> : vector<16x32xf32>
    %196 = tpu.matmul %194, %195, %cst_183 {dimension_numbers = #tpu.dot_dimension_numbers<[1], [0], [0], [1], [0, 0, 1, 1], [], []>} : vector<16x16xbf16>, vector<16x32xbf16>, vector<16x32xf32> -> vector<16x32xf32>
    %c0_184 = arith.constant 0 : index
    %c0_185 = arith.constant 0 : index
    %197 = vector.load %arg2[%c0_184, %c0_185] : memref<16x16xbf16, #tpu.memory_space<vmem>>, vector<16x16xbf16>
    %198 = vector.extract_strided_slice %184 {offsets = [64, 0], sizes = [16, 32], strides = [1, 1]} : vector<128x32xbf16> to vector<16x32xbf16>
    %cst_186 = arith.constant dense<0.000000e+00> : vector<16x32xf32>
    %199 = tpu.matmul %197, %198, %cst_186 {dimension_numbers = #tpu.dot_dimension_numbers<[1], [0], [0], [1], [0, 0, 1, 1], [], []>} : vector<16x16xbf16>, vector<16x32xbf16>, vector<16x32xf32> -> vector<16x32xf32>
    %c0_187 = arith.constant 0 : index
    %c0_188 = arith.constant 0 : index
    %200 = vector.load %arg2[%c0_187, %c0_188] : memref<16x16xbf16, #tpu.memory_space<vmem>>, vector<16x16xbf16>
    %201 = vector.extract_strided_slice %184 {offsets = [80, 0], sizes = [16, 32], strides = [1, 1]} : vector<128x32xbf16> to vector<16x32xbf16>
    %cst_189 = arith.constant dense<0.000000e+00> : vector<16x32xf32>
    %202 = tpu.matmul %200, %201, %cst_189 {dimension_numbers = #tpu.dot_dimension_numbers<[1], [0], [0], [1], [0, 0, 1, 1], [], []>} : vector<16x16xbf16>, vector<16x32xbf16>, vector<16x32xf32> -> vector<16x32xf32>
    %c0_190 = arith.constant 0 : index
    %c0_191 = arith.constant 0 : index
    %203 = vector.load %arg2[%c0_190, %c0_191] : memref<16x16xbf16, #tpu.memory_space<vmem>>, vector<16x16xbf16>
    %204 = vector.extract_strided_slice %184 {offsets = [96, 0], sizes = [16, 32], strides = [1, 1]} : vector<128x32xbf16> to vector<16x32xbf16>
    %cst_192 = arith.constant dense<0.000000e+00> : vector<16x32xf32>
    %205 = tpu.matmul %203, %204, %cst_192 {dimension_numbers = #tpu.dot_dimension_numbers<[1], [0], [0], [1], [0, 0, 1, 1], [], []>} : vector<16x16xbf16>, vector<16x32xbf16>, vector<16x32xf32> -> vector<16x32xf32>
    %c0_193 = arith.constant 0 : index
    %c0_194 = arith.constant 0 : index
    %206 = vector.load %arg2[%c0_193, %c0_194] : memref<16x16xbf16, #tpu.memory_space<vmem>>, vector<16x16xbf16>
    %207 = vector.extract_strided_slice %184 {offsets = [112, 0], sizes = [16, 32], strides = [1, 1]} : vector<128x32xbf16> to vector<16x32xbf16>
    %cst_195 = arith.constant dense<0.000000e+00> : vector<16x32xf32>
    %208 = tpu.matmul %206, %207, %cst_195 {dimension_numbers = #tpu.dot_dimension_numbers<[1], [0], [0], [1], [0, 0, 1, 1], [], []>} : vector<16x16xbf16>, vector<16x32xbf16>, vector<16x32xf32> -> vector<16x32xf32>
    %209 = tpu.concatenate %187, %190, %193, %196, %199, %202, %205, %208 in 0 : vector<16x32xf32>, vector<16x32xf32>, vector<16x32xf32>, vector<16x32xf32>, vector<16x32xf32>, vector<16x32xf32>, vector<16x32xf32>, vector<16x32xf32> -> vector<128x32xf32>
    %210 = arith.addf %180, %209 : vector<128x32xf32>
    %c0_196 = arith.constant 0 : index
    %c0_197 = arith.constant 0 : index
    %211 = vector.load %arg17[%c0_196, %c0_197] : memref<1x32xf32, #tpu.memory_space<vmem>>, vector<1x32xf32>
    %212 = vector.broadcast %211 : vector<1x32xf32> to vector<128x32xf32>
    %213 = arith.addf %210, %212 : vector<128x32xf32>
    %214 = vector.extract_strided_slice %213 {offsets = [0, 0], sizes = [16, 32], strides = [1, 1]} : vector<128x32xf32> to vector<16x32xf32>
    %cst_198 = arith.constant dense<0.000000e+00> : vector<32xf32>
    %215 = vector.multi_reduction <add>, %214, %cst_198 [0] : vector<16x32xf32> to vector<32xf32>
    %216 = vector.shape_cast %215 : vector<32xf32> to vector<1x32xf32>
    %cst_199 = arith.constant 1.600000e+01 : f32
    %217 = vector.broadcast %cst_199 : f32 to vector<1x32xf32>
    %218 = arith.divf %216, %217 : vector<1x32xf32>
    %c0_200 = arith.constant 0 : index
    %c0_201 = arith.constant 0 : index
    %c0_202 = arith.constant 0 : index
    %219 = vector.load %arg18[%c0_200, %c0_201, %c0_202] : memref<1x8x32xf32, #tpu.memory_space<vmem>>, vector<1x1x32xf32>
    %220 = vector.shape_cast %219 : vector<1x1x32xf32> to vector<1x32xf32>
    %221 = vector.shape_cast %218 : vector<1x32xf32> to vector<1x1x32xf32>
    tpu.vector_store %arg18[%c0_200, %c0_201, %c0_202], %221 {strides = array<i32>} : memref<1x8x32xf32, #tpu.memory_space<vmem>>, vector<1x1x32xf32>,
    %222 = vector.extract_strided_slice %213 {offsets = [16, 0], sizes = [16, 32], strides = [1, 1]} : vector<128x32xf32> to vector<16x32xf32>
    %cst_203 = arith.constant dense<0.000000e+00> : vector<32xf32>
    %223 = vector.multi_reduction <add>, %222, %cst_203 [0] : vector<16x32xf32> to vector<32xf32>
    %224 = vector.shape_cast %223 : vector<32xf32> to vector<1x32xf32>
    %cst_204 = arith.constant 1.600000e+01 : f32
    %225 = vector.broadcast %cst_204 : f32 to vector<1x32xf32>
    %226 = arith.divf %224, %225 : vector<1x32xf32>
    %c0_205 = arith.constant 0 : index
    %c1 = arith.constant 1 : index
    %c0_206 = arith.constant 0 : index
    %227 = vector.load %arg18[%c0_205, %c1, %c0_206] : memref<1x8x32xf32, #tpu.memory_space<vmem>>, vector<1x1x32xf32>
    %228 = vector.shape_cast %227 : vector<1x1x32xf32> to vector<1x32xf32>
    %229 = vector.shape_cast %226 : vector<1x32xf32> to vector<1x1x32xf32>
    tpu.vector_store %arg18[%c0_205, %c1, %c0_206], %229 {strides = array<i32>} : memref<1x8x32xf32, #tpu.memory_space<vmem>>, vector<1x1x32xf32>,
    %230 = vector.extract_strided_slice %213 {offsets = [32, 0], sizes = [16, 32], strides = [1, 1]} : vector<128x32xf32> to vector<16x32xf32>
    %cst_207 = arith.constant dense<0.000000e+00> : vector<32xf32>
    %231 = vector.multi_reduction <add>, %230, %cst_207 [0] : vector<16x32xf32> to vector<32xf32>
    %232 = vector.shape_cast %231 : vector<32xf32> to vector<1x32xf32>
    %cst_208 = arith.constant 1.600000e+01 : f32
    %233 = vector.broadcast %cst_208 : f32 to vector<1x32xf32>
    %234 = arith.divf %232, %233 : vector<1x32xf32>
    %c0_209 = arith.constant 0 : index
    %c2 = arith.constant 2 : index
    %c0_210 = arith.constant 0 : index
    %235 = vector.load %arg18[%c0_209, %c2, %c0_210] : memref<1x8x32xf32, #tpu.memory_space<vmem>>, vector<1x1x32xf32>
    %236 = vector.shape_cast %235 : vector<1x1x32xf32> to vector<1x32xf32>
    %237 = vector.shape_cast %234 : vector<1x32xf32> to vector<1x1x32xf32>
    tpu.vector_store %arg18[%c0_209, %c2, %c0_210], %237 {strides = array<i32>} : memref<1x8x32xf32, #tpu.memory_space<vmem>>, vector<1x1x32xf32>,
    %238 = vector.extract_strided_slice %213 {offsets = [48, 0], sizes = [16, 32], strides = [1, 1]} : vector<128x32xf32> to vector<16x32xf32>
    %cst_211 = arith.constant dense<0.000000e+00> : vector<32xf32>
    %239 = vector.multi_reduction <add>, %238, %cst_211 [0] : vector<16x32xf32> to vector<32xf32>
    %240 = vector.shape_cast %239 : vector<32xf32> to vector<1x32xf32>
    %cst_212 = arith.constant 1.600000e+01 : f32
    %241 = vector.broadcast %cst_212 : f32 to vector<1x32xf32>
    %242 = arith.divf %240, %241 : vector<1x32xf32>
    %c0_213 = arith.constant 0 : index
    %c3 = arith.constant 3 : index
    %c0_214 = arith.constant 0 : index
    %243 = vector.load %arg18[%c0_213, %c3, %c0_214] : memref<1x8x32xf32, #tpu.memory_space<vmem>>, vector<1x1x32xf32>
    %244 = vector.shape_cast %243 : vector<1x1x32xf32> to vector<1x32xf32>
    %245 = vector.shape_cast %242 : vector<1x32xf32> to vector<1x1x32xf32>
    tpu.vector_store %arg18[%c0_213, %c3, %c0_214], %245 {strides = array<i32>} : memref<1x8x32xf32, #tpu.memory_space<vmem>>, vector<1x1x32xf32>,
    %246 = vector.extract_strided_slice %213 {offsets = [64, 0], sizes = [16, 32], strides = [1, 1]} : vector<128x32xf32> to vector<16x32xf32>
    %cst_215 = arith.constant dense<0.000000e+00> : vector<32xf32>
    %247 = vector.multi_reduction <add>, %246, %cst_215 [0] : vector<16x32xf32> to vector<32xf32>
    %248 = vector.shape_cast %247 : vector<32xf32> to vector<1x32xf32>
    %cst_216 = arith.constant 1.600000e+01 : f32
    %249 = vector.broadcast %cst_216 : f32 to vector<1x32xf32>
    %250 = arith.divf %248, %249 : vector<1x32xf32>
    %c0_217 = arith.constant 0 : index
    %c4 = arith.constant 4 : index
    %c0_218 = arith.constant 0 : index
    %251 = vector.load %arg18[%c0_217, %c4, %c0_218] : memref<1x8x32xf32, #tpu.memory_space<vmem>>, vector<1x1x32xf32>
    %252 = vector.shape_cast %251 : vector<1x1x32xf32> to vector<1x32xf32>
    %253 = vector.shape_cast %250 : vector<1x32xf32> to vector<1x1x32xf32>
    tpu.vector_store %arg18[%c0_217, %c4, %c0_218], %253 {strides = array<i32>} : memref<1x8x32xf32, #tpu.memory_space<vmem>>, vector<1x1x32xf32>,
    %254 = vector.extract_strided_slice %213 {offsets = [80, 0], sizes = [16, 32], strides = [1, 1]} : vector<128x32xf32> to vector<16x32xf32>
    %cst_219 = arith.constant dense<0.000000e+00> : vector<32xf32>
    %255 = vector.multi_reduction <add>, %254, %cst_219 [0] : vector<16x32xf32> to vector<32xf32>
    %256 = vector.shape_cast %255 : vector<32xf32> to vector<1x32xf32>
    %cst_220 = arith.constant 1.600000e+01 : f32
    %257 = vector.broadcast %cst_220 : f32 to vector<1x32xf32>
    %258 = arith.divf %256, %257 : vector<1x32xf32>
    %c0_221 = arith.constant 0 : index
    %c5 = arith.constant 5 : index
    %c0_222 = arith.constant 0 : index
    %259 = vector.load %arg18[%c0_221, %c5, %c0_222] : memref<1x8x32xf32, #tpu.memory_space<vmem>>, vector<1x1x32xf32>
    %260 = vector.shape_cast %259 : vector<1x1x32xf32> to vector<1x32xf32>
    %261 = vector.shape_cast %258 : vector<1x32xf32> to vector<1x1x32xf32>
    tpu.vector_store %arg18[%c0_221, %c5, %c0_222], %261 {strides = array<i32>} : memref<1x8x32xf32, #tpu.memory_space<vmem>>, vector<1x1x32xf32>,
    %262 = vector.extract_strided_slice %213 {offsets = [96, 0], sizes = [16, 32], strides = [1, 1]} : vector<128x32xf32> to vector<16x32xf32>
    %cst_223 = arith.constant dense<0.000000e+00> : vector<32xf32>
    %263 = vector.multi_reduction <add>, %262, %cst_223 [0] : vector<16x32xf32> to vector<32xf32>
    %264 = vector.shape_cast %263 : vector<32xf32> to vector<1x32xf32>
    %cst_224 = arith.constant 1.600000e+01 : f32
    %265 = vector.broadcast %cst_224 : f32 to vector<1x32xf32>
    %266 = arith.divf %264, %265 : vector<1x32xf32>
    %c0_225 = arith.constant 0 : index
    %c6 = arith.constant 6 : index
    %c0_226 = arith.constant 0 : index
    %267 = vector.load %arg18[%c0_225, %c6, %c0_226] : memref<1x8x32xf32, #tpu.memory_space<vmem>>, vector<1x1x32xf32>
    %268 = vector.shape_cast %267 : vector<1x1x32xf32> to vector<1x32xf32>
    %269 = vector.shape_cast %266 : vector<1x32xf32> to vector<1x1x32xf32>
    tpu.vector_store %arg18[%c0_225, %c6, %c0_226], %269 {strides = array<i32>} : memref<1x8x32xf32, #tpu.memory_space<vmem>>, vector<1x1x32xf32>,
    %270 = vector.extract_strided_slice %213 {offsets = [112, 0], sizes = [16, 32], strides = [1, 1]} : vector<128x32xf32> to vector<16x32xf32>
    %cst_227 = arith.constant dense<0.000000e+00> : vector<32xf32>
    %271 = vector.multi_reduction <add>, %270, %cst_227 [0] : vector<16x32xf32> to vector<32xf32>
    %272 = vector.shape_cast %271 : vector<32xf32> to vector<1x32xf32>
    %cst_228 = arith.constant 1.600000e+01 : f32
    %273 = vector.broadcast %cst_228 : f32 to vector<1x32xf32>
    %274 = arith.divf %272, %273 : vector<1x32xf32>
    %c0_229 = arith.constant 0 : index
    %c7 = arith.constant 7 : index
    %c0_230 = arith.constant 0 : index
    %275 = vector.load %arg18[%c0_229, %c7, %c0_230] : memref<1x8x32xf32, #tpu.memory_space<vmem>>, vector<1x1x32xf32>
    %276 = vector.shape_cast %275 : vector<1x1x32xf32> to vector<1x32xf32>
    %277 = vector.shape_cast %274 : vector<1x32xf32> to vector<1x1x32xf32>
    tpu.vector_store %arg18[%c0_229, %c7, %c0_230], %277 {strides = array<i32>} : memref<1x8x32xf32, #tpu.memory_space<vmem>>, vector<1x1x32xf32>,
    return
  }
  func.func @transform_0(%arg0: i32) -> (i32, i32, i32) {
    %c0_i32 = arith.constant 0 : i32
    %c0_i32_0 = arith.constant 0 : i32
    %c0_i32_1 = arith.constant 0 : i32
    return %arg0, %c0_i32, %c0_i32_0 : i32, i32, i32
  }
  func.func @transform_1(%arg0: i32) -> (i32, i32) {
    %c0_i32 = arith.constant 0 : i32
    %c0_i32_0 = arith.constant 0 : i32
    %c0_i32_1 = arith.constant 0 : i32
    return %c0_i32, %c0_i32_0 : i32, i32
  }
  func.func @transform_2(%arg0: i32) -> (i32, i32) {
    %c0_i32 = arith.constant 0 : i32
    %c0_i32_0 = arith.constant 0 : i32
    %c0_i32_1 = arith.constant 0 : i32
    return %c0_i32, %c0_i32_0 : i32, i32
  }
  func.func @transform_3(%arg0: i32) -> (i32, i32) {
    %c0_i32 = arith.constant 0 : i32
    %c0_i32_0 = arith.constant 0 : i32
    %c0_i32_1 = arith.constant 0 : i32
    return %c0_i32, %c0_i32_0 : i32, i32
  }
  func.func @transform_4(%arg0: i32) -> (i32, i32) {
    %c0_i32 = arith.constant 0 : i32
    %c0_i32_0 = arith.constant 0 : i32
    %c0_i32_1 = arith.constant 0 : i32
    return %c0_i32, %c0_i32_0 : i32, i32
  }
  func.func @transform_5(%arg0: i32) -> (i32, i32) {
    %c0_i32 = arith.constant 0 : i32
    %c0_i32_0 = arith.constant 0 : i32
    %c0_i32_1 = arith.constant 0 : i32
    return %c0_i32, %c0_i32_0 : i32, i32
  }
  func.func @transform_6(%arg0: i32) -> (i32, i32) {
    %c0_i32 = arith.constant 0 : i32
    %c0_i32_0 = arith.constant 0 : i32
    %c0_i32_1 = arith.constant 0 : i32
    return %c0_i32, %c0_i32_0 : i32, i32
  }
  func.func @transform_7(%arg0: i32) -> (i32, i32) {
    %c0_i32 = arith.constant 0 : i32
    %c0_i32_0 = arith.constant 0 : i32
    %c0_i32_1 = arith.constant 0 : i32
    return %c0_i32, %c0_i32_0 : i32, i32
  }
  func.func @transform_8(%arg0: i32) -> (i32, i32) {
    %c0_i32 = arith.constant 0 : i32
    %c0_i32_0 = arith.constant 0 : i32
    %c0_i32_1 = arith.constant 0 : i32
    return %c0_i32, %c0_i32_0 : i32, i32
  }
  func.func @transform_9(%arg0: i32) -> (i32, i32) {
    %c0_i32 = arith.constant 0 : i32
    %c0_i32_0 = arith.constant 0 : i32
    %c0_i32_1 = arith.constant 0 : i32
    return %c0_i32, %c0_i32_0 : i32, i32
  }
  func.func @transform_10(%arg0: i32) -> (i32, i32) {
    %c0_i32 = arith.constant 0 : i32
    %c0_i32_0 = arith.constant 0 : i32
    %c0_i32_1 = arith.constant 0 : i32
    return %c0_i32, %c0_i32_0 : i32, i32
  }
  func.func @transform_11(%arg0: i32) -> (i32, i32) {
    %c0_i32 = arith.constant 0 : i32
    %c0_i32_0 = arith.constant 0 : i32
    %c0_i32_1 = arith.constant 0 : i32
    return %c0_i32, %c0_i32_0 : i32, i32
  }
  func.func @transform_12(%arg0: i32) -> (i32, i32) {
    %c0_i32 = arith.constant 0 : i32
    %c0_i32_0 = arith.constant 0 : i32
    %c0_i32_1 = arith.constant 0 : i32
    return %c0_i32, %c0_i32_0 : i32, i32
  }
  func.func @transform_13(%arg0: i32) -> (i32, i32) {
    %c0_i32 = arith.constant 0 : i32
    %c0_i32_0 = arith.constant 0 : i32
    %c0_i32_1 = arith.constant 0 : i32
    return %c0_i32, %c0_i32_0 : i32, i32
  }
  func.func @transform_14(%arg0: i32) -> (i32, i32) {
    %c0_i32 = arith.constant 0 : i32
    %c0_i32_0 = arith.constant 0 : i32
    %c0_i32_1 = arith.constant 0 : i32
    return %c0_i32, %c0_i32_0 : i32, i32
  }
  func.func @transform_15(%arg0: i32) -> (i32, i32) {
    %c0_i32 = arith.constant 0 : i32
    %c0_i32_0 = arith.constant 0 : i32
    %c0_i32_1 = arith.constant 0 : i32
    return %c0_i32, %c0_i32_0 : i32, i32
  }
  func.func @transform_16(%arg0: i32) -> (i32, i32) {
    %c0_i32 = arith.constant 0 : i32
    %c0_i32_0 = arith.constant 0 : i32
    %c0_i32_1 = arith.constant 0 : i32
    return %c0_i32, %c0_i32_0 : i32, i32
  }
  func.func @transform_17(%arg0: i32) -> (i32, i32, i32) {
    %c0_i32 = arith.constant 0 : i32
    %c0_i32_0 = arith.constant 0 : i32
    %c0_i32_1 = arith.constant 0 : i32
    return %arg0, %c0_i32, %c0_i32_0 : i32, i32, i32
  }
}

</mosaic_0001>

<llo_original>
// kernel: fc_based_gcn_forward.1
$region0: #{fc_based_gcn_forward.1}
  #allocation0 [shape = 'u32[]', space=smem, size = 0x4, offset = 0x4, fixed_abs, tag = 'smem constant byte address 0x4 - core index']
  #allocation1 [shape = 'u32[72,128]{1,0:T(1,128)}', space=vmem, size = 0x9000, scoped, tag = 'internal scratch']
  #allocation2 [shape = 'bf16[128,128]{1,0:T(8,128)(2,1)}', space=vmem, size = 0x8000, scoped, tag = 'scratch operand']
  %s0 = inlined_call_operand.vmem [shape: bf16[2,128,16], index: 0, kind: input, shape index: {}]
  %s1 = inlined_call_operand.vmem [shape: bf16[16,16], index: 1, kind: input, shape index: {}]
  %s2 = inlined_call_operand.vmem [shape: bf16[16,32], index: 2, kind: input, shape index: {}]
  %s3 = inlined_call_operand.vmem [shape: bf16[16,32], index: 3, kind: input, shape index: {}]
  %s4 = inlined_call_operand.vmem [shape: f32[1,32], index: 4, kind: input, shape index: {}]
  %s5 = inlined_call_operand.vmem [shape: bf16[32,32], index: 5, kind: input, shape index: {}]
  %s6 = inlined_call_operand.vmem [shape: bf16[32,32], index: 6, kind: input, shape index: {}]
  %s7 = inlined_call_operand.vmem [shape: f32[1,32], index: 7, kind: input, shape index: {}]
  %s8 = inlined_call_operand.vmem [shape: bf16[32,32], index: 8, kind: input, shape index: {}]
  %s9 = inlined_call_operand.vmem [shape: bf16[32,32], index: 9, kind: input, shape index: {}]
  %s10 = inlined_call_operand.vmem [shape: f32[1,32], index: 10, kind: input, shape index: {}]
  %s11 = inlined_call_operand.vmem [shape: bf16[32,32], index: 11, kind: input, shape index: {}]
  %s12 = inlined_call_operand.vmem [shape: bf16[32,32], index: 12, kind: input, shape index: {}]
  %s13 = inlined_call_operand.vmem [shape: f32[1,32], index: 13, kind: input, shape index: {}]
  %s14 = inlined_call_operand.vmem [shape: bf16[128,32], index: 14, kind: input, shape index: {}]
  %s15 = inlined_call_operand.vmem [shape: bf16[128,32], index: 15, kind: input, shape index: {}]
  %s16 = inlined_call_operand.vmem [shape: f32[1,32], index: 16, kind: input, shape index: {}]
  %s17 = inlined_call_operand.vmem [shape: f32[2,8,32], index: 17, kind: output, shape index: {}]
  %s18 = sld [smem:[#allocation0]]
  $region101: #{fc_based_gcn_forward.1} parent=0
    _
  %s20 = ssub.s32 1, %s18
  %s21 = scalar_select 0, %s20, %s18
  loop: start=0, step=1, limit=4
  $region2: #{fc_based_gcn_forward.1} parent=0 // loop_pre_header
    _
  $region3: #{fc_based_gcn_forward.1} parent=0 // loop_header
    %s23 = sphi 0, %s27
    %p24 = scmp.ge.s32.totalorder %s23, 4
    %s33 = sphi 0, %s35
    %s36 = sphi 0, %s33
    %s37 = sphi 0, %s36
    %s53 = sphi 0, %s37
    %s57 = sphi 0, %s57
    %s59 = sphi 0, %s57
    %s60 = sphi 0, %s59
    %s74 = sphi 0, %s60
    %s78 = sphi 0, %s78
    %s80 = sphi 0, %s78
    %s81 = sphi 0, %s80
    %s95 = sphi 0, %s81
    %s99 = sphi 0, %s99
    %s101 = sphi 0, %s99
    %s102 = sphi 0, %s101
    %s116 = sphi 0, %s102
    %s120 = sphi 0, %s120
    %s122 = sphi 0, %s120
    %s123 = sphi 0, %s122
    %s137 = sphi 0, %s123
    %s141 = sphi 0, %s141
    %s143 = sphi 0, %s141
    %s144 = sphi 0, %s143
    %s158 = sphi 0, %s144
    %s162 = sphi 0, %s162
    %s164 = sphi 0, %s162
    %s165 = sphi 0, %s164
    %s179 = sphi 0, %s165
    %s183 = sphi 0, %s183
    %s185 = sphi 0, %s183
    %s186 = sphi 0, %s185
    %s200 = sphi 0, %s186
    %s204 = sphi 0, %s204
    %s206 = sphi 0, %s204
    %s207 = sphi 0, %s206
    %s221 = sphi 0, %s207
    %s225 = sphi 0, %s225
    %s227 = sphi 0, %s225
    %s228 = sphi 0, %s227
    %s242 = sphi 0, %s228
    %s246 = sphi 0, %s246
    %s248 = sphi 0, %s246
    %s249 = sphi 0, %s248
    %s263 = sphi 0, %s249
    %s267 = sphi 0, %s267
    %s269 = sphi 0, %s267
    %s270 = sphi 0, %s269
    %s284 = sphi 0, %s270
    %s288 = sphi 0, %s288
    %s290 = sphi 0, %s288
    %s291 = sphi 0, %s290
    %s305 = sphi 0, %s291
    %s309 = sphi 0, %s309
    %s311 = sphi 0, %s309
    %s312 = sphi 0, %s311
    %s326 = sphi 0, %s312
    %s330 = sphi 0, %s330
    %s332 = sphi 0, %s330
    %s333 = sphi 0, %s332
    %s347 = sphi 0, %s333
    %s351 = sphi 0, %s351
    %s353 = sphi 0, %s351
    %s354 = sphi 0, %s353
    %s368 = sphi 0, %s354
    %s372 = sphi 0, %s372
    %s374 = sphi 0, %s372
    %s375 = sphi 0, %s374
    %s389 = sphi 0, %s375
    %s395 = sphi 0, %s397
    %s398 = sphi 0, %s395
    %s399 = sphi 0, %s398
    %s415 = sphi 0, %s399
  $region4: #{fc_based_gcn_forward.1} parent=0 // loop_header_branch
    %26 = sbr.rel (%p24) target = $region8
  $region5: #{fc_based_gcn_forward.1} parent=0 // loop_body
    %s28 = ssub.s32 %s23, 1
    %s29 = ssub.s32 %s23, 2
    %s30 = sadd.s32 %s23, 1
    %s31 = ssub.s32 %s23, %s30
    %p32 = scmp.eq.s32.totalorder %s31, 0
    %s34 = sadd.s32 %s33, 1
    %s35 = scalar_select %p32, %s33, %s34
    %p38 = pneg %p32
    %p39 = scmp.eq.s32.totalorder %s23, 1
    %p40 = por %p38, %p39
    %p41 = scmp.ne.s32.totalorder %s33, %s36
    %p42 = scmp.eq.s32.totalorder %s23, 0
    %p43 = por %p41, %p42
    %p44 = scmp.ne.s32.totalorder %s33, %s36
    %p45 = scmp.eq.s32.totalorder %s28, 1
    %p46 = por %p44, %p45
    %p47 = scmp.ne.s32.totalorder %s36, %s37
    %p48 = scmp.eq.s32.totalorder %s28, 0
    %p49 = por %p47, %p48
    %p50 = scmp.ne.s32.totalorder %s36, %s37
    %p51 = scmp.eq.s32.totalorder %s29, 1
    %p52 = por %p50, %p51
    %p54 = scmp.ne.s32.totalorder %s37, %s53
    %p55 = scmp.eq.s32.totalorder %s29, 0
    %p56 = por %p54, %p55
    %s58 = sadd.s32 %s57, 1
    %p61 = scmp.eq.s32.totalorder %s23, 1
    %p62 = scmp.ne.s32.totalorder %s57, %s59
    %p63 = scmp.eq.s32.totalorder %s23, 0
    %p64 = por %p62, %p63
    %p65 = scmp.ne.s32.totalorder %s57, %s59
    %p66 = scmp.eq.s32.totalorder %s28, 1
    %p67 = por %p65, %p66
    %p68 = scmp.ne.s32.totalorder %s59, %s60
    %p69 = scmp.eq.s32.totalorder %s28, 0
    %p70 = por %p68, %p69
    %p71 = scmp.ne.s32.totalorder %s59, %s60
    %p72 = scmp.eq.s32.totalorder %s29, 1
    %p73 = por %p71, %p72
    %p75 = scmp.ne.s32.totalorder %s60, %s74
    %p76 = scmp.eq.s32.totalorder %s29, 0
    %p77 = por %p75, %p76
    %s79 = sadd.s32 %s78, 1
    %p82 = scmp.eq.s32.totalorder %s23, 1
    %p83 = scmp.ne.s32.totalorder %s78, %s80
    %p84 = scmp.eq.s32.totalorder %s23, 0
    %p85 = por %p83, %p84
    %p86 = scmp.ne.s32.totalorder %s78, %s80
    %p87 = scmp.eq.s32.totalorder %s28, 1
    %p88 = por %p86, %p87
    %p89 = scmp.ne.s32.totalorder %s80, %s81
    %p90 = scmp.eq.s32.totalorder %s28, 0
    %p91 = por %p89, %p90
    %p92 = scmp.ne.s32.totalorder %s80, %s81
    %p93 = scmp.eq.s32.totalorder %s29, 1
    %p94 = por %p92, %p93
    %p96 = scmp.ne.s32.totalorder %s81, %s95
    %p97 = scmp.eq.s32.totalorder %s29, 0
    %p98 = por %p96, %p97
    %s100 = sadd.s32 %s99, 1
    %p103 = scmp.eq.s32.totalorder %s23, 1
    %p104 = scmp.ne.s32.totalorder %s99, %s101
    %p105 = scmp.eq.s32.totalorder %s23, 0
    %p106 = por %p104, %p105
    %p107 = scmp.ne.s32.totalorder %s99, %s101
    %p108 = scmp.eq.s32.totalorder %s28, 1
    %p109 = por %p107, %p108
    %p110 = scmp.ne.s32.totalorder %s101, %s102
    %p111 = scmp.eq.s32.totalorder %s28, 0
    %p112 = por %p110, %p111
    %p113 = scmp.ne.s32.totalorder %s101, %s102
    %p114 = scmp.eq.s32.totalorder %s29, 1
    %p115 = por %p113, %p114
    %p117 = scmp.ne.s32.totalorder %s102, %s116
    %p118 = scmp.eq.s32.totalorder %s29, 0
    %p119 = por %p117, %p118
    %s121 = sadd.s32 %s120, 1
    %p124 = scmp.eq.s32.totalorder %s23, 1
    %p125 = scmp.ne.s32.totalorder %s120, %s122
    %p126 = scmp.eq.s32.totalorder %s23, 0
    %p127 = por %p125, %p126
    %p128 = scmp.ne.s32.totalorder %s120, %s122
    %p129 = scmp.eq.s32.totalorder %s28, 1
    %p130 = por %p128, %p129
    %p131 = scmp.ne.s32.totalorder %s122, %s123
    %p132 = scmp.eq.s32.totalorder %s28, 0
    %p133 = por %p131, %p132
    %p134 = scmp.ne.s32.totalorder %s122, %s123
    %p135 = scmp.eq.s32.totalorder %s29, 1
    %p136 = por %p134, %p135
    %p138 = scmp.ne.s32.totalorder %s123, %s137
    %p139 = scmp.eq.s32.totalorder %s29, 0
    %p140 = por %p138, %p139
    %s142 = sadd.s32 %s141, 1
    %p145 = scmp.eq.s32.totalorder %s23, 1
    %p146 = scmp.ne.s32.totalorder %s141, %s143
    %p147 = scmp.eq.s32.totalorder %s23, 0
    %p148 = por %p146, %p147
    %p149 = scmp.ne.s32.totalorder %s141, %s143
    %p150 = scmp.eq.s32.totalorder %s28, 1
    %p151 = por %p149, %p150
    %p152 = scmp.ne.s32.totalorder %s143, %s144
    %p153 = scmp.eq.s32.totalorder %s28, 0
    %p154 = por %p152, %p153
    %p155 = scmp.ne.s32.totalorder %s143, %s144
    %p156 = scmp.eq.s32.totalorder %s29, 1
    %p157 = por %p155, %p156
    %p159 = scmp.ne.s32.totalorder %s144, %s158
    %p160 = scmp.eq.s32.totalorder %s29, 0
    %p161 = por %p159, %p160
    %s163 = sadd.s32 %s162, 1
    %p166 = scmp.eq.s32.totalorder %s23, 1
    %p167 = scmp.ne.s32.totalorder %s162, %s164
    %p168 = scmp.eq.s32.totalorder %s23, 0
    %p169 = por %p167, %p168
    %p170 = scmp.ne.s32.totalorder %s162, %s164
    %p171 = scmp.eq.s32.totalorder %s28, 1
    %p172 = por %p170, %p171
    %p173 = scmp.ne.s32.totalorder %s164, %s165
    %p174 = scmp.eq.s32.totalorder %s28, 0
    %p175 = por %p173, %p174
    %p176 = scmp.ne.s32.totalorder %s164, %s165
    %p177 = scmp.eq.s32.totalorder %s29, 1
    %p178 = por %p176, %p177
    %p180 = scmp.ne.s32.totalorder %s165, %s179
    %p181 = scmp.eq.s32.totalorder %s29, 0
    %p182 = por %p180, %p181
    %s184 = sadd.s32 %s183, 1
    %p187 = scmp.eq.s32.totalorder %s23, 1
    %p188 = scmp.ne.s32.totalorder %s183, %s185
    %p189 = scmp.eq.s32.totalorder %s23, 0
    %p190 = por %p188, %p189
    %p191 = scmp.ne.s32.totalorder %s183, %s185
    %p192 = scmp.eq.s32.totalorder %s28, 1
    %p193 = por %p191, %p192
    %p194 = scmp.ne.s32.totalorder %s185, %s186
    %p195 = scmp.eq.s32.totalorder %s28, 0
    %p196 = por %p194, %p195
    %p197 = scmp.ne.s32.totalorder %s185, %s186
    %p198 = scmp.eq.s32.totalorder %s29, 1
    %p199 = por %p197, %p198
    %p201 = scmp.ne.s32.totalorder %s186, %s200
    %p202 = scmp.eq.s32.totalorder %s29, 0
    %p203 = por %p201, %p202
    %s205 = sadd.s32 %s204, 1
    %p208 = scmp.eq.s32.totalorder %s23, 1
    %p209 = scmp.ne.s32.totalorder %s204, %s206
    %p210 = scmp.eq.s32.totalorder %s23, 0
    %p211 = por %p209, %p210
    %p212 = scmp.ne.s32.totalorder %s204, %s206
    %p213 = scmp.eq.s32.totalorder %s28, 1
    %p214 = por %p212, %p213
    %p215 = scmp.ne.s32.totalorder %s206, %s207
    %p216 = scmp.eq.s32.totalorder %s28, 0
    %p217 = por %p215, %p216
    %p218 = scmp.ne.s32.totalorder %s206, %s207
    %p219 = scmp.eq.s32.totalorder %s29, 1
    %p220 = por %p218, %p219
    %p222 = scmp.ne.s32.totalorder %s207, %s221
    %p223 = scmp.eq.s32.totalorder %s29, 0
    %p224 = por %p222, %p223
    %s226 = sadd.s32 %s225, 1
    %p229 = scmp.eq.s32.totalorder %s23, 1
    %p230 = scmp.ne.s32.totalorder %s225, %s227
    %p231 = scmp.eq.s32.totalorder %s23, 0
    %p232 = por %p230, %p231
    %p233 = scmp.ne.s32.totalorder %s225, %s227
    %p234 = scmp.eq.s32.totalorder %s28, 1
    %p235 = por %p233, %p234
    %p236 = scmp.ne.s32.totalorder %s227, %s228
    %p237 = scmp.eq.s32.totalorder %s28, 0
    %p238 = por %p236, %p237
    %p239 = scmp.ne.s32.totalorder %s227, %s228
    %p240 = scmp.eq.s32.totalorder %s29, 1
    %p241 = por %p239, %p240
    %p243 = scmp.ne.s32.totalorder %s228, %s242
    %p244 = scmp.eq.s32.totalorder %s29, 0
    %p245 = por %p243, %p244
    %s247 = sadd.s32 %s246, 1
    %p250 = scmp.eq.s32.totalorder %s23, 1
    %p251 = scmp.ne.s32.totalorder %s246, %s248
    %p252 = scmp.eq.s32.totalorder %s23, 0
    %p253 = por %p251, %p252
    %p254 = scmp.ne.s32.totalorder %s246, %s248
    %p255 = scmp.eq.s32.totalorder %s28, 1
    %p256 = por %p254, %p255
    %p257 = scmp.ne.s32.totalorder %s248, %s249
    %p258 = scmp.eq.s32.totalorder %s28, 0
    %p259 = por %p257, %p258
    %p260 = scmp.ne.s32.totalorder %s248, %s249
    %p261 = scmp.eq.s32.totalorder %s29, 1
    %p262 = por %p260, %p261
    %p264 = scmp.ne.s32.totalorder %s249, %s263
    %p265 = scmp.eq.s32.totalorder %s29, 0
    %p266 = por %p264, %p265
    %s268 = sadd.s32 %s267, 1
    %p271 = scmp.eq.s32.totalorder %s23, 1
    %p272 = scmp.ne.s32.totalorder %s267, %s269
    %p273 = scmp.eq.s32.totalorder %s23, 0
    %p274 = por %p272, %p273
    %p275 = scmp.ne.s32.totalorder %s267, %s269
    %p276 = scmp.eq.s32.totalorder %s28, 1
    %p277 = por %p275, %p276
    %p278 = scmp.ne.s32.totalorder %s269, %s270
    %p279 = scmp.eq.s32.totalorder %s28, 0
    %p280 = por %p278, %p279
    %p281 = scmp.ne.s32.totalorder %s269, %s270
    %p282 = scmp.eq.s32.totalorder %s29, 1
    %p283 = por %p281, %p282
    %p285 = scmp.ne.s32.totalorder %s270, %s284
    %p286 = scmp.eq.s32.totalorder %s29, 0
    %p287 = por %p285, %p286
    %s289 = sadd.s32 %s288, 1
    %p292 = scmp.eq.s32.totalorder %s23, 1
    %p293 = scmp.ne.s32.totalorder %s288, %s290
    %p294 = scmp.eq.s32.totalorder %s23, 0
    %p295 = por %p293, %p294
    %p296 = scmp.ne.s32.totalorder %s288, %s290
    %p297 = scmp.eq.s32.totalorder %s28, 1
    %p298 = por %p296, %p297
    %p299 = scmp.ne.s32.totalorder %s290, %s291
    %p300 = scmp.eq.s32.totalorder %s28, 0
    %p301 = por %p299, %p300
    %p302 = scmp.ne.s32.totalorder %s290, %s291
    %p303 = scmp.eq.s32.totalorder %s29, 1
    %p304 = por %p302, %p303
    %p306 = scmp.ne.s32.totalorder %s291, %s305
    %p307 = scmp.eq.s32.totalorder %s29, 0
    %p308 = por %p306, %p307
    %s310 = sadd.s32 %s309, 1
    %p313 = scmp.eq.s32.totalorder %s23, 1
    %p314 = scmp.ne.s32.totalorder %s309, %s311
    %p315 = scmp.eq.s32.totalorder %s23, 0
    %p316 = por %p314, %p315
    %p317 = scmp.ne.s32.totalorder %s309, %s311
    %p318 = scmp.eq.s32.totalorder %s28, 1
    %p319 = por %p317, %p318
    %p320 = scmp.ne.s32.totalorder %s311, %s312
    %p321 = scmp.eq.s32.totalorder %s28, 0
    %p322 = por %p320, %p321
    %p323 = scmp.ne.s32.totalorder %s311, %s312
    %p324 = scmp.eq.s32.totalorder %s29, 1
    %p325 = por %p323, %p324
    %p327 = scmp.ne.s32.totalorder %s312, %s326
    %p328 = scmp.eq.s32.totalorder %s29, 0
    %p329 = por %p327, %p328
    %s331 = sadd.s32 %s330, 1
    %p334 = scmp.eq.s32.totalorder %s23, 1
    %p335 = scmp.ne.s32.totalorder %s330, %s332
    %p336 = scmp.eq.s32.totalorder %s23, 0
    %p337 = por %p335, %p336
    %p338 = scmp.ne.s32.totalorder %s330, %s332
    %p339 = scmp.eq.s32.totalorder %s28, 1
    %p340 = por %p338, %p339
    %p341 = scmp.ne.s32.totalorder %s332, %s333
    %p342 = scmp.eq.s32.totalorder %s28, 0
    %p343 = por %p341, %p342
    %p344 = scmp.ne.s32.totalorder %s332, %s333
    %p345 = scmp.eq.s32.totalorder %s29, 1
    %p346 = por %p344, %p345
    %p348 = scmp.ne.s32.totalorder %s333, %s347
    %p349 = scmp.eq.s32.totalorder %s29, 0
    %p350 = por %p348, %p349
    %s352 = sadd.s32 %s351, 1
    %p355 = scmp.eq.s32.totalorder %s23, 1
    %p356 = scmp.ne.s32.totalorder %s351, %s353
    %p357 = scmp.eq.s32.totalorder %s23, 0
    %p358 = por %p356, %p357
    %p359 = scmp.ne.s32.totalorder %s351, %s353
    %p360 = scmp.eq.s32.totalorder %s28, 1
    %p361 = por %p359, %p360
    %p362 = scmp.ne.s32.totalorder %s353, %s354
    %p363 = scmp.eq.s32.totalorder %s28, 0
    %p364 = por %p362, %p363
    %p365 = scmp.ne.s32.totalorder %s353, %s354
    %p366 = scmp.eq.s32.totalorder %s29, 1
    %p367 = por %p365, %p366
    %p369 = scmp.ne.s32.totalorder %s354, %s368
    %p370 = scmp.eq.s32.totalorder %s29, 0
    %p371 = por %p369, %p370
    %s373 = sadd.s32 %s372, 1
    %p376 = scmp.eq.s32.totalorder %s23, 1
    %p377 = scmp.ne.s32.totalorder %s372, %s374
    %p378 = scmp.eq.s32.totalorder %s23, 0
    %p379 = por %p377, %p378
    %p380 = scmp.ne.s32.totalorder %s372, %s374
    %p381 = scmp.eq.s32.totalorder %s28, 1
    %p382 = por %p380, %p381
    %p383 = scmp.ne.s32.totalorder %s374, %s375
    %p384 = scmp.eq.s32.totalorder %s28, 0
    %p385 = por %p383, %p384
    %p386 = scmp.ne.s32.totalorder %s374, %s375
    %p387 = scmp.eq.s32.totalorder %s29, 1
    %p388 = por %p386, %p387
    %p390 = scmp.ne.s32.totalorder %s375, %s389
    %p391 = scmp.eq.s32.totalorder %s29, 0
    %p392 = por %p390, %p391
    %s393 = ssub.s32 %s23, %s30
    %p394 = scmp.eq.s32.totalorder %s393, 0
    %s396 = sadd.s32 %s395, 1
    %s397 = scalar_select %p394, %s395, %s396
    %p400 = pneg %p394
    %p401 = scmp.eq.s32.totalorder %s23, 1
    %p402 = por %p400, %p401
    %p403 = scmp.ne.s32.totalorder %s395, %s398
    %p404 = scmp.eq.s32.totalorder %s23, 0
    %p405 = por %p403, %p404
    %p406 = scmp.ne.s32.totalorder %s395, %s398
    %p407 = scmp.eq.s32.totalorder %s28, 1
    %p408 = por %p406, %p407
    %p409 = scmp.ne.s32.totalorder %s398, %s399
    %p410 = scmp.eq.s32.totalorder %s28, 0
    %p411 = por %p409, %p410
    %p412 = scmp.ne.s32.totalorder %s398, %s399
    %p413 = scmp.eq.s32.totalorder %s29, 1
    %p414 = por %p412, %p413
    %p416 = scmp.ne.s32.totalorder %s399, %s415
    %p417 = scmp.eq.s32.totalorder %s29, 0
    %p418 = por %p416, %p417
    %p419 = scmp.le.s32.totalorder 1, %s23
    %p420 = scmp.lt.s32.totalorder %s23, 3
    %p421 = pnand %p419, %p420
    %p422 = pneg %p421
    // Predicated region
    $region9: #{fc_based_gcn_forward.1} parent=5 // pred_check
      _
    $region10: #{fc_based_gcn_forward.1} parent=5 // pred_check_branch
      %424 = sbr.rel (%p421) target = $region12
    $region11: #{fc_based_gcn_forward.1} parent=5 // pred_region
      %s425 = ssub.s32 %s23, 1
      // Predicated region
      $region13: #{fc_based_gcn_forward.1} parent=11 // pred_check
        %p426 = pneg %p70
      $region14: #{fc_based_gcn_forward.1} parent=11 // pred_check_branch
        %428 = sbr.rel (%p426) target = $region16
      $region15: #{fc_based_gcn_forward.1} parent=11 // pred_region
        _
      $region16: #{fc_based_gcn_forward.1} parent=11 // pred_fallthru
        _
      // Predicated region
      $region17: #{fc_based_gcn_forward.1} parent=11 // pred_check
        %p429 = pneg %p91
      $region18: #{fc_based_gcn_forward.1} parent=11 // pred_check_branch
        %431 = sbr.rel (%p429) target = $region20
      $region19: #{fc_based_gcn_forward.1} parent=11 // pred_region
        _
      $region20: #{fc_based_gcn_forward.1} parent=11 // pred_fallthru
        _
      // Predicated region
      $region21: #{fc_based_gcn_forward.1} parent=11 // pred_check
        %p432 = pneg %p112
      $region22: #{fc_based_gcn_forward.1} parent=11 // pred_check_branch
        %434 = sbr.rel (%p432) target = $region24
      $region23: #{fc_based_gcn_forward.1} parent=11 // pred_region
        _
      $region24: #{fc_based_gcn_forward.1} parent=11 // pred_fallthru
        _
      // Predicated region
      $region25: #{fc_based_gcn_forward.1} parent=11 // pred_check
        %p435 = pneg %p133
      $region26: #{fc_based_gcn_forward.1} parent=11 // pred_check_branch
        %437 = sbr.rel (%p435) target = $region28
      $region27: #{fc_based_gcn_forward.1} parent=11 // pred_region
        _
      $region28: #{fc_based_gcn_forward.1} parent=11 // pred_fallthru
        _
      // Predicated region
      $region29: #{fc_based_gcn_forward.1} parent=11 // pred_check
        %p438 = pneg %p154
      $region30: #{fc_based_gcn_forward.1} parent=11 // pred_check_branch
        %440 = sbr.rel (%p438) target = $region32
      $region31: #{fc_based_gcn_forward.1} parent=11 // pred_region
        _
      $region32: #{fc_based_gcn_forward.1} parent=11 // pred_fallthru
        _
      // Predicated region
      $region33: #{fc_based_gcn_forward.1} parent=11 // pred_check
        %p441 = pneg %p175
      $region34: #{fc_based_gcn_forward.1} parent=11 // pred_check_branch
        %443 = sbr.rel (%p441) target = $region36
      $region35: #{fc_based_gcn_forward.1} parent=11 // pred_region
        _
      $region36: #{fc_based_gcn_forward.1} parent=11 // pred_fallthru
        _
      // Predicated region
      $region37: #{fc_based_gcn_forward.1} parent=11 // pred_check
        %p444 = pneg %p196
      $region38: #{fc_based_gcn_forward.1} parent=11 // pred_check_branch
        %446 = sbr.rel (%p444) target = $region40
      $region39: #{fc_based_gcn_forward.1} parent=11 // pred_region
        _
      $region40: #{fc_based_gcn_forward.1} parent=11 // pred_fallthru
        _
      // Predicated region
      $region41: #{fc_based_gcn_forward.1} parent=11 // pred_check
        %p447 = pneg %p217
      $region42: #{fc_based_gcn_forward.1} parent=11 // pred_check_branch
        %449 = sbr.rel (%p447) target = $region44
      $region43: #{fc_based_gcn_forward.1} parent=11 // pred_region
        _
      $region44: #{fc_based_gcn_forward.1} parent=11 // pred_fallthru
        _
      // Predicated region
      $region45: #{fc_based_gcn_forward.1} parent=11 // pred_check
        %p450 = pneg %p238
      $region46: #{fc_based_gcn_forward.1} parent=11 // pred_check_branch
        %452 = sbr.rel (%p450) target = $region48
      $region47: #{fc_based_gcn_forward.1} parent=11 // pred_region
        _
      $region48: #{fc_based_gcn_forward.1} parent=11 // pred_fallthru
        _
      // Predicated region
      $region49: #{fc_based_gcn_forward.1} parent=11 // pred_check
        %p453 = pneg %p259
      $region50: #{fc_based_gcn_forward.1} parent=11 // pred_check_branch
        %455 = sbr.rel (%p453) target = $region52
      $region51: #{fc_based_gcn_forward.1} parent=11 // pred_region
        _
      $region52: #{fc_based_gcn_forward.1} parent=11 // pred_fallthru
        _
      // Predicated region
      $region53: #{fc_based_gcn_forward.1} parent=11 // pred_check
        %p456 = pneg %p280
      $region54: #{fc_based_gcn_forward.1} parent=11 // pred_check_branch
        %458 = sbr.rel (%p456) target = $region56
      $region55: #{fc_based_gcn_forward.1} parent=11 // pred_region
        _
      $region56: #{fc_based_gcn_forward.1} parent=11 // pred_fallthru
        _
      // Predicated region
      $region57: #{fc_based_gcn_forward.1} parent=11 // pred_check
        %p459 = pneg %p301
      $region58: #{fc_based_gcn_forward.1} parent=11 // pred_check_branch
        %461 = sbr.rel (%p459) target = $region60
      $region59: #{fc_based_gcn_forward.1} parent=11 // pred_region
        _
      $region60: #{fc_based_gcn_forward.1} parent=11 // pred_fallthru
        _
      // Predicated region
      $region61: #{fc_based_gcn_forward.1} parent=11 // pred_check
        %p462 = pneg %p322
      $region62: #{fc_based_gcn_forward.1} parent=11 // pred_check_branch
        %464 = sbr.rel (%p462) target = $region64
      $region63: #{fc_based_gcn_forward.1} parent=11 // pred_region
        _
      $region64: #{fc_based_gcn_forward.1} parent=11 // pred_fallthru
        _
      // Predicated region
      $region65: #{fc_based_gcn_forward.1} parent=11 // pred_check
        %p465 = pneg %p343
      $region66: #{fc_based_gcn_forward.1} parent=11 // pred_check_branch
        %467 = sbr.rel (%p465) target = $region68
      $region67: #{fc_based_gcn_forward.1} parent=11 // pred_region
        _
      $region68: #{fc_based_gcn_forward.1} parent=11 // pred_fallthru
        _
      // Predicated region
      $region69: #{fc_based_gcn_forward.1} parent=11 // pred_check
        %p468 = pneg %p364
      $region70: #{fc_based_gcn_forward.1} parent=11 // pred_check_branch
        %470 = sbr.rel (%p468) target = $region72
      $region71: #{fc_based_gcn_forward.1} parent=11 // pred_region
        _
      $region72: #{fc_based_gcn_forward.1} parent=11 // pred_fallthru
        _
      // Predicated region
      $region73: #{fc_based_gcn_forward.1} parent=11 // pred_check
        %p471 = pneg %p385
      $region74: #{fc_based_gcn_forward.1} parent=11 // pred_check_branch
        %473 = sbr.rel (%p471) target = $region76
      $region75: #{fc_based_gcn_forward.1} parent=11 // pred_region
        _
      $region76: #{fc_based_gcn_forward.1} parent=11 // pred_fallthru
        _
    $region12: #{fc_based_gcn_forward.1} parent=5 // pred_fallthru
      _
    %p474 = scmp.lt.s32.totalorder %s23, 2
    // Predicated region
    $region77: #{fc_based_gcn_forward.1} parent=5 // pred_check
      %p475 = pneg %p474
    $region78: #{fc_based_gcn_forward.1} parent=5 // pred_check_branch
      %477 = sbr.rel (%p475) target = $region80
    $region79: #{fc_based_gcn_forward.1} parent=5 // pred_region
      // Predicated region
      $region81: #{fc_based_gcn_forward.1} parent=79 // pred_check
        %p478 = pneg %p43
      $region82: #{fc_based_gcn_forward.1} parent=79 // pred_check_branch
        %480 = sbr.rel (%p478) target = $region84
      $region83: #{fc_based_gcn_forward.1} parent=79 // pred_region
        %p481 = scmp.lt.s32.totalorder %s23, 1
        %s482 = scalar_select %p481, %s23, 1
        %s483 = smul.addr %s482, 16
        %s484 = smul.addr %s483, 4
        %s485 = scalar_lea.vmem %s0, %s484
      $region84: #{fc_based_gcn_forward.1} parent=79 // pred_fallthru
        _
    $region80: #{fc_based_gcn_forward.1} parent=5 // pred_fallthru
      _
    %p486 = scmp.le.s32.totalorder 1, %s23
    %p487 = scmp.lt.s32.totalorder %s23, 3
    %p488 = pnand %p486, %p487
    %p489 = pneg %p488
    // Predicated region
    $region85: #{fc_based_gcn_forward.1} parent=5 // pred_check
      _
    $region86: #{fc_based_gcn_forward.1} parent=5 // pred_check_branch
      %491 = sbr.rel (%p488) target = $region88
    $region87: #{fc_based_gcn_forward.1} parent=5 // pred_region
      %s492 = ssub.s32 %s23, 1
      %p493 = scmp.lt.s32.totalorder %s28, 1
      %s494 = scalar_select %p493, %s28, 1
      %s495 = smul.addr %s494, 16
      %s496 = smul.addr %s495, 4
      %s497 = scalar_lea.vmem %s0, %s496
      %p498 = pneg %p49
      %p499 = pneg %p46
      %p500 = pneg %p70
      %p501 = pneg %p67
      %p502 = pneg %p91
      %p503 = pneg %p88
      %p504 = pneg %p112
      %p505 = pneg %p109
      %p506 = pneg %p133
      %p507 = pneg %p130
      %p508 = pneg %p154
      %p509 = pneg %p151
      %p510 = pneg %p175
      %p511 = pneg %p172
      %p512 = pneg %p196
      %p513 = pneg %p193
      %p514 = pneg %p217
      %p515 = pneg %p214
      %p516 = pneg %p238
      %p517 = pneg %p235
      %p518 = pneg %p259
      %p519 = pneg %p256
      %p520 = pneg %p280
      %p521 = pneg %p277
      %p522 = pneg %p301
      %p523 = pneg %p298
      %p524 = pneg %p322
      %p525 = pneg %p319
      %p526 = pneg %p343
      %p527 = pneg %p340
      %p528 = pneg %p364
      %p529 = pneg %p361
      %p530 = pneg %p385
      %p531 = pneg %p382
      %p532 = pneg %p411
      %p533 = pneg %p408
      %p534 = scmp.lt.s32.totalorder %s28, 1
      %s535 = scalar_select %p534, %s28, 1
      %s536 = smul.addr %s535, 8
      %s537 = scalar_lea.vmem %s17, %s536
      %p538 = scmp.lt.s32.totalorder %s28, 1
      %s539 = scalar_select %p538, %s28, 1
      %s540 = smul.addr %s539, 16
      %s541 = smul.addr %s540, 4
      %s542 = scalar_lea.vmem %s0, %s541
      %p543 = scmp.lt.s32.totalorder %s28, 1
      %s544 = scalar_select %p543, %s28, 1
      %s545 = smul.addr %s544, 8
      %s546 = scalar_lea.vmem %s17, %s545
      %v548 = vld [vmem:[%s542] sm:$0xf]
      %v549 = vld [vmem:[%s542 + $0x4] sm:$0xf]
      %v550 = vld [vmem:[%s542 + $0x8] sm:$0xf]
      %v551 = vld [vmem:[%s542 + $0xc] sm:$0xf]
      %v552 = vld [vmem:[%s542 + $0x10] sm:$0xf]
      %v553 = vld [vmem:[%s542 + $0x14] sm:$0xf]
      %v554 = vld [vmem:[%s542 + $0x18] sm:$0xf]
      %v555 = vld [vmem:[%s542 + $0x1c] sm:$0xf]
      %v556 = vld [vmem:[%s542 + $0x20] sm:$0xf]
      %v557 = vld [vmem:[%s542 + $0x24] sm:$0xf]
      %v558 = vld [vmem:[%s542 + $0x28] sm:$0xf]
      %v559 = vld [vmem:[%s542 + $0x2c] sm:$0xf]
      %v560 = vld [vmem:[%s542 + $0x30] sm:$0xf]
      %v561 = vld [vmem:[%s542 + $0x34] sm:$0xf]
      %v562 = vld [vmem:[%s542 + $0x38] sm:$0xf]
      %v563 = vld [vmem:[%s542 + $0x3c] sm:$0xf]
      %v564 = vld [vmem:[%s2] sm:$0xf]
      %v565 = vld [vmem:[%s2 + $0x4] sm:$0xf]
      %v566 = vld [vmem:[%s1] sm:$0xf]
      %v567 = vld [vmem:[%s1 + $0x4] sm:$0xf]
      %v570 = vunpack.c.l.b16 %v566
      %v571 = vunpack.c.l.b16 %v567
      %v572 = vpack.c.b16 %v571, %v570
      %v575 = vunpack.c.l.b16 %v548
      %v576 = vunpack.c.l.b16 %v549
      %v577 = vpack.c.b16 %v576, %v575
      %vm579 = vcmask 130048
      %v581 = vsel %vm579, %v572, 0
      %583 = vmatpush.bf16.msra.mxu0 0
      %584 = vmatpush.bf16.msra.mxu0 0
      %585 = vmatpush.bf16.msra.mxu0 0
      %586 = vmatpush.bf16.msra.mxu0 0
      %587 = vmatpush.bf16.msra.mxu0 0
      %588 = vmatpush.bf16.msra.mxu0 0
      %589 = vmatpush.bf16.msra.mxu0 0
      %590 = vmatpush.bf16.msra.mxu0 %v577
      %591 = vmatmul.bf16.gmra.mxu0 %v581
      %v592 = vpop.f32.mrf.mxu0
      %v593 = vadd.f32 0.0, %v592
      %v594 = vpop.f32.mrf.mxu0
      %v595 = vadd.f32 0.0, %v594
      %596 = vdwg.mxu0
      %v599 = vunpack.c.l.b16 %v550
      %v600 = vunpack.c.l.b16 %v551
      %v601 = vpack.c.b16 %v600, %v599
      %603 = vmatpush.bf16.msra.mxu0 0
      %604 = vmatpush.bf16.msra.mxu0 0
      %605 = vmatpush.bf16.msra.mxu0 0
      %606 = vmatpush.bf16.msra.mxu0 0
      %607 = vmatpush.bf16.msra.mxu0 0
      %608 = vmatpush.bf16.msra.mxu0 0
      %609 = vmatpush.bf16.msra.mxu0 0
      %610 = vmatpush.bf16.msra.mxu0 %v601
      %611 = vmatmul.bf16.gmra.mxu0 %v581
      %v612 = vpop.f32.mrf.mxu0
      %v613 = vadd.f32 0.0, %v612
      %v614 = vpop.f32.mrf.mxu0
      %v615 = vadd.f32 0.0, %v614
      %616 = vdwg.mxu0
      %v619 = vunpack.c.l.b16 %v552
      %v620 = vunpack.c.l.b16 %v553
      %v621 = vpack.c.b16 %v620, %v619
      %623 = vmatpush.bf16.msra.mxu0 0
      %624 = vmatpush.bf16.msra.mxu0 0
      %625 = vmatpush.bf16.msra.mxu0 0
      %626 = vmatpush.bf16.msra.mxu0 0
      %627 = vmatpush.bf16.msra.mxu0 0
      %628 = vmatpush.bf16.msra.mxu0 0
      %629 = vmatpush.bf16.msra.mxu0 0
      %630 = vmatpush.bf16.msra.mxu0 %v621
      %631 = vmatmul.bf16.gmra.mxu0 %v581
      %v632 = vpop.f32.mrf.mxu0
      %v633 = vadd.f32 0.0, %v632
      %v634 = vpop.f32.mrf.mxu0
      %v635 = vadd.f32 0.0, %v634
      %636 = vdwg.mxu0
      %v639 = vunpack.c.l.b16 %v554
      %v640 = vunpack.c.l.b16 %v555
      %v641 = vpack.c.b16 %v640, %v639
      %643 = vmatpush.bf16.msra.mxu0 0
      %644 = vmatpush.bf16.msra.mxu0 0
      %645 = vmatpush.bf16.msra.mxu0 0
      %646 = vmatpush.bf16.msra.mxu0 0
      %647 = vmatpush.bf16.msra.mxu0 0
      %648 = vmatpush.bf16.msra.mxu0 0
      %649 = vmatpush.bf16.msra.mxu0 0
      %650 = vmatpush.bf16.msra.mxu0 %v641
      %651 = vmatmul.bf16.gmra.mxu0 %v581
      %v652 = vpop.f32.mrf.mxu0
      %v653 = vadd.f32 0.0, %v652
      %v654 = vpop.f32.mrf.mxu0
      %v655 = vadd.f32 0.0, %v654
      %656 = vdwg.mxu0
      %v659 = vunpack.c.l.b16 %v556
      %v660 = vunpack.c.l.b16 %v557
      %v661 = vpack.c.b16 %v660, %v659
      %663 = vmatpush.bf16.msra.mxu0 0
      %664 = vmatpush.bf16.msra.mxu0 0
      %665 = vmatpush.bf16.msra.mxu0 0
      %666 = vmatpush.bf16.msra.mxu0 0
      %667 = vmatpush.bf16.msra.mxu0 0
      %668 = vmatpush.bf16.msra.mxu0 0
      %669 = vmatpush.bf16.msra.mxu0 0
      %670 = vmatpush.bf16.msra.mxu0 %v661
      %671 = vmatmul.bf16.gmra.mxu0 %v581
      %v672 = vpop.f32.mrf.mxu0
      %v673 = vadd.f32 0.0, %v672
      %v674 = vpop.f32.mrf.mxu0
      %v675 = vadd.f32 0.0, %v674
      %676 = vdwg.mxu0
      %v679 = vunpack.c.l.b16 %v558
      %v680 = vunpack.c.l.b16 %v559
      %v681 = vpack.c.b16 %v680, %v679
      %683 = vmatpush.bf16.msra.mxu0 0
      %684 = vmatpush.bf16.msra.mxu0 0
      %685 = vmatpush.bf16.msra.mxu0 0
      %686 = vmatpush.bf16.msra.mxu0 0
      %687 = vmatpush.bf16.msra.mxu0 0
      %688 = vmatpush.bf16.msra.mxu0 0
      %689 = vmatpush.bf16.msra.mxu0 0
      %690 = vmatpush.bf16.msra.mxu0 %v681
      %691 = vmatmul.bf16.gmra.mxu0 %v581
      %v692 = vpop.f32.mrf.mxu0
      %v693 = vadd.f32 0.0, %v692
      %v694 = vpop.f32.mrf.mxu0
      %v695 = vadd.f32 0.0, %v694
      %696 = vdwg.mxu0
      %v699 = vunpack.c.l.b16 %v560
      %v700 = vunpack.c.l.b16 %v561
      %v701 = vpack.c.b16 %v700, %v699
      %703 = vmatpush.bf16.msra.mxu0 0
      %704 = vmatpush.bf16.msra.mxu0 0
      %705 = vmatpush.bf16.msra.mxu0 0
      %706 = vmatpush.bf16.msra.mxu0 0
      %707 = vmatpush.bf16.msra.mxu0 0
      %708 = vmatpush.bf16.msra.mxu0 0
      %709 = vmatpush.bf16.msra.mxu0 0
      %710 = vmatpush.bf16.msra.mxu0 %v701
      %711 = vmatmul.bf16.gmra.mxu0 %v581
      %v712 = vpop.f32.mrf.mxu0
      %v713 = vadd.f32 0.0, %v712
      %v714 = vpop.f32.mrf.mxu0
      %v715 = vadd.f32 0.0, %v714
      %716 = vdwg.mxu0
      %v719 = vunpack.c.l.b16 %v562
      %v720 = vunpack.c.l.b16 %v563
      %v721 = vpack.c.b16 %v720, %v719
      %723 = vmatpush.bf16.msra.mxu0 0
      %724 = vmatpush.bf16.msra.mxu0 0
      %725 = vmatpush.bf16.msra.mxu0 0
      %726 = vmatpush.bf16.msra.mxu0 0
      %727 = vmatpush.bf16.msra.mxu0 0
      %728 = vmatpush.bf16.msra.mxu0 0
      %729 = vmatpush.bf16.msra.mxu0 0
      %730 = vmatpush.bf16.msra.mxu0 %v721
      %731 = vmatmul.bf16.gmra.mxu0 %v581
      %v732 = vpop.f32.mrf.mxu0
      %v733 = vadd.f32 0.0, %v732
      %v734 = vpop.f32.mrf.mxu0
      %v735 = vadd.f32 0.0, %v734
      %736 = vdwg.mxu0
      %v737 = vpack.c.bf16 %v595, %v593
      %v738 = vpack.c.bf16 %v615, %v613
      %v739 = vpack.c.bf16 %v635, %v633
      %v740 = vpack.c.bf16 %v655, %v653
      %v741 = vpack.c.bf16 %v675, %v673
      %v742 = vpack.c.bf16 %v695, %v693
      %v743 = vpack.c.bf16 %v715, %v713
      %v744 = vpack.c.bf16 %v735, %v733
      %v745 = vld [vmem:[%s3] sm:$0xf]
      %v746 = vld [vmem:[%s3 + $0x4] sm:$0xf]
      %v749 = vunpack.c.l.b16 %v745
      %v750 = vunpack.c.l.b16 %v746
      %v751 = vpack.c.b16 %v750, %v749
      %v754 = vsel %vm579, %v737, 0
      %v757 = vsel %vm579, %v738, 0
      %v760 = vsel %vm579, %v739, 0
      %v763 = vsel %vm579, %v740, 0
      %v766 = vsel %vm579, %v741, 0
      %v769 = vsel %vm579, %v742, 0
      %v772 = vsel %vm579, %v743, 0
      %v775 = vsel %vm579, %v744, 0
      %777 = vmatpush.bf16.msra.mxu0 0
      %778 = vmatpush.bf16.msra.mxu0 0
      %779 = vmatpush.bf16.msra.mxu0 0
      %780 = vmatpush.bf16.msra.mxu0 0
      %781 = vmatpush.bf16.msra.mxu0 0
      %782 = vmatpush.bf16.msra.mxu0 0
      %783 = vmatpush.bf16.msra.mxu0 0
      %784 = vmatpush.bf16.msra.mxu0 %v751
      %785 = vmatmul.bf16.gmra.mxu0 %v754
      %v786 = vpop.f32.mrf.mxu0
      %v787 = vadd.f32 0.0, %v786
      %v788 = vpop.f32.mrf.mxu0
      %v789 = vadd.f32 0.0, %v788
      %790 = vmatmul.bf16.gmra.mxu0 %v757
      %v791 = vpop.f32.mrf.mxu0
      %v792 = vadd.f32 0.0, %v791
      %v793 = vpop.f32.mrf.mxu0
      %v794 = vadd.f32 0.0, %v793
      %795 = vmatmul.bf16.gmra.mxu0 %v760
      %v796 = vpop.f32.mrf.mxu0
      %v797 = vadd.f32 0.0, %v796
      %v798 = vpop.f32.mrf.mxu0
      %v799 = vadd.f32 0.0, %v798
      %800 = vmatmul.bf16.gmra.mxu0 %v763
      %v801 = vpop.f32.mrf.mxu0
      %v802 = vadd.f32 0.0, %v801
      %v803 = vpop.f32.mrf.mxu0
      %v804 = vadd.f32 0.0, %v803
      %805 = vmatmul.bf16.gmra.mxu0 %v766
      %v806 = vpop.f32.mrf.mxu0
      %v807 = vadd.f32 0.0, %v806
      %v808 = vpop.f32.mrf.mxu0
      %v809 = vadd.f32 0.0, %v808
      %810 = vmatmul.bf16.gmra.mxu0 %v769
      %v811 = vpop.f32.mrf.mxu0
      %v812 = vadd.f32 0.0, %v811
      %v813 = vpop.f32.mrf.mxu0
      %v814 = vadd.f32 0.0, %v813
      %815 = vmatmul.bf16.gmra.mxu0 %v772
      %v816 = vpop.f32.mrf.mxu0
      %v817 = vadd.f32 0.0, %v816
      %v818 = vpop.f32.mrf.mxu0
      %v819 = vadd.f32 0.0, %v818
      %820 = vmatmul.bf16.gmra.mxu0 %v775
      %v821 = vpop.f32.mrf.mxu0
      %v822 = vadd.f32 0.0, %v821
      %v823 = vpop.f32.mrf.mxu0
      %v824 = vadd.f32 0.0, %v823
      %825 = vdwg.mxu0
      %v828 = vunpack.c.l.b16 %v564
      %v829 = vunpack.c.l.b16 %v565
      %v830 = vpack.c.b16 %v829, %v828
      %v833 = vsel %vm579, %v577, 0
      %v836 = vsel %vm579, %v601, 0
      %v839 = vsel %vm579, %v621, 0
      %v842 = vsel %vm579, %v641, 0
      %v845 = vsel %vm579, %v661, 0
      %v848 = vsel %vm579, %v681, 0
      %v851 = vsel %vm579, %v701, 0
      %v854 = vsel %vm579, %v721, 0
      %856 = vmatpush.bf16.msra.mxu0 0
      %857 = vmatpush.bf16.msra.mxu0 0
      %858 = vmatpush.bf16.msra.mxu0 0
      %859 = vmatpush.bf16.msra.mxu0 0
      %860 = vmatpush.bf16.msra.mxu0 0
      %861 = vmatpush.bf16.msra.mxu0 0
      %862 = vmatpush.bf16.msra.mxu0 0
      %863 = vmatpush.bf16.msra.mxu0 %v830
      %864 = vmatmul.bf16.gmra.mxu0 %v833
      %v865 = vpop.f32.mrf.mxu0
      %v866 = vadd.f32 %v787, %v865
      %v867 = vpop.f32.mrf.mxu0
      %v868 = vadd.f32 %v789, %v867
      %869 = vmatmul.bf16.gmra.mxu0 %v836
      %v870 = vpop.f32.mrf.mxu0
      %v871 = vadd.f32 %v792, %v870
      %v872 = vpop.f32.mrf.mxu0
      %v873 = vadd.f32 %v794, %v872
      %874 = vmatmul.bf16.gmra.mxu0 %v839
      %v875 = vpop.f32.mrf.mxu0
      %v876 = vadd.f32 %v797, %v875
      %v877 = vpop.f32.mrf.mxu0
      %v878 = vadd.f32 %v799, %v877
      %879 = vmatmul.bf16.gmra.mxu0 %v842
      %v880 = vpop.f32.mrf.mxu0
      %v881 = vadd.f32 %v802, %v880
      %v882 = vpop.f32.mrf.mxu0
      %v883 = vadd.f32 %v804, %v882
      %884 = vmatmul.bf16.gmra.mxu0 %v845
      %v885 = vpop.f32.mrf.mxu0
      %v886 = vadd.f32 %v807, %v885
      %v887 = vpop.f32.mrf.mxu0
      %v888 = vadd.f32 %v809, %v887
      %889 = vmatmul.bf16.gmra.mxu0 %v848
      %v890 = vpop.f32.mrf.mxu0
      %v891 = vadd.f32 %v812, %v890
      %v892 = vpop.f32.mrf.mxu0
      %v893 = vadd.f32 %v814, %v892
      %894 = vmatmul.bf16.gmra.mxu0 %v851
      %v895 = vpop.f32.mrf.mxu0
      %v896 = vadd.f32 %v817, %v895
      %v897 = vpop.f32.mrf.mxu0
      %v898 = vadd.f32 %v819, %v897
      %899 = vmatmul.bf16.gmra.mxu0 %v854
      %v900 = vpop.f32.mrf.mxu0
      %v901 = vadd.f32 %v822, %v900
      %v902 = vpop.f32.mrf.mxu0
      %v903 = vadd.f32 %v824, %v902
      %904 = vdwg.mxu0
      %v905 = vld [vmem:[%s4] sm:$0x1]
      %v907 = vperm.slane %v905, 0
      %v909 = vadd.f32 %v866, %v907
      %v910 = vadd.f32 %v868, %v907
      %v911 = vadd.f32 %v871, %v907
      %v912 = vadd.f32 %v873, %v907
      %v913 = vadd.f32 %v876, %v907
      %v914 = vadd.f32 %v878, %v907
      %v915 = vadd.f32 %v881, %v907
      %v916 = vadd.f32 %v883, %v907
      %v917 = vadd.f32 %v886, %v907
      %v918 = vadd.f32 %v888, %v907
      %v919 = vadd.f32 %v891, %v907
      %v920 = vadd.f32 %v893, %v907
      %v921 = vadd.f32 %v896, %v907
      %v922 = vadd.f32 %v898, %v907
      %v923 = vadd.f32 %v901, %v907
      %v924 = vadd.f32 %v903, %v907
      %v925 = vmax.f32 %v909, 0.0
      %v926 = vmax.f32 %v910, 0.0
      %v927 = vmax.f32 %v911, 0.0
      %v928 = vmax.f32 %v912, 0.0
      %v929 = vmax.f32 %v913, 0.0
      %v930 = vmax.f32 %v914, 0.0
      %v931 = vmax.f32 %v915, 0.0
      %v932 = vmax.f32 %v916, 0.0
      %v933 = vmax.f32 %v917, 0.0
      %v934 = vmax.f32 %v918, 0.0
      %v935 = vmax.f32 %v919, 0.0
      %v936 = vmax.f32 %v920, 0.0
      %v937 = vmax.f32 %v921, 0.0
      %v938 = vmax.f32 %v922, 0.0
      %v939 = vmax.f32 %v923, 0.0
      %v940 = vmax.f32 %v924, 0.0
      %v941 = vpack.c.bf16 %v925, %v925
      %v942 = vpack.c.bf16 %v926, %v926
      %v943 = vpack.c.bf16 %v927, %v927
      %v944 = vpack.c.bf16 %v928, %v928
      %v945 = vpack.c.bf16 %v929, %v929
      %v946 = vpack.c.bf16 %v930, %v930
      %v947 = vpack.c.bf16 %v931, %v931
      %v948 = vpack.c.bf16 %v932, %v932
      %v949 = vpack.c.bf16 %v933, %v933
      %v950 = vpack.c.bf16 %v934, %v934
      %v951 = vpack.c.bf16 %v935, %v935
      %v952 = vpack.c.bf16 %v936, %v936
      %v953 = vpack.c.bf16 %v937, %v937
      %v954 = vpack.c.bf16 %v938, %v938
      %v955 = vpack.c.bf16 %v939, %v939
      %v956 = vpack.c.bf16 %v940, %v940
      %vm957 = vcmask 257024
      %958 = vst.msk [vmem:[#allocation2] sm:$0xf] %vm957, %v941
      %959 = vst.msk [vmem:[#allocation2 + $0x4] sm:$0xf] %vm957, %v942
      %960 = vst.msk [vmem:[#allocation2 + $0x8] sm:$0xf] %vm957, %v943
      %961 = vst.msk [vmem:[#allocation2 + $0xc] sm:$0xf] %vm957, %v944
      %962 = vst.msk [vmem:[#allocation2 + $0x10] sm:$0xf] %vm957, %v945
      %963 = vst.msk [vmem:[#allocation2 + $0x14] sm:$0xf] %vm957, %v946
      %964 = vst.msk [vmem:[#allocation2 + $0x18] sm:$0xf] %vm957, %v947
      %965 = vst.msk [vmem:[#allocation2 + $0x1c] sm:$0xf] %vm957, %v948
      %966 = vst.msk [vmem:[#allocation2 + $0x20] sm:$0xf] %vm957, %v949
      %967 = vst.msk [vmem:[#allocation2 + $0x24] sm:$0xf] %vm957, %v950
      %968 = vst.msk [vmem:[#allocation2 + $0x28] sm:$0xf] %vm957, %v951
      %969 = vst.msk [vmem:[#allocation2 + $0x2c] sm:$0xf] %vm957, %v952
      %970 = vst.msk [vmem:[#allocation2 + $0x30] sm:$0xf] %vm957, %v953
      %971 = vst.msk [vmem:[#allocation2 + $0x34] sm:$0xf] %vm957, %v954
      %972 = vst.msk [vmem:[#allocation2 + $0x38] sm:$0xf] %vm957, %v955
      %973 = vst.msk [vmem:[#allocation2 + $0x3c] sm:$0xf] %vm957, %v956
      %v974 = vld [vmem:[%s5] sm:$0xf]
      %v975 = vld [vmem:[%s5 + $0x4] sm:$0xf]
      %v976 = vld [vmem:[%s5 + $0x8] sm:$0xf]
      %v977 = vld [vmem:[%s5 + $0xc] sm:$0xf]
      %v978 = vld [vmem:[%s1] sm:$0xf]
      %v979 = vld [vmem:[%s1 + $0x4] sm:$0xf]
      %v982 = vunpack.c.l.b16 %v978
      %v983 = vunpack.c.l.b16 %v979
      %v984 = vpack.c.b16 %v983, %v982
      %v987 = vunpack.c.l.b16 %v941
      %v988 = vunpack.c.l.b16 %v942
      %v989 = vpack.c.b16 %v988, %v987
      %v992 = vsel %vm579, %v984, 0
      %994 = vmatpush.bf16.msra.mxu0 0
      %995 = vmatpush.bf16.msra.mxu0 0
      %996 = vmatpush.bf16.msra.mxu0 0
      %997 = vmatpush.bf16.msra.mxu0 0
      %998 = vmatpush.bf16.msra.mxu0 0
      %999 = vmatpush.bf16.msra.mxu0 0
      %1000 = vmatpush.bf16.msra.mxu0 0
      %1001 = vmatpush.bf16.msra.mxu0 %v989
      %1002 = vmatmul.bf16.gmra.mxu0 %v992
      %v1003 = vpop.f32.mrf.mxu0
      %v1004 = vadd.f32 0.0, %v1003
      %v1005 = vpop.f32.mrf.mxu0
      %v1006 = vadd.f32 0.0, %v1005
      %1007 = vdwg.mxu0
      %v1010 = vunpack.c.l.b16 %v943
      %v1011 = vunpack.c.l.b16 %v944
      %v1012 = vpack.c.b16 %v1011, %v1010
      %1014 = vmatpush.bf16.msra.mxu0 0
      %1015 = vmatpush.bf16.msra.mxu0 0
      %1016 = vmatpush.bf16.msra.mxu0 0
      %1017 = vmatpush.bf16.msra.mxu0 0
      %1018 = vmatpush.bf16.msra.mxu0 0
      %1019 = vmatpush.bf16.msra.mxu0 0
      %1020 = vmatpush.bf16.msra.mxu0 0
      %1021 = vmatpush.bf16.msra.mxu0 %v1012
      %1022 = vmatmul.bf16.gmra.mxu0 %v992
      %v1023 = vpop.f32.mrf.mxu0
      %v1024 = vadd.f32 0.0, %v1023
      %v1025 = vpop.f32.mrf.mxu0
      %v1026 = vadd.f32 0.0, %v1025
      %1027 = vdwg.mxu0
      %v1030 = vunpack.c.l.b16 %v945
      %v1031 = vunpack.c.l.b16 %v946
      %v1032 = vpack.c.b16 %v1031, %v1030
      %1034 = vmatpush.bf16.msra.mxu0 0
      %1035 = vmatpush.bf16.msra.mxu0 0
      %1036 = vmatpush.bf16.msra.mxu0 0
      %1037 = vmatpush.bf16.msra.mxu0 0
      %1038 = vmatpush.bf16.msra.mxu0 0
      %1039 = vmatpush.bf16.msra.mxu0 0
      %1040 = vmatpush.bf16.msra.mxu0 0
      %1041 = vmatpush.bf16.msra.mxu0 %v1032
      %1042 = vmatmul.bf16.gmra.mxu0 %v992
      %v1043 = vpop.f32.mrf.mxu0
      %v1044 = vadd.f32 0.0, %v1043
      %v1045 = vpop.f32.mrf.mxu0
      %v1046 = vadd.f32 0.0, %v1045
      %1047 = vdwg.mxu0
      %v1050 = vunpack.c.l.b16 %v947
      %v1051 = vunpack.c.l.b16 %v948
      %v1052 = vpack.c.b16 %v1051, %v1050
      %1054 = vmatpush.bf16.msra.mxu0 0
      %1055 = vmatpush.bf16.msra.mxu0 0
      %1056 = vmatpush.bf16.msra.mxu0 0
      %1057 = vmatpush.bf16.msra.mxu0 0
      %1058 = vmatpush.bf16.msra.mxu0 0
      %1059 = vmatpush.bf16.msra.mxu0 0
      %1060 = vmatpush.bf16.msra.mxu0 0
      %1061 = vmatpush.bf16.msra.mxu0 %v1052
      %1062 = vmatmul.bf16.gmra.mxu0 %v992
      %v1063 = vpop.f32.mrf.mxu0
      %v1064 = vadd.f32 0.0, %v1063
      %v1065 = vpop.f32.mrf.mxu0
      %v1066 = vadd.f32 0.0, %v1065
      %1067 = vdwg.mxu0
      %v1070 = vunpack.c.l.b16 %v949
      %v1071 = vunpack.c.l.b16 %v950
      %v1072 = vpack.c.b16 %v1071, %v1070
      %1074 = vmatpush.bf16.msra.mxu0 0
      %1075 = vmatpush.bf16.msra.mxu0 0
      %1076 = vmatpush.bf16.msra.mxu0 0
      %1077 = vmatpush.bf16.msra.mxu0 0
      %1078 = vmatpush.bf16.msra.mxu0 0
      %1079 = vmatpush.bf16.msra.mxu0 0
      %1080 = vmatpush.bf16.msra.mxu0 0
      %1081 = vmatpush.bf16.msra.mxu0 %v1072
      %1082 = vmatmul.bf16.gmra.mxu0 %v992
      %v1083 = vpop.f32.mrf.mxu0
      %v1084 = vadd.f32 0.0, %v1083
      %v1085 = vpop.f32.mrf.mxu0
      %v1086 = vadd.f32 0.0, %v1085
      %1087 = vdwg.mxu0
      %v1090 = vunpack.c.l.b16 %v951
      %v1091 = vunpack.c.l.b16 %v952
      %v1092 = vpack.c.b16 %v1091, %v1090
      %1094 = vmatpush.bf16.msra.mxu0 0
      %1095 = vmatpush.bf16.msra.mxu0 0
      %1096 = vmatpush.bf16.msra.mxu0 0
      %1097 = vmatpush.bf16.msra.mxu0 0
      %1098 = vmatpush.bf16.msra.mxu0 0
      %1099 = vmatpush.bf16.msra.mxu0 0
      %1100 = vmatpush.bf16.msra.mxu0 0
      %1101 = vmatpush.bf16.msra.mxu0 %v1092
      %1102 = vmatmul.bf16.gmra.mxu0 %v992
      %v1103 = vpop.f32.mrf.mxu0
      %v1104 = vadd.f32 0.0, %v1103
      %v1105 = vpop.f32.mrf.mxu0
      %v1106 = vadd.f32 0.0, %v1105
      %1107 = vdwg.mxu0
      %v1110 = vunpack.c.l.b16 %v953
      %v1111 = vunpack.c.l.b16 %v954
      %v1112 = vpack.c.b16 %v1111, %v1110
      %1114 = vmatpush.bf16.msra.mxu0 0
      %1115 = vmatpush.bf16.msra.mxu0 0
      %1116 = vmatpush.bf16.msra.mxu0 0
      %1117 = vmatpush.bf16.msra.mxu0 0
      %1118 = vmatpush.bf16.msra.mxu0 0
      %1119 = vmatpush.bf16.msra.mxu0 0
      %1120 = vmatpush.bf16.msra.mxu0 0
      %1121 = vmatpush.bf16.msra.mxu0 %v1112
      %1122 = vmatmul.bf16.gmra.mxu0 %v992
      %v1123 = vpop.f32.mrf.mxu0
      %v1124 = vadd.f32 0.0, %v1123
      %v1125 = vpop.f32.mrf.mxu0
      %v1126 = vadd.f32 0.0, %v1125
      %1127 = vdwg.mxu0
      %v1130 = vunpack.c.l.b16 %v955
      %v1131 = vunpack.c.l.b16 %v956
      %v1132 = vpack.c.b16 %v1131, %v1130
      %1134 = vmatpush.bf16.msra.mxu0 0
      %1135 = vmatpush.bf16.msra.mxu0 0
      %1136 = vmatpush.bf16.msra.mxu0 0
      %1137 = vmatpush.bf16.msra.mxu0 0
      %1138 = vmatpush.bf16.msra.mxu0 0
      %1139 = vmatpush.bf16.msra.mxu0 0
      %1140 = vmatpush.bf16.msra.mxu0 0
      %1141 = vmatpush.bf16.msra.mxu0 %v1132
      %1142 = vmatmul.bf16.gmra.mxu0 %v992
      %v1143 = vpop.f32.mrf.mxu0
      %v1144 = vadd.f32 0.0, %v1143
      %v1145 = vpop.f32.mrf.mxu0
      %v1146 = vadd.f32 0.0, %v1145
      %1147 = vdwg.mxu0
      %v1148 = vpack.c.bf16 %v1006, %v1004
      %v1149 = vpack.c.bf16 %v1026, %v1024
      %v1150 = vpack.c.bf16 %v1046, %v1044
      %v1151 = vpack.c.bf16 %v1066, %v1064
      %v1152 = vpack.c.bf16 %v1086, %v1084
      %v1153 = vpack.c.bf16 %v1106, %v1104
      %v1154 = vpack.c.bf16 %v1126, %v1124
      %v1155 = vpack.c.bf16 %v1146, %v1144
      %v1156 = vld [vmem:[%s6] sm:$0xf]
      %v1157 = vld [vmem:[%s6 + $0x4] sm:$0xf]
      %v1158 = vld [vmem:[%s6 + $0x8] sm:$0xf]
      %v1159 = vld [vmem:[%s6 + $0xc] sm:$0xf]
      %v1164 = vunpack.c.l.b16 %v1156
      %v1165 = vunpack.c.l.b16 %v1157
      %v1166 = vunpack.c.l.b16 %v1158
      %v1167 = vunpack.c.l.b16 %v1159
      %v1168 = vpack.c.b16 %v1165, %v1164
      %v1169 = vpack.c.b16 %v1167, %v1166
      %vm1172 = vcmask 261120
      %v1174 = vsel %vm1172, %v1148, 0
      %v1177 = vsel %vm1172, %v1149, 0
      %v1180 = vsel %vm1172, %v1150, 0
      %v1183 = vsel %vm1172, %v1151, 0
      %v1186 = vsel %vm1172, %v1152, 0
      %v1189 = vsel %vm1172, %v1153, 0
      %v1192 = vsel %vm1172, %v1154, 0
      %v1195 = vsel %vm1172, %v1155, 0
      %1197 = vmatpush.bf16.msra.mxu0 0
      %1198 = vmatpush.bf16.msra.mxu0 0
      %1199 = vmatpush.bf16.msra.mxu0 0
      %1200 = vmatpush.bf16.msra.mxu0 0
      %1201 = vmatpush.bf16.msra.mxu0 0
      %1202 = vmatpush.bf16.msra.mxu0 0
      %1203 = vmatpush.bf16.msra.mxu0 %v1169
      %1204 = vmatpush.bf16.msra.mxu0 %v1168
      %1205 = vmatmul.bf16.gmra.mxu0 %v1174
      %v1206 = vpop.f32.mrf.mxu0
      %v1207 = vadd.f32 0.0, %v1206
      %v1208 = vpop.f32.mrf.mxu0
      %v1209 = vadd.f32 0.0, %v1208
      %1210 = vmatmul.bf16.gmra.mxu0 %v1177
      %v1211 = vpop.f32.mrf.mxu0
      %v1212 = vadd.f32 0.0, %v1211
      %v1213 = vpop.f32.mrf.mxu0
      %v1214 = vadd.f32 0.0, %v1213
      %1215 = vmatmul.bf16.gmra.mxu0 %v1180
      %v1216 = vpop.f32.mrf.mxu0
      %v1217 = vadd.f32 0.0, %v1216
      %v1218 = vpop.f32.mrf.mxu0
      %v1219 = vadd.f32 0.0, %v1218
      %1220 = vmatmul.bf16.gmra.mxu0 %v1183
      %v1221 = vpop.f32.mrf.mxu0
      %v1222 = vadd.f32 0.0, %v1221
      %v1223 = vpop.f32.mrf.mxu0
      %v1224 = vadd.f32 0.0, %v1223
      %1225 = vmatmul.bf16.gmra.mxu0 %v1186
      %v1226 = vpop.f32.mrf.mxu0
      %v1227 = vadd.f32 0.0, %v1226
      %v1228 = vpop.f32.mrf.mxu0
      %v1229 = vadd.f32 0.0, %v1228
      %1230 = vmatmul.bf16.gmra.mxu0 %v1189
      %v1231 = vpop.f32.mrf.mxu0
      %v1232 = vadd.f32 0.0, %v1231
      %v1233 = vpop.f32.mrf.mxu0
      %v1234 = vadd.f32 0.0, %v1233
      %1235 = vmatmul.bf16.gmra.mxu0 %v1192
      %v1236 = vpop.f32.mrf.mxu0
      %v1237 = vadd.f32 0.0, %v1236
      %v1238 = vpop.f32.mrf.mxu0
      %v1239 = vadd.f32 0.0, %v1238
      %1240 = vmatmul.bf16.gmra.mxu0 %v1195
      %v1241 = vpop.f32.mrf.mxu0
      %v1242 = vadd.f32 0.0, %v1241
      %v1243 = vpop.f32.mrf.mxu0
      %v1244 = vadd.f32 0.0, %v1243
      %1245 = vdwg.mxu0
      %v1250 = vunpack.c.l.b16 %v974
      %v1251 = vunpack.c.l.b16 %v975
      %v1252 = vunpack.c.l.b16 %v976
      %v1253 = vunpack.c.l.b16 %v977
      %v1254 = vpack.c.b16 %v1251, %v1250
      %v1255 = vpack.c.b16 %v1253, %v1252
      %v1259 = vsel %vm1172, %v989, 0
      %v1262 = vsel %vm1172, %v1012, 0
      %v1265 = vsel %vm1172, %v1032, 0
      %v1268 = vsel %vm1172, %v1052, 0
      %v1271 = vsel %vm1172, %v1072, 0
      %v1274 = vsel %vm1172, %v1092, 0
      %v1277 = vsel %vm1172, %v1112, 0
      %v1280 = vsel %vm1172, %v1132, 0
      %1282 = vmatpush.bf16.msra.mxu0 0
      %1283 = vmatpush.bf16.msra.mxu0 0
      %1284 = vmatpush.bf16.msra.mxu0 0
      %1285 = vmatpush.bf16.msra.mxu0 0
      %1286 = vmatpush.bf16.msra.mxu0 0
      %1287 = vmatpush.bf16.msra.mxu0 0
      %1288 = vmatpush.bf16.msra.mxu0 %v1255
      %1289 = vmatpush.bf16.msra.mxu0 %v1254
      %1290 = vmatmul.bf16.gmra.mxu0 %v1259
      %v1291 = vpop.f32.mrf.mxu0
      %v1292 = vadd.f32 %v1207, %v1291
      %v1293 = vpop.f32.mrf.mxu0
      %v1294 = vadd.f32 %v1209, %v1293
      %1295 = vmatmul.bf16.gmra.mxu0 %v1262
      %v1296 = vpop.f32.mrf.mxu0
      %v1297 = vadd.f32 %v1212, %v1296
      %v1298 = vpop.f32.mrf.mxu0
      %v1299 = vadd.f32 %v1214, %v1298
      %1300 = vmatmul.bf16.gmra.mxu0 %v1265
      %v1301 = vpop.f32.mrf.mxu0
      %v1302 = vadd.f32 %v1217, %v1301
      %v1303 = vpop.f32.mrf.mxu0
      %v1304 = vadd.f32 %v1219, %v1303
      %1305 = vmatmul.bf16.gmra.mxu0 %v1268
      %v1306 = vpop.f32.mrf.mxu0
      %v1307 = vadd.f32 %v1222, %v1306
      %v1308 = vpop.f32.mrf.mxu0
      %v1309 = vadd.f32 %v1224, %v1308
      %1310 = vmatmul.bf16.gmra.mxu0 %v1271
      %v1311 = vpop.f32.mrf.mxu0
      %v1312 = vadd.f32 %v1227, %v1311
      %v1313 = vpop.f32.mrf.mxu0
      %v1314 = vadd.f32 %v1229, %v1313
      %1315 = vmatmul.bf16.gmra.mxu0 %v1274
      %v1316 = vpop.f32.mrf.mxu0
      %v1317 = vadd.f32 %v1232, %v1316
      %v1318 = vpop.f32.mrf.mxu0
      %v1319 = vadd.f32 %v1234, %v1318
      %1320 = vmatmul.bf16.gmra.mxu0 %v1277
      %v1321 = vpop.f32.mrf.mxu0
      %v1322 = vadd.f32 %v1237, %v1321
      %v1323 = vpop.f32.mrf.mxu0
      %v1324 = vadd.f32 %v1239, %v1323
      %1325 = vmatmul.bf16.gmra.mxu0 %v1280
      %v1326 = vpop.f32.mrf.mxu0
      %v1327 = vadd.f32 %v1242, %v1326
      %v1328 = vpop.f32.mrf.mxu0
      %v1329 = vadd.f32 %v1244, %v1328
      %1330 = vdwg.mxu0
      %v1331 = vld [vmem:[%s7] sm:$0x1]
      %v1333 = vperm.slane %v1331, 0
      %v1335 = vadd.f32 %v1292, %v1333
      %v1336 = vadd.f32 %v1294, %v1333
      %v1337 = vadd.f32 %v1297, %v1333
      %v1338 = vadd.f32 %v1299, %v1333
      %v1339 = vadd.f32 %v1302, %v1333
      %v1340 = vadd.f32 %v1304, %v1333
      %v1341 = vadd.f32 %v1307, %v1333
      %v1342 = vadd.f32 %v1309, %v1333
      %v1343 = vadd.f32 %v1312, %v1333
      %v1344 = vadd.f32 %v1314, %v1333
      %v1345 = vadd.f32 %v1317, %v1333
      %v1346 = vadd.f32 %v1319, %v1333
      %v1347 = vadd.f32 %v1322, %v1333
      %v1348 = vadd.f32 %v1324, %v1333
      %v1349 = vadd.f32 %v1327, %v1333
      %v1350 = vadd.f32 %v1329, %v1333
      %v1351 = vmax.f32 %v1335, 0.0
      %v1352 = vmax.f32 %v1336, 0.0
      %v1353 = vmax.f32 %v1337, 0.0
      %v1354 = vmax.f32 %v1338, 0.0
      %v1355 = vmax.f32 %v1339, 0.0
      %v1356 = vmax.f32 %v1340, 0.0
      %v1357 = vmax.f32 %v1341, 0.0
      %v1358 = vmax.f32 %v1342, 0.0
      %v1359 = vmax.f32 %v1343, 0.0
      %v1360 = vmax.f32 %v1344, 0.0
      %v1361 = vmax.f32 %v1345, 0.0
      %v1362 = vmax.f32 %v1346, 0.0
      %v1363 = vmax.f32 %v1347, 0.0
      %v1364 = vmax.f32 %v1348, 0.0
      %v1365 = vmax.f32 %v1349, 0.0
      %v1366 = vmax.f32 %v1350, 0.0
      %v1367 = vpack.c.bf16 %v1351, %v1351
      %v1368 = vpack.c.bf16 %v1352, %v1352
      %v1369 = vpack.c.bf16 %v1353, %v1353
      %v1370 = vpack.c.bf16 %v1354, %v1354
      %v1371 = vpack.c.bf16 %v1355, %v1355
      %v1372 = vpack.c.bf16 %v1356, %v1356
      %v1373 = vpack.c.bf16 %v1357, %v1357
      %v1374 = vpack.c.bf16 %v1358, %v1358
      %v1375 = vpack.c.bf16 %v1359, %v1359
      %v1376 = vpack.c.bf16 %v1360, %v1360
      %v1377 = vpack.c.bf16 %v1361, %v1361
      %v1378 = vpack.c.bf16 %v1362, %v1362
      %v1379 = vpack.c.bf16 %v1363, %v1363
      %v1380 = vpack.c.bf16 %v1364, %v1364
      %v1381 = vpack.c.bf16 %v1365, %v1365
      %v1382 = vpack.c.bf16 %v1366, %v1366
      %1399 = vrot.lane.b32.xlu0 %v1367, 32
      %v1400 = vpop.permute.xlu0 %1399
      %1401 = vrot.lane.b32.xlu0 %v1368, 32
      %v1402 = vpop.permute.xlu0 %1401
      %1403 = vrot.lane.b32.xlu0 %v1369, 32
      %v1404 = vpop.permute.xlu0 %1403
      %1405 = vrot.lane.b32.xlu0 %v1370, 32
      %v1406 = vpop.permute.xlu0 %1405
      %1407 = vrot.lane.b32.xlu0 %v1371, 32
      %v1408 = vpop.permute.xlu0 %1407
      %1409 = vrot.lane.b32.xlu0 %v1372, 32
      %v1410 = vpop.permute.xlu0 %1409
      %1411 = vrot.lane.b32.xlu0 %v1373, 32
      %v1412 = vpop.permute.xlu0 %1411
      %1413 = vrot.lane.b32.xlu0 %v1374, 32
      %v1414 = vpop.permute.xlu0 %1413
      %1415 = vrot.lane.b32.xlu0 %v1375, 32
      %v1416 = vpop.permute.xlu0 %1415
      %1417 = vrot.lane.b32.xlu0 %v1376, 32
      %v1418 = vpop.permute.xlu0 %1417
      %1419 = vrot.lane.b32.xlu0 %v1377, 32
      %v1420 = vpop.permute.xlu0 %1419
      %1421 = vrot.lane.b32.xlu0 %v1378, 32
      %v1422 = vpop.permute.xlu0 %1421
      %1423 = vrot.lane.b32.xlu0 %v1379, 32
      %v1424 = vpop.permute.xlu0 %1423
      %1425 = vrot.lane.b32.xlu0 %v1380, 32
      %v1426 = vpop.permute.xlu0 %1425
      %1427 = vrot.lane.b32.xlu0 %v1381, 32
      %v1428 = vpop.permute.xlu0 %1427
      %1429 = vrot.lane.b32.xlu0 %v1382, 32
      %v1430 = vpop.permute.xlu0 %1429
      %vm1447 = vcmask 519424
      %1448 = vst.msk [vmem:[#allocation2] sm:$0xf] %vm1447, %v1400
      %1449 = vst.msk [vmem:[#allocation2 + $0x4] sm:$0xf] %vm1447, %v1402
      %1450 = vst.msk [vmem:[#allocation2 + $0x8] sm:$0xf] %vm1447, %v1404
      %1451 = vst.msk [vmem:[#allocation2 + $0xc] sm:$0xf] %vm1447, %v1406
      %1452 = vst.msk [vmem:[#allocation2 + $0x10] sm:$0xf] %vm1447, %v1408
      %1453 = vst.msk [vmem:[#allocation2 + $0x14] sm:$0xf] %vm1447, %v1410
      %1454 = vst.msk [vmem:[#allocation2 + $0x18] sm:$0xf] %vm1447, %v1412
      %1455 = vst.msk [vmem:[#allocation2 + $0x1c] sm:$0xf] %vm1447, %v1414
      %1456 = vst.msk [vmem:[#allocation2 + $0x20] sm:$0xf] %vm1447, %v1416
      %1457 = vst.msk [vmem:[#allocation2 + $0x24] sm:$0xf] %vm1447, %v1418
      %1458 = vst.msk [vmem:[#allocation2 + $0x28] sm:$0xf] %vm1447, %v1420
      %1459 = vst.msk [vmem:[#allocation2 + $0x2c] sm:$0xf] %vm1447, %v1422
      %1460 = vst.msk [vmem:[#allocation2 + $0x30] sm:$0xf] %vm1447, %v1424
      %1461 = vst.msk [vmem:[#allocation2 + $0x34] sm:$0xf] %vm1447, %v1426
      %1462 = vst.msk [vmem:[#allocation2 + $0x38] sm:$0xf] %vm1447, %v1428
      %1463 = vst.msk [vmem:[#allocation2 + $0x3c] sm:$0xf] %vm1447, %v1430
      %v1464 = vld [vmem:[%s8] sm:$0xf]
      %v1465 = vld [vmem:[%s8 + $0x4] sm:$0xf]
      %v1466 = vld [vmem:[%s8 + $0x8] sm:$0xf]
      %v1467 = vld [vmem:[%s8 + $0xc] sm:$0xf]
      %v1468 = vld [vmem:[%s1] sm:$0xf]
      %v1469 = vld [vmem:[%s1 + $0x4] sm:$0xf]
      %v1472 = vunpack.c.l.b16 %v1468
      %v1473 = vunpack.c.l.b16 %v1469
      %v1474 = vpack.c.b16 %v1473, %v1472
      %v1475 = vunpack.c.l.b16 %v1367
      %v1476 = vunpack.c.l.b16 %v1368
      %v1477 = vpack.c.b16 %v1476, %v1475
      %v1480 = vsel %vm579, %v1474, 0
      %1482 = vmatpush.bf16.msra.mxu0 0
      %1483 = vmatpush.bf16.msra.mxu0 0
      %1484 = vmatpush.bf16.msra.mxu0 0
      %1485 = vmatpush.bf16.msra.mxu0 0
      %1486 = vmatpush.bf16.msra.mxu0 0
      %1487 = vmatpush.bf16.msra.mxu0 0
      %1488 = vmatpush.bf16.msra.mxu0 0
      %1489 = vmatpush.bf16.msra.mxu0 %v1477
      %1490 = vmatmul.bf16.gmra.mxu0 %v1480
      %v1491 = vpop.f32.mrf.mxu0
      %v1492 = vadd.f32 0.0, %v1491
      %v1493 = vpop.f32.mrf.mxu0
      %v1494 = vadd.f32 0.0, %v1493
      %1495 = vdwg.mxu0
      %v1496 = vunpack.c.l.b16 %v1369
      %v1497 = vunpack.c.l.b16 %v1370
      %v1498 = vpack.c.b16 %v1497, %v1496
      %1500 = vmatpush.bf16.msra.mxu0 0
      %1501 = vmatpush.bf16.msra.mxu0 0
      %1502 = vmatpush.bf16.msra.mxu0 0
      %1503 = vmatpush.bf16.msra.mxu0 0
      %1504 = vmatpush.bf16.msra.mxu0 0
      %1505 = vmatpush.bf16.msra.mxu0 0
      %1506 = vmatpush.bf16.msra.mxu0 0
      %1507 = vmatpush.bf16.msra.mxu0 %v1498
      %1508 = vmatmul.bf16.gmra.mxu0 %v1480
      %v1509 = vpop.f32.mrf.mxu0
      %v1510 = vadd.f32 0.0, %v1509
      %v1511 = vpop.f32.mrf.mxu0
      %v1512 = vadd.f32 0.0, %v1511
      %1513 = vdwg.mxu0
      %v1514 = vunpack.c.l.b16 %v1371
      %v1515 = vunpack.c.l.b16 %v1372
      %v1516 = vpack.c.b16 %v1515, %v1514
      %1518 = vmatpush.bf16.msra.mxu0 0
      %1519 = vmatpush.bf16.msra.mxu0 0
      %1520 = vmatpush.bf16.msra.mxu0 0
      %1521 = vmatpush.bf16.msra.mxu0 0
      %1522 = vmatpush.bf16.msra.mxu0 0
      %1523 = vmatpush.bf16.msra.mxu0 0
      %1524 = vmatpush.bf16.msra.mxu0 0
      %1525 = vmatpush.bf16.msra.mxu0 %v1516
      %1526 = vmatmul.bf16.gmra.mxu0 %v1480
      %v1527 = vpop.f32.mrf.mxu0
      %v1528 = vadd.f32 0.0, %v1527
      %v1529 = vpop.f32.mrf.mxu0
      %v1530 = vadd.f32 0.0, %v1529
      %1531 = vdwg.mxu0
      %v1532 = vunpack.c.l.b16 %v1373
      %v1533 = vunpack.c.l.b16 %v1374
      %v1534 = vpack.c.b16 %v1533, %v1532
      %1536 = vmatpush.bf16.msra.mxu0 0
      %1537 = vmatpush.bf16.msra.mxu0 0
      %1538 = vmatpush.bf16.msra.mxu0 0
      %1539 = vmatpush.bf16.msra.mxu0 0
      %1540 = vmatpush.bf16.msra.mxu0 0
      %1541 = vmatpush.bf16.msra.mxu0 0
      %1542 = vmatpush.bf16.msra.mxu0 0
      %1543 = vmatpush.bf16.msra.mxu0 %v1534
      %1544 = vmatmul.bf16.gmra.mxu0 %v1480
      %v1545 = vpop.f32.mrf.mxu0
      %v1546 = vadd.f32 0.0, %v1545
      %v1547 = vpop.f32.mrf.mxu0
      %v1548 = vadd.f32 0.0, %v1547
      %1549 = vdwg.mxu0
      %v1550 = vunpack.c.l.b16 %v1375
      %v1551 = vunpack.c.l.b16 %v1376
      %v1552 = vpack.c.b16 %v1551, %v1550
      %1554 = vmatpush.bf16.msra.mxu0 0
      %1555 = vmatpush.bf16.msra.mxu0 0
      %1556 = vmatpush.bf16.msra.mxu0 0
      %1557 = vmatpush.bf16.msra.mxu0 0
      %1558 = vmatpush.bf16.msra.mxu0 0
      %1559 = vmatpush.bf16.msra.mxu0 0
      %1560 = vmatpush.bf16.msra.mxu0 0
      %1561 = vmatpush.bf16.msra.mxu0 %v1552
      %1562 = vmatmul.bf16.gmra.mxu0 %v1480
      %v1563 = vpop.f32.mrf.mxu0
      %v1564 = vadd.f32 0.0, %v1563
      %v1565 = vpop.f32.mrf.mxu0
      %v1566 = vadd.f32 0.0, %v1565
      %1567 = vdwg.mxu0
      %v1568 = vunpack.c.l.b16 %v1377
      %v1569 = vunpack.c.l.b16 %v1378
      %v1570 = vpack.c.b16 %v1569, %v1568
      %1572 = vmatpush.bf16.msra.mxu0 0
      %1573 = vmatpush.bf16.msra.mxu0 0
      %1574 = vmatpush.bf16.msra.mxu0 0
      %1575 = vmatpush.bf16.msra.mxu0 0
      %1576 = vmatpush.bf16.msra.mxu0 0
      %1577 = vmatpush.bf16.msra.mxu0 0
      %1578 = vmatpush.bf16.msra.mxu0 0
      %1579 = vmatpush.bf16.msra.mxu0 %v1570
      %1580 = vmatmul.bf16.gmra.mxu0 %v1480
      %v1581 = vpop.f32.mrf.mxu0
      %v1582 = vadd.f32 0.0, %v1581
      %v1583 = vpop.f32.mrf.mxu0
      %v1584 = vadd.f32 0.0, %v1583
      %1585 = vdwg.mxu0
      %v1586 = vunpack.c.l.b16 %v1379
      %v1587 = vunpack.c.l.b16 %v1380
      %v1588 = vpack.c.b16 %v1587, %v1586
      %1590 = vmatpush.bf16.msra.mxu0 0
      %1591 = vmatpush.bf16.msra.mxu0 0
      %1592 = vmatpush.bf16.msra.mxu0 0
      %1593 = vmatpush.bf16.msra.mxu0 0
      %1594 = vmatpush.bf16.msra.mxu0 0
      %1595 = vmatpush.bf16.msra.mxu0 0
      %1596 = vmatpush.bf16.msra.mxu0 0
      %1597 = vmatpush.bf16.msra.mxu0 %v1588
      %1598 = vmatmul.bf16.gmra.mxu0 %v1480
      %v1599 = vpop.f32.mrf.mxu0
      %v1600 = vadd.f32 0.0, %v1599
      %v1601 = vpop.f32.mrf.mxu0
      %v1602 = vadd.f32 0.0, %v1601
      %1603 = vdwg.mxu0
      %v1604 = vunpack.c.l.b16 %v1381
      %v1605 = vunpack.c.l.b16 %v1382
      %v1606 = vpack.c.b16 %v1605, %v1604
      %1608 = vmatpush.bf16.msra.mxu0 0
      %1609 = vmatpush.bf16.msra.mxu0 0
      %1610 = vmatpush.bf16.msra.mxu0 0
      %1611 = vmatpush.bf16.msra.mxu0 0
      %1612 = vmatpush.bf16.msra.mxu0 0
      %1613 = vmatpush.bf16.msra.mxu0 0
      %1614 = vmatpush.bf16.msra.mxu0 0
      %1615 = vmatpush.bf16.msra.mxu0 %v1606
      %1616 = vmatmul.bf16.gmra.mxu0 %v1480
      %v1617 = vpop.f32.mrf.mxu0
      %v1618 = vadd.f32 0.0, %v1617
      %v1619 = vpop.f32.mrf.mxu0
      %v1620 = vadd.f32 0.0, %v1619
      %1621 = vdwg.mxu0
      %v1622 = vpack.c.bf16 %v1494, %v1492
      %v1623 = vpack.c.bf16 %v1512, %v1510
      %v1624 = vpack.c.bf16 %v1530, %v1528
      %v1625 = vpack.c.bf16 %v1548, %v1546
      %v1626 = vpack.c.bf16 %v1566, %v1564
      %v1627 = vpack.c.bf16 %v1584, %v1582
      %v1628 = vpack.c.bf16 %v1602, %v1600
      %v1629 = vpack.c.bf16 %v1620, %v1618
      %v1630 = vld [vmem:[%s9] sm:$0xf]
      %v1631 = vld [vmem:[%s9 + $0x4] sm:$0xf]
      %v1632 = vld [vmem:[%s9 + $0x8] sm:$0xf]
      %v1633 = vld [vmem:[%s9 + $0xc] sm:$0xf]
      %v1638 = vunpack.c.l.b16 %v1630
      %v1639 = vunpack.c.l.b16 %v1631
      %v1640 = vunpack.c.l.b16 %v1632
      %v1641 = vunpack.c.l.b16 %v1633
      %v1642 = vpack.c.b16 %v1639, %v1638
      %v1643 = vpack.c.b16 %v1641, %v1640
      %v1647 = vsel %vm1172, %v1622, 0
      %v1650 = vsel %vm1172, %v1623, 0
      %v1653 = vsel %vm1172, %v1624, 0
      %v1656 = vsel %vm1172, %v1625, 0
      %v1659 = vsel %vm1172, %v1626, 0
      %v1662 = vsel %vm1172, %v1627, 0
      %v1665 = vsel %vm1172, %v1628, 0
      %v1668 = vsel %vm1172, %v1629, 0
      %1670 = vmatpush.bf16.msra.mxu0 0
      %1671 = vmatpush.bf16.msra.mxu0 0
      %1672 = vmatpush.bf16.msra.mxu0 0
      %1673 = vmatpush.bf16.msra.mxu0 0
      %1674 = vmatpush.bf16.msra.mxu0 0
      %1675 = vmatpush.bf16.msra.mxu0 0
      %1676 = vmatpush.bf16.msra.mxu0 %v1643
      %1677 = vmatpush.bf16.msra.mxu0 %v1642
      %1678 = vmatmul.bf16.gmra.mxu0 %v1647
      %v1679 = vpop.f32.mrf.mxu0
      %v1680 = vadd.f32 0.0, %v1679
      %v1681 = vpop.f32.mrf.mxu0
      %v1682 = vadd.f32 0.0, %v1681
      %1683 = vmatmul.bf16.gmra.mxu0 %v1650
      %v1684 = vpop.f32.mrf.mxu0
      %v1685 = vadd.f32 0.0, %v1684
      %v1686 = vpop.f32.mrf.mxu0
      %v1687 = vadd.f32 0.0, %v1686
      %1688 = vmatmul.bf16.gmra.mxu0 %v1653
      %v1689 = vpop.f32.mrf.mxu0
      %v1690 = vadd.f32 0.0, %v1689
      %v1691 = vpop.f32.mrf.mxu0
      %v1692 = vadd.f32 0.0, %v1691
      %1693 = vmatmul.bf16.gmra.mxu0 %v1656
      %v1694 = vpop.f32.mrf.mxu0
      %v1695 = vadd.f32 0.0, %v1694
      %v1696 = vpop.f32.mrf.mxu0
      %v1697 = vadd.f32 0.0, %v1696
      %1698 = vmatmul.bf16.gmra.mxu0 %v1659
      %v1699 = vpop.f32.mrf.mxu0
      %v1700 = vadd.f32 0.0, %v1699
      %v1701 = vpop.f32.mrf.mxu0
      %v1702 = vadd.f32 0.0, %v1701
      %1703 = vmatmul.bf16.gmra.mxu0 %v1662
      %v1704 = vpop.f32.mrf.mxu0
      %v1705 = vadd.f32 0.0, %v1704
      %v1706 = vpop.f32.mrf.mxu0
      %v1707 = vadd.f32 0.0, %v1706
      %1708 = vmatmul.bf16.gmra.mxu0 %v1665
      %v1709 = vpop.f32.mrf.mxu0
      %v1710 = vadd.f32 0.0, %v1709
      %v1711 = vpop.f32.mrf.mxu0
      %v1712 = vadd.f32 0.0, %v1711
      %1713 = vmatmul.bf16.gmra.mxu0 %v1668
      %v1714 = vpop.f32.mrf.mxu0
      %v1715 = vadd.f32 0.0, %v1714
      %v1716 = vpop.f32.mrf.mxu0
      %v1717 = vadd.f32 0.0, %v1716
      %1718 = vdwg.mxu0
      %v1723 = vunpack.c.l.b16 %v1464
      %v1724 = vunpack.c.l.b16 %v1465
      %v1725 = vunpack.c.l.b16 %v1466
      %v1726 = vunpack.c.l.b16 %v1467
      %v1727 = vpack.c.b16 %v1724, %v1723
      %v1728 = vpack.c.b16 %v1726, %v1725
      %v1732 = vsel %vm1172, %v1477, 0
      %v1735 = vsel %vm1172, %v1498, 0
      %v1738 = vsel %vm1172, %v1516, 0
      %v1741 = vsel %vm1172, %v1534, 0
      %v1744 = vsel %vm1172, %v1552, 0
      %v1747 = vsel %vm1172, %v1570, 0
      %v1750 = vsel %vm1172, %v1588, 0
      %v1753 = vsel %vm1172, %v1606, 0
      %1755 = vmatpush.bf16.msra.mxu0 0
      %1756 = vmatpush.bf16.msra.mxu0 0
      %1757 = vmatpush.bf16.msra.mxu0 0
      %1758 = vmatpush.bf16.msra.mxu0 0
      %1759 = vmatpush.bf16.msra.mxu0 0
      %1760 = vmatpush.bf16.msra.mxu0 0
      %1761 = vmatpush.bf16.msra.mxu0 %v1728
      %1762 = vmatpush.bf16.msra.mxu0 %v1727
      %1763 = vmatmul.bf16.gmra.mxu0 %v1732
      %v1764 = vpop.f32.mrf.mxu0
      %v1765 = vadd.f32 %v1680, %v1764
      %v1766 = vpop.f32.mrf.mxu0
      %v1767 = vadd.f32 %v1682, %v1766
      %1768 = vmatmul.bf16.gmra.mxu0 %v1735
      %v1769 = vpop.f32.mrf.mxu0
      %v1770 = vadd.f32 %v1685, %v1769
      %v1771 = vpop.f32.mrf.mxu0
      %v1772 = vadd.f32 %v1687, %v1771
      %1773 = vmatmul.bf16.gmra.mxu0 %v1738
      %v1774 = vpop.f32.mrf.mxu0
      %v1775 = vadd.f32 %v1690, %v1774
      %v1776 = vpop.f32.mrf.mxu0
      %v1777 = vadd.f32 %v1692, %v1776
      %1778 = vmatmul.bf16.gmra.mxu0 %v1741
      %v1779 = vpop.f32.mrf.mxu0
      %v1780 = vadd.f32 %v1695, %v1779
      %v1781 = vpop.f32.mrf.mxu0
      %v1782 = vadd.f32 %v1697, %v1781
      %1783 = vmatmul.bf16.gmra.mxu0 %v1744
      %v1784 = vpop.f32.mrf.mxu0
      %v1785 = vadd.f32 %v1700, %v1784
      %v1786 = vpop.f32.mrf.mxu0
      %v1787 = vadd.f32 %v1702, %v1786
      %1788 = vmatmul.bf16.gmra.mxu0 %v1747
      %v1789 = vpop.f32.mrf.mxu0
      %v1790 = vadd.f32 %v1705, %v1789
      %v1791 = vpop.f32.mrf.mxu0
      %v1792 = vadd.f32 %v1707, %v1791
      %1793 = vmatmul.bf16.gmra.mxu0 %v1750
      %v1794 = vpop.f32.mrf.mxu0
      %v1795 = vadd.f32 %v1710, %v1794
      %v1796 = vpop.f32.mrf.mxu0
      %v1797 = vadd.f32 %v1712, %v1796
      %1798 = vmatmul.bf16.gmra.mxu0 %v1753
      %v1799 = vpop.f32.mrf.mxu0
      %v1800 = vadd.f32 %v1715, %v1799
      %v1801 = vpop.f32.mrf.mxu0
      %v1802 = vadd.f32 %v1717, %v1801
      %1803 = vdwg.mxu0
      %v1804 = vld [vmem:[%s10] sm:$0x1]
      %v1806 = vperm.slane %v1804, 0
      %v1808 = vadd.f32 %v1765, %v1806
      %v1809 = vadd.f32 %v1767, %v1806
      %v1810 = vadd.f32 %v1770, %v1806
      %v1811 = vadd.f32 %v1772, %v1806
      %v1812 = vadd.f32 %v1775, %v1806
      %v1813 = vadd.f32 %v1777, %v1806
      %v1814 = vadd.f32 %v1780, %v1806
      %v1815 = vadd.f32 %v1782, %v1806
      %v1816 = vadd.f32 %v1785, %v1806
      %v1817 = vadd.f32 %v1787, %v1806
      %v1818 = vadd.f32 %v1790, %v1806
      %v1819 = vadd.f32 %v1792, %v1806
      %v1820 = vadd.f32 %v1795, %v1806
      %v1821 = vadd.f32 %v1797, %v1806
      %v1822 = vadd.f32 %v1800, %v1806
      %v1823 = vadd.f32 %v1802, %v1806
      %v1824 = vmax.f32 %v1808, 0.0
      %v1825 = vmax.f32 %v1809, 0.0
      %v1826 = vmax.f32 %v1810, 0.0
      %v1827 = vmax.f32 %v1811, 0.0
      %v1828 = vmax.f32 %v1812, 0.0
      %v1829 = vmax.f32 %v1813, 0.0
      %v1830 = vmax.f32 %v1814, 0.0
      %v1831 = vmax.f32 %v1815, 0.0
      %v1832 = vmax.f32 %v1816, 0.0
      %v1833 = vmax.f32 %v1817, 0.0
      %v1834 = vmax.f32 %v1818, 0.0
      %v1835 = vmax.f32 %v1819, 0.0
      %v1836 = vmax.f32 %v1820, 0.0
      %v1837 = vmax.f32 %v1821, 0.0
      %v1838 = vmax.f32 %v1822, 0.0
      %v1839 = vmax.f32 %v1823, 0.0
      %v1840 = vpack.c.bf16 %v1824, %v1824
      %v1841 = vpack.c.bf16 %v1825, %v1825
      %v1842 = vpack.c.bf16 %v1826, %v1826
      %v1843 = vpack.c.bf16 %v1827, %v1827
      %v1844 = vpack.c.bf16 %v1828, %v1828
      %v1845 = vpack.c.bf16 %v1829, %v1829
      %v1846 = vpack.c.bf16 %v1830, %v1830
      %v1847 = vpack.c.bf16 %v1831, %v1831
      %v1848 = vpack.c.bf16 %v1832, %v1832
      %v1849 = vpack.c.bf16 %v1833, %v1833
      %v1850 = vpack.c.bf16 %v1834, %v1834
      %v1851 = vpack.c.bf16 %v1835, %v1835
      %v1852 = vpack.c.bf16 %v1836, %v1836
      %v1853 = vpack.c.bf16 %v1837, %v1837
      %v1854 = vpack.c.bf16 %v1838, %v1838
      %v1855 = vpack.c.bf16 %v1839, %v1839
      %1872 = vrot.lane.b32.xlu0 %v1840, 64
      %v1873 = vpop.permute.xlu0 %1872
      %1874 = vrot.lane.b32.xlu0 %v1841, 64
      %v1875 = vpop.permute.xlu0 %1874
      %1876 = vrot.lane.b32.xlu0 %v1842, 64
      %v1877 = vpop.permute.xlu0 %1876
      %1878 = vrot.lane.b32.xlu0 %v1843, 64
      %v1879 = vpop.permute.xlu0 %1878
      %1880 = vrot.lane.b32.xlu0 %v1844, 64
      %v1881 = vpop.permute.xlu0 %1880
      %1882 = vrot.lane.b32.xlu0 %v1845, 64
      %v1883 = vpop.permute.xlu0 %1882
      %1884 = vrot.lane.b32.xlu0 %v1846, 64
      %v1885 = vpop.permute.xlu0 %1884
      %1886 = vrot.lane.b32.xlu0 %v1847, 64
      %v1887 = vpop.permute.xlu0 %1886
      %1888 = vrot.lane.b32.xlu0 %v1848, 64
      %v1889 = vpop.permute.xlu0 %1888
      %1890 = vrot.lane.b32.xlu0 %v1849, 64
      %v1891 = vpop.permute.xlu0 %1890
      %1892 = vrot.lane.b32.xlu0 %v1850, 64
      %v1893 = vpop.permute.xlu0 %1892
      %1894 = vrot.lane.b32.xlu0 %v1851, 64
      %v1895 = vpop.permute.xlu0 %1894
      %1896 = vrot.lane.b32.xlu0 %v1852, 64
      %v1897 = vpop.permute.xlu0 %1896
      %1898 = vrot.lane.b32.xlu0 %v1853, 64
      %v1899 = vpop.permute.xlu0 %1898
      %1900 = vrot.lane.b32.xlu0 %v1854, 64
      %v1901 = vpop.permute.xlu0 %1900
      %1902 = vrot.lane.b32.xlu0 %v1855, 64
      %v1903 = vpop.permute.xlu0 %1902
      %vm1920 = vcmask 781824
      %1921 = vst.msk [vmem:[#allocation2] sm:$0xf] %vm1920, %v1873
      %1922 = vst.msk [vmem:[#allocation2 + $0x4] sm:$0xf] %vm1920, %v1875
      %1923 = vst.msk [vmem:[#allocation2 + $0x8] sm:$0xf] %vm1920, %v1877
      %1924 = vst.msk [vmem:[#allocation2 + $0xc] sm:$0xf] %vm1920, %v1879
      %1925 = vst.msk [vmem:[#allocation2 + $0x10] sm:$0xf] %vm1920, %v1881
      %1926 = vst.msk [vmem:[#allocation2 + $0x14] sm:$0xf] %vm1920, %v1883
      %1927 = vst.msk [vmem:[#allocation2 + $0x18] sm:$0xf] %vm1920, %v1885
      %1928 = vst.msk [vmem:[#allocation2 + $0x1c] sm:$0xf] %vm1920, %v1887
      %1929 = vst.msk [vmem:[#allocation2 + $0x20] sm:$0xf] %vm1920, %v1889
      %1930 = vst.msk [vmem:[#allocation2 + $0x24] sm:$0xf] %vm1920, %v1891
      %1931 = vst.msk [vmem:[#allocation2 + $0x28] sm:$0xf] %vm1920, %v1893
      %1932 = vst.msk [vmem:[#allocation2 + $0x2c] sm:$0xf] %vm1920, %v1895
      %1933 = vst.msk [vmem:[#allocation2 + $0x30] sm:$0xf] %vm1920, %v1897
      %1934 = vst.msk [vmem:[#allocation2 + $0x34] sm:$0xf] %vm1920, %v1899
      %1935 = vst.msk [vmem:[#allocation2 + $0x38] sm:$0xf] %vm1920, %v1901
      %1936 = vst.msk [vmem:[#allocation2 + $0x3c] sm:$0xf] %vm1920, %v1903
      %v1937 = vld [vmem:[%s11] sm:$0xf]
      %v1938 = vld [vmem:[%s11 + $0x4] sm:$0xf]
      %v1939 = vld [vmem:[%s11 + $0x8] sm:$0xf]
      %v1940 = vld [vmem:[%s11 + $0xc] sm:$0xf]
      %v1941 = vld [vmem:[%s1] sm:$0xf]
      %v1942 = vld [vmem:[%s1 + $0x4] sm:$0xf]
      %v1945 = vunpack.c.l.b16 %v1941
      %v1946 = vunpack.c.l.b16 %v1942
      %v1947 = vpack.c.b16 %v1946, %v1945
      %v1948 = vunpack.c.l.b16 %v1840
      %v1949 = vunpack.c.l.b16 %v1841
      %v1950 = vpack.c.b16 %v1949, %v1948
      %v1953 = vsel %vm579, %v1947, 0
      %1955 = vmatpush.bf16.msra.mxu0 0
      %1956 = vmatpush.bf16.msra.mxu0 0
      %1957 = vmatpush.bf16.msra.mxu0 0
      %1958 = vmatpush.bf16.msra.mxu0 0
      %1959 = vmatpush.bf16.msra.mxu0 0
      %1960 = vmatpush.bf16.msra.mxu0 0
      %1961 = vmatpush.bf16.msra.mxu0 0
      %1962 = vmatpush.bf16.msra.mxu0 %v1950
      %1963 = vmatmul.bf16.gmra.mxu0 %v1953
      %v1964 = vpop.f32.mrf.mxu0
      %v1965 = vadd.f32 0.0, %v1964
      %v1966 = vpop.f32.mrf.mxu0
      %v1967 = vadd.f32 0.0, %v1966
      %1968 = vdwg.mxu0
      %v1969 = vunpack.c.l.b16 %v1842
      %v1970 = vunpack.c.l.b16 %v1843
      %v1971 = vpack.c.b16 %v1970, %v1969
      %1973 = vmatpush.bf16.msra.mxu0 0
      %1974 = vmatpush.bf16.msra.mxu0 0
      %1975 = vmatpush.bf16.msra.mxu0 0
      %1976 = vmatpush.bf16.msra.mxu0 0
      %1977 = vmatpush.bf16.msra.mxu0 0
      %1978 = vmatpush.bf16.msra.mxu0 0
      %1979 = vmatpush.bf16.msra.mxu0 0
      %1980 = vmatpush.bf16.msra.mxu0 %v1971
      %1981 = vmatmul.bf16.gmra.mxu0 %v1953
      %v1982 = vpop.f32.mrf.mxu0
      %v1983 = vadd.f32 0.0, %v1982
      %v1984 = vpop.f32.mrf.mxu0
      %v1985 = vadd.f32 0.0, %v1984
      %1986 = vdwg.mxu0
      %v1987 = vunpack.c.l.b16 %v1844
      %v1988 = vunpack.c.l.b16 %v1845
      %v1989 = vpack.c.b16 %v1988, %v1987
      %1991 = vmatpush.bf16.msra.mxu0 0
      %1992 = vmatpush.bf16.msra.mxu0 0
      %1993 = vmatpush.bf16.msra.mxu0 0
      %1994 = vmatpush.bf16.msra.mxu0 0
      %1995 = vmatpush.bf16.msra.mxu0 0
      %1996 = vmatpush.bf16.msra.mxu0 0
      %1997 = vmatpush.bf16.msra.mxu0 0
      %1998 = vmatpush.bf16.msra.mxu0 %v1989
      %1999 = vmatmul.bf16.gmra.mxu0 %v1953
      %v2000 = vpop.f32.mrf.mxu0
      %v2001 = vadd.f32 0.0, %v2000
      %v2002 = vpop.f32.mrf.mxu0
      %v2003 = vadd.f32 0.0, %v2002
      %2004 = vdwg.mxu0
      %v2005 = vunpack.c.l.b16 %v1846
      %v2006 = vunpack.c.l.b16 %v1847
      %v2007 = vpack.c.b16 %v2006, %v2005
      %2009 = vmatpush.bf16.msra.mxu0 0
      %2010 = vmatpush.bf16.msra.mxu0 0
      %2011 = vmatpush.bf16.msra.mxu0 0
      %2012 = vmatpush.bf16.msra.mxu0 0
      %2013 = vmatpush.bf16.msra.mxu0 0
      %2014 = vmatpush.bf16.msra.mxu0 0
      %2015 = vmatpush.bf16.msra.mxu0 0
      %2016 = vmatpush.bf16.msra.mxu0 %v2007
      %2017 = vmatmul.bf16.gmra.mxu0 %v1953
      %v2018 = vpop.f32.mrf.mxu0
      %v2019 = vadd.f32 0.0, %v2018
      %v2020 = vpop.f32.mrf.mxu0
      %v2021 = vadd.f32 0.0, %v2020
      %2022 = vdwg.mxu0
      %v2023 = vunpack.c.l.b16 %v1848
      %v2024 = vunpack.c.l.b16 %v1849
      %v2025 = vpack.c.b16 %v2024, %v2023
      %2027 = vmatpush.bf16.msra.mxu0 0
      %2028 = vmatpush.bf16.msra.mxu0 0
      %2029 = vmatpush.bf16.msra.mxu0 0
      %2030 = vmatpush.bf16.msra.mxu0 0
      %2031 = vmatpush.bf16.msra.mxu0 0
      %2032 = vmatpush.bf16.msra.mxu0 0
      %2033 = vmatpush.bf16.msra.mxu0 0
      %2034 = vmatpush.bf16.msra.mxu0 %v2025
      %2035 = vmatmul.bf16.gmra.mxu0 %v1953
      %v2036 = vpop.f32.mrf.mxu0
      %v2037 = vadd.f32 0.0, %v2036
      %v2038 = vpop.f32.mrf.mxu0
      %v2039 = vadd.f32 0.0, %v2038
      %2040 = vdwg.mxu0
      %v2041 = vunpack.c.l.b16 %v1850
      %v2042 = vunpack.c.l.b16 %v1851
      %v2043 = vpack.c.b16 %v2042, %v2041
      %2045 = vmatpush.bf16.msra.mxu0 0
      %2046 = vmatpush.bf16.msra.mxu0 0
      %2047 = vmatpush.bf16.msra.mxu0 0
      %2048 = vmatpush.bf16.msra.mxu0 0
      %2049 = vmatpush.bf16.msra.mxu0 0
      %2050 = vmatpush.bf16.msra.mxu0 0
      %2051 = vmatpush.bf16.msra.mxu0 0
      %2052 = vmatpush.bf16.msra.mxu0 %v2043
      %2053 = vmatmul.bf16.gmra.mxu0 %v1953
      %v2054 = vpop.f32.mrf.mxu0
      %v2055 = vadd.f32 0.0, %v2054
      %v2056 = vpop.f32.mrf.mxu0
      %v2057 = vadd.f32 0.0, %v2056
      %2058 = vdwg.mxu0
      %v2059 = vunpack.c.l.b16 %v1852
      %v2060 = vunpack.c.l.b16 %v1853
      %v2061 = vpack.c.b16 %v2060, %v2059
      %2063 = vmatpush.bf16.msra.mxu0 0
      %2064 = vmatpush.bf16.msra.mxu0 0
      %2065 = vmatpush.bf16.msra.mxu0 0
      %2066 = vmatpush.bf16.msra.mxu0 0
      %2067 = vmatpush.bf16.msra.mxu0 0
      %2068 = vmatpush.bf16.msra.mxu0 0
      %2069 = vmatpush.bf16.msra.mxu0 0
      %2070 = vmatpush.bf16.msra.mxu0 %v2061
      %2071 = vmatmul.bf16.gmra.mxu0 %v1953
      %v2072 = vpop.f32.mrf.mxu0
      %v2073 = vadd.f32 0.0, %v2072
      %v2074 = vpop.f32.mrf.mxu0
      %v2075 = vadd.f32 0.0, %v2074
      %2076 = vdwg.mxu0
      %v2077 = vunpack.c.l.b16 %v1854
      %v2078 = vunpack.c.l.b16 %v1855
      %v2079 = vpack.c.b16 %v2078, %v2077
      %2081 = vmatpush.bf16.msra.mxu0 0
      %2082 = vmatpush.bf16.msra.mxu0 0
      %2083 = vmatpush.bf16.msra.mxu0 0
      %2084 = vmatpush.bf16.msra.mxu0 0
      %2085 = vmatpush.bf16.msra.mxu0 0
      %2086 = vmatpush.bf16.msra.mxu0 0
      %2087 = vmatpush.bf16.msra.mxu0 0
      %2088 = vmatpush.bf16.msra.mxu0 %v2079
      %2089 = vmatmul.bf16.gmra.mxu0 %v1953
      %v2090 = vpop.f32.mrf.mxu0
      %v2091 = vadd.f32 0.0, %v2090
      %v2092 = vpop.f32.mrf.mxu0
      %v2093 = vadd.f32 0.0, %v2092
      %2094 = vdwg.mxu0
      %v2095 = vpack.c.bf16 %v1967, %v1965
      %v2096 = vpack.c.bf16 %v1985, %v1983
      %v2097 = vpack.c.bf16 %v2003, %v2001
      %v2098 = vpack.c.bf16 %v2021, %v2019
      %v2099 = vpack.c.bf16 %v2039, %v2037
      %v2100 = vpack.c.bf16 %v2057, %v2055
      %v2101 = vpack.c.bf16 %v2075, %v2073
      %v2102 = vpack.c.bf16 %v2093, %v2091
      %v2103 = vld [vmem:[%s12] sm:$0xf]
      %v2104 = vld [vmem:[%s12 + $0x4] sm:$0xf]
      %v2105 = vld [vmem:[%s12 + $0x8] sm:$0xf]
      %v2106 = vld [vmem:[%s12 + $0xc] sm:$0xf]
      %v2111 = vunpack.c.l.b16 %v2103
      %v2112 = vunpack.c.l.b16 %v2104
      %v2113 = vunpack.c.l.b16 %v2105
      %v2114 = vunpack.c.l.b16 %v2106
      %v2115 = vpack.c.b16 %v2112, %v2111
      %v2116 = vpack.c.b16 %v2114, %v2113
      %v2120 = vsel %vm1172, %v2095, 0
      %v2123 = vsel %vm1172, %v2096, 0
      %v2126 = vsel %vm1172, %v2097, 0
      %v2129 = vsel %vm1172, %v2098, 0
      %v2132 = vsel %vm1172, %v2099, 0
      %v2135 = vsel %vm1172, %v2100, 0
      %v2138 = vsel %vm1172, %v2101, 0
      %v2141 = vsel %vm1172, %v2102, 0
      %2143 = vmatpush.bf16.msra.mxu0 0
      %2144 = vmatpush.bf16.msra.mxu0 0
      %2145 = vmatpush.bf16.msra.mxu0 0
      %2146 = vmatpush.bf16.msra.mxu0 0
      %2147 = vmatpush.bf16.msra.mxu0 0
      %2148 = vmatpush.bf16.msra.mxu0 0
      %2149 = vmatpush.bf16.msra.mxu0 %v2116
      %2150 = vmatpush.bf16.msra.mxu0 %v2115
      %2151 = vmatmul.bf16.gmra.mxu0 %v2120
      %v2152 = vpop.f32.mrf.mxu0
      %v2153 = vadd.f32 0.0, %v2152
      %v2154 = vpop.f32.mrf.mxu0
      %v2155 = vadd.f32 0.0, %v2154
      %2156 = vmatmul.bf16.gmra.mxu0 %v2123
      %v2157 = vpop.f32.mrf.mxu0
      %v2158 = vadd.f32 0.0, %v2157
      %v2159 = vpop.f32.mrf.mxu0
      %v2160 = vadd.f32 0.0, %v2159
      %2161 = vmatmul.bf16.gmra.mxu0 %v2126
      %v2162 = vpop.f32.mrf.mxu0
      %v2163 = vadd.f32 0.0, %v2162
      %v2164 = vpop.f32.mrf.mxu0
      %v2165 = vadd.f32 0.0, %v2164
      %2166 = vmatmul.bf16.gmra.mxu0 %v2129
      %v2167 = vpop.f32.mrf.mxu0
      %v2168 = vadd.f32 0.0, %v2167
      %v2169 = vpop.f32.mrf.mxu0
      %v2170 = vadd.f32 0.0, %v2169
      %2171 = vmatmul.bf16.gmra.mxu0 %v2132
      %v2172 = vpop.f32.mrf.mxu0
      %v2173 = vadd.f32 0.0, %v2172
      %v2174 = vpop.f32.mrf.mxu0
      %v2175 = vadd.f32 0.0, %v2174
      %2176 = vmatmul.bf16.gmra.mxu0 %v2135
      %v2177 = vpop.f32.mrf.mxu0
      %v2178 = vadd.f32 0.0, %v2177
      %v2179 = vpop.f32.mrf.mxu0
      %v2180 = vadd.f32 0.0, %v2179
      %2181 = vmatmul.bf16.gmra.mxu0 %v2138
      %v2182 = vpop.f32.mrf.mxu0
      %v2183 = vadd.f32 0.0, %v2182
      %v2184 = vpop.f32.mrf.mxu0
      %v2185 = vadd.f32 0.0, %v2184
      %2186 = vmatmul.bf16.gmra.mxu0 %v2141
      %v2187 = vpop.f32.mrf.mxu0
      %v2188 = vadd.f32 0.0, %v2187
      %v2189 = vpop.f32.mrf.mxu0
      %v2190 = vadd.f32 0.0, %v2189
      %2191 = vdwg.mxu0
      %v2196 = vunpack.c.l.b16 %v1937
      %v2197 = vunpack.c.l.b16 %v1938
      %v2198 = vunpack.c.l.b16 %v1939
      %v2199 = vunpack.c.l.b16 %v1940
      %v2200 = vpack.c.b16 %v2197, %v2196
      %v2201 = vpack.c.b16 %v2199, %v2198
      %v2205 = vsel %vm1172, %v1950, 0
      %v2208 = vsel %vm1172, %v1971, 0
      %v2211 = vsel %vm1172, %v1989, 0
      %v2214 = vsel %vm1172, %v2007, 0
      %v2217 = vsel %vm1172, %v2025, 0
      %v2220 = vsel %vm1172, %v2043, 0
      %v2223 = vsel %vm1172, %v2061, 0
      %v2226 = vsel %vm1172, %v2079, 0
      %2228 = vmatpush.bf16.msra.mxu0 0
      %2229 = vmatpush.bf16.msra.mxu0 0
      %2230 = vmatpush.bf16.msra.mxu0 0
      %2231 = vmatpush.bf16.msra.mxu0 0
      %2232 = vmatpush.bf16.msra.mxu0 0
      %2233 = vmatpush.bf16.msra.mxu0 0
      %2234 = vmatpush.bf16.msra.mxu0 %v2201
      %2235 = vmatpush.bf16.msra.mxu0 %v2200
      %2236 = vmatmul.bf16.gmra.mxu0 %v2205
      %v2237 = vpop.f32.mrf.mxu0
      %v2238 = vadd.f32 %v2153, %v2237
      %v2239 = vpop.f32.mrf.mxu0
      %v2240 = vadd.f32 %v2155, %v2239
      %2241 = vmatmul.bf16.gmra.mxu0 %v2208
      %v2242 = vpop.f32.mrf.mxu0
      %v2243 = vadd.f32 %v2158, %v2242
      %v2244 = vpop.f32.mrf.mxu0
      %v2245 = vadd.f32 %v2160, %v2244
      %2246 = vmatmul.bf16.gmra.mxu0 %v2211
      %v2247 = vpop.f32.mrf.mxu0
      %v2248 = vadd.f32 %v2163, %v2247
      %v2249 = vpop.f32.mrf.mxu0
      %v2250 = vadd.f32 %v2165, %v2249
      %2251 = vmatmul.bf16.gmra.mxu0 %v2214
      %v2252 = vpop.f32.mrf.mxu0
      %v2253 = vadd.f32 %v2168, %v2252
      %v2254 = vpop.f32.mrf.mxu0
      %v2255 = vadd.f32 %v2170, %v2254
      %2256 = vmatmul.bf16.gmra.mxu0 %v2217
      %v2257 = vpop.f32.mrf.mxu0
      %v2258 = vadd.f32 %v2173, %v2257
      %v2259 = vpop.f32.mrf.mxu0
      %v2260 = vadd.f32 %v2175, %v2259
      %2261 = vmatmul.bf16.gmra.mxu0 %v2220
      %v2262 = vpop.f32.mrf.mxu0
      %v2263 = vadd.f32 %v2178, %v2262
      %v2264 = vpop.f32.mrf.mxu0
      %v2265 = vadd.f32 %v2180, %v2264
      %2266 = vmatmul.bf16.gmra.mxu0 %v2223
      %v2267 = vpop.f32.mrf.mxu0
      %v2268 = vadd.f32 %v2183, %v2267
      %v2269 = vpop.f32.mrf.mxu0
      %v2270 = vadd.f32 %v2185, %v2269
      %2271 = vmatmul.bf16.gmra.mxu0 %v2226
      %v2272 = vpop.f32.mrf.mxu0
      %v2273 = vadd.f32 %v2188, %v2272
      %v2274 = vpop.f32.mrf.mxu0
      %v2275 = vadd.f32 %v2190, %v2274
      %2276 = vdwg.mxu0
      %v2277 = vld [vmem:[%s13] sm:$0x1]
      %v2279 = vperm.slane %v2277, 0
      %v2281 = vadd.f32 %v2238, %v2279
      %v2282 = vadd.f32 %v2240, %v2279
      %v2283 = vadd.f32 %v2243, %v2279
      %v2284 = vadd.f32 %v2245, %v2279
      %v2285 = vadd.f32 %v2248, %v2279
      %v2286 = vadd.f32 %v2250, %v2279
      %v2287 = vadd.f32 %v2253, %v2279
      %v2288 = vadd.f32 %v2255, %v2279
      %v2289 = vadd.f32 %v2258, %v2279
      %v2290 = vadd.f32 %v2260, %v2279
      %v2291 = vadd.f32 %v2263, %v2279
      %v2292 = vadd.f32 %v2265, %v2279
      %v2293 = vadd.f32 %v2268, %v2279
      %v2294 = vadd.f32 %v2270, %v2279
      %v2295 = vadd.f32 %v2273, %v2279
      %v2296 = vadd.f32 %v2275, %v2279
      %v2297 = vmax.f32 %v2281, 0.0
      %v2298 = vmax.f32 %v2282, 0.0
      %v2299 = vmax.f32 %v2283, 0.0
      %v2300 = vmax.f32 %v2284, 0.0
      %v2301 = vmax.f32 %v2285, 0.0
      %v2302 = vmax.f32 %v2286, 0.0
      %v2303 = vmax.f32 %v2287, 0.0
      %v2304 = vmax.f32 %v2288, 0.0
      %v2305 = vmax.f32 %v2289, 0.0
      %v2306 = vmax.f32 %v2290, 0.0
      %v2307 = vmax.f32 %v2291, 0.0
      %v2308 = vmax.f32 %v2292, 0.0
      %v2309 = vmax.f32 %v2293, 0.0
      %v2310 = vmax.f32 %v2294, 0.0
      %v2311 = vmax.f32 %v2295, 0.0
      %v2312 = vmax.f32 %v2296, 0.0
      %v2313 = vpack.c.bf16 %v2297, %v2297
      %v2314 = vpack.c.bf16 %v2298, %v2298
      %v2315 = vpack.c.bf16 %v2299, %v2299
      %v2316 = vpack.c.bf16 %v2300, %v2300
      %v2317 = vpack.c.bf16 %v2301, %v2301
      %v2318 = vpack.c.bf16 %v2302, %v2302
      %v2319 = vpack.c.bf16 %v2303, %v2303
      %v2320 = vpack.c.bf16 %v2304, %v2304
      %v2321 = vpack.c.bf16 %v2305, %v2305
      %v2322 = vpack.c.bf16 %v2306, %v2306
      %v2323 = vpack.c.bf16 %v2307, %v2307
      %v2324 = vpack.c.bf16 %v2308, %v2308
      %v2325 = vpack.c.bf16 %v2309, %v2309
      %v2326 = vpack.c.bf16 %v2310, %v2310
      %v2327 = vpack.c.bf16 %v2311, %v2311
      %v2328 = vpack.c.bf16 %v2312, %v2312
      %2345 = vrot.lane.b32.xlu0 %v2313, 96
      %v2346 = vpop.permute.xlu0 %2345
      %2347 = vrot.lane.b32.xlu0 %v2314, 96
      %v2348 = vpop.permute.xlu0 %2347
      %2349 = vrot.lane.b32.xlu0 %v2315, 96
      %v2350 = vpop.permute.xlu0 %2349
      %2351 = vrot.lane.b32.xlu0 %v2316, 96
      %v2352 = vpop.permute.xlu0 %2351
      %2353 = vrot.lane.b32.xlu0 %v2317, 96
      %v2354 = vpop.permute.xlu0 %2353
      %2355 = vrot.lane.b32.xlu0 %v2318, 96
      %v2356 = vpop.permute.xlu0 %2355
      %2357 = vrot.lane.b32.xlu0 %v2319, 96
      %v2358 = vpop.permute.xlu0 %2357
      %2359 = vrot.lane.b32.xlu0 %v2320, 96
      %v2360 = vpop.permute.xlu0 %2359
      %2361 = vrot.lane.b32.xlu0 %v2321, 96
      %v2362 = vpop.permute.xlu0 %2361
      %2363 = vrot.lane.b32.xlu0 %v2322, 96
      %v2364 = vpop.permute.xlu0 %2363
      %2365 = vrot.lane.b32.xlu0 %v2323, 96
      %v2366 = vpop.permute.xlu0 %2365
      %2367 = vrot.lane.b32.xlu0 %v2324, 96
      %v2368 = vpop.permute.xlu0 %2367
      %2369 = vrot.lane.b32.xlu0 %v2325, 96
      %v2370 = vpop.permute.xlu0 %2369
      %2371 = vrot.lane.b32.xlu0 %v2326, 96
      %v2372 = vpop.permute.xlu0 %2371
      %2373 = vrot.lane.b32.xlu0 %v2327, 96
      %v2374 = vpop.permute.xlu0 %2373
      %2375 = vrot.lane.b32.xlu0 %v2328, 96
      %v2376 = vpop.permute.xlu0 %2375
      %vm2393 = vcmask 1044224
      %2394 = vst.msk [vmem:[#allocation2] sm:$0xf] %vm2393, %v2346
      %2395 = vst.msk [vmem:[#allocation2 + $0x4] sm:$0xf] %vm2393, %v2348
      %2396 = vst.msk [vmem:[#allocation2 + $0x8] sm:$0xf] %vm2393, %v2350
      %2397 = vst.msk [vmem:[#allocation2 + $0xc] sm:$0xf] %vm2393, %v2352
      %2398 = vst.msk [vmem:[#allocation2 + $0x10] sm:$0xf] %vm2393, %v2354
      %2399 = vst.msk [vmem:[#allocation2 + $0x14] sm:$0xf] %vm2393, %v2356
      %2400 = vst.msk [vmem:[#allocation2 + $0x18] sm:$0xf] %vm2393, %v2358
      %2401 = vst.msk [vmem:[#allocation2 + $0x1c] sm:$0xf] %vm2393, %v2360
      %2402 = vst.msk [vmem:[#allocation2 + $0x20] sm:$0xf] %vm2393, %v2362
      %2403 = vst.msk [vmem:[#allocation2 + $0x24] sm:$0xf] %vm2393, %v2364
      %2404 = vst.msk [vmem:[#allocation2 + $0x28] sm:$0xf] %vm2393, %v2366
      %2405 = vst.msk [vmem:[#allocation2 + $0x2c] sm:$0xf] %vm2393, %v2368
      %2406 = vst.msk [vmem:[#allocation2 + $0x30] sm:$0xf] %vm2393, %v2370
      %2407 = vst.msk [vmem:[#allocation2 + $0x34] sm:$0xf] %vm2393, %v2372
      %2408 = vst.msk [vmem:[#allocation2 + $0x38] sm:$0xf] %vm2393, %v2374
      %2409 = vst.msk [vmem:[#allocation2 + $0x3c] sm:$0xf] %vm2393, %v2376
      %v2410 = vld [vmem:[#allocation2] sm:$0xf]
      %v2411 = vld [vmem:[#allocation2 + $0x4] sm:$0xf]
      %v2412 = vld [vmem:[#allocation2 + $0x8] sm:$0xf]
      %v2413 = vld [vmem:[#allocation2 + $0xc] sm:$0xf]
      %v2414 = vld [vmem:[#allocation2 + $0x10] sm:$0xf]
      %v2415 = vld [vmem:[#allocation2 + $0x14] sm:$0xf]
      %v2416 = vld [vmem:[#allocation2 + $0x18] sm:$0xf]
      %v2417 = vld [vmem:[#allocation2 + $0x1c] sm:$0xf]
      %v2418 = vld [vmem:[#allocation2 + $0x20] sm:$0xf]
      %v2419 = vld [vmem:[#allocation2 + $0x24] sm:$0xf]
      %v2420 = vld [vmem:[#allocation2 + $0x28] sm:$0xf]
      %v2421 = vld [vmem:[#allocation2 + $0x2c] sm:$0xf]
      %v2422 = vld [vmem:[#allocation2 + $0x30] sm:$0xf]
      %v2423 = vld [vmem:[#allocation2 + $0x34] sm:$0xf]
      %v2424 = vld [vmem:[#allocation2 + $0x38] sm:$0xf]
      %v2425 = vld [vmem:[#allocation2 + $0x3c] sm:$0xf]
      %v2426 = vld [vmem:[%s14] sm:$0xf]
      %v2427 = vld [vmem:[%s14 + $0x4] sm:$0xf]
      %v2428 = vld [vmem:[%s14 + $0x8] sm:$0xf]
      %v2429 = vld [vmem:[%s14 + $0xc] sm:$0xf]
      %v2430 = vld [vmem:[%s15] sm:$0xf]
      %v2431 = vld [vmem:[%s15 + $0x4] sm:$0xf]
      %v2432 = vld [vmem:[%s15 + $0x8] sm:$0xf]
      %v2433 = vld [vmem:[%s15 + $0xc] sm:$0xf]
      %v2434 = vld [vmem:[%s14 + $0x10] sm:$0xf]
      %v2435 = vld [vmem:[%s14 + $0x14] sm:$0xf]
      %v2436 = vld [vmem:[%s14 + $0x18] sm:$0xf]
      %v2437 = vld [vmem:[%s14 + $0x1c] sm:$0xf]
      %v2454 = vunpack.c.l.b16 %v2410
      %v2455 = vunpack.c.l.b16 %v2411
      %v2456 = vunpack.c.l.b16 %v2412
      %v2457 = vunpack.c.l.b16 %v2413
      %v2458 = vunpack.c.l.b16 %v2414
      %v2459 = vunpack.c.l.b16 %v2415
      %v2460 = vunpack.c.l.b16 %v2416
      %v2461 = vunpack.c.l.b16 %v2417
      %v2462 = vunpack.c.l.b16 %v2418
      %v2463 = vunpack.c.l.b16 %v2419
      %v2464 = vunpack.c.l.b16 %v2420
      %v2465 = vunpack.c.l.b16 %v2421
      %v2466 = vunpack.c.l.b16 %v2422
      %v2467 = vunpack.c.l.b16 %v2423
      %v2468 = vunpack.c.l.b16 %v2424
      %v2469 = vunpack.c.l.b16 %v2425
      %v2470 = vpack.c.b16 %v2455, %v2454
      %v2471 = vpack.c.b16 %v2457, %v2456
      %v2472 = vpack.c.b16 %v2459, %v2458
      %v2473 = vpack.c.b16 %v2461, %v2460
      %v2474 = vpack.c.b16 %v2463, %v2462
      %v2475 = vpack.c.b16 %v2465, %v2464
      %v2476 = vpack.c.b16 %v2467, %v2466
      %v2477 = vpack.c.b16 %v2469, %v2468
      %2478 = vrot.lane.b32.xlu0 %v2470, 96
      %v2479 = vpop.permute.xlu0 %2478
      %2480 = vrot.lane.b32.xlu0 %v2471, 96
      %v2481 = vpop.permute.xlu0 %2480
      %2482 = vrot.lane.b32.xlu0 %v2472, 96
      %v2483 = vpop.permute.xlu0 %2482
      %2484 = vrot.lane.b32.xlu0 %v2473, 96
      %v2485 = vpop.permute.xlu0 %2484
      %2486 = vrot.lane.b32.xlu0 %v2474, 96
      %v2487 = vpop.permute.xlu0 %2486
      %2488 = vrot.lane.b32.xlu0 %v2475, 96
      %v2489 = vpop.permute.xlu0 %2488
      %2490 = vrot.lane.b32.xlu0 %v2476, 96
      %v2491 = vpop.permute.xlu0 %2490
      %2492 = vrot.lane.b32.xlu0 %v2477, 96
      %v2493 = vpop.permute.xlu0 %2492
      %v2498 = vunpack.c.l.b16 %v2434
      %v2499 = vunpack.c.l.b16 %v2435
      %v2500 = vunpack.c.l.b16 %v2436
      %v2501 = vunpack.c.l.b16 %v2437
      %v2502 = vpack.c.b16 %v2499, %v2498
      %v2503 = vpack.c.b16 %v2501, %v2500
      %v2507 = vsel %vm1172, %v2479, 0
      %v2510 = vsel %vm1172, %v2481, 0
      %v2513 = vsel %vm1172, %v2483, 0
      %v2516 = vsel %vm1172, %v2485, 0
      %v2519 = vsel %vm1172, %v2487, 0
      %v2522 = vsel %vm1172, %v2489, 0
      %v2525 = vsel %vm1172, %v2491, 0
      %v2528 = vsel %vm1172, %v2493, 0
      %2530 = vmatpush.bf16.msra.mxu0 0
      %2531 = vmatpush.bf16.msra.mxu0 0
      %2532 = vmatpush.bf16.msra.mxu0 0
      %2533 = vmatpush.bf16.msra.mxu0 0
      %2534 = vmatpush.bf16.msra.mxu0 0
      %2535 = vmatpush.bf16.msra.mxu0 0
      %2536 = vmatpush.bf16.msra.mxu0 %v2503
      %2537 = vmatpush.bf16.msra.mxu0 %v2502
      %2538 = vmatmul.bf16.gmra.mxu0 %v2507
      %v2539 = vpop.f32.mrf.mxu0
      %v2540 = vadd.f32 0.0, %v2539
      %v2541 = vpop.f32.mrf.mxu0
      %v2542 = vadd.f32 0.0, %v2541
      %2543 = vmatmul.bf16.gmra.mxu0 %v2510
      %v2544 = vpop.f32.mrf.mxu0
      %v2545 = vadd.f32 0.0, %v2544
      %v2546 = vpop.f32.mrf.mxu0
      %v2547 = vadd.f32 0.0, %v2546
      %2548 = vmatmul.bf16.gmra.mxu0 %v2513
      %v2549 = vpop.f32.mrf.mxu0
      %v2550 = vadd.f32 0.0, %v2549
      %v2551 = vpop.f32.mrf.mxu0
      %v2552 = vadd.f32 0.0, %v2551
      %2553 = vmatmul.bf16.gmra.mxu0 %v2516
      %v2554 = vpop.f32.mrf.mxu0
      %v2555 = vadd.f32 0.0, %v2554
      %v2556 = vpop.f32.mrf.mxu0
      %v2557 = vadd.f32 0.0, %v2556
      %2558 = vmatmul.bf16.gmra.mxu0 %v2519
      %v2559 = vpop.f32.mrf.mxu0
      %v2560 = vadd.f32 0.0, %v2559
      %v2561 = vpop.f32.mrf.mxu0
      %v2562 = vadd.f32 0.0, %v2561
      %2563 = vmatmul.bf16.gmra.mxu0 %v2522
      %v2564 = vpop.f32.mrf.mxu0
      %v2565 = vadd.f32 0.0, %v2564
      %v2566 = vpop.f32.mrf.mxu0
      %v2567 = vadd.f32 0.0, %v2566
      %2568 = vmatmul.bf16.gmra.mxu0 %v2525
      %v2569 = vpop.f32.mrf.mxu0
      %v2570 = vadd.f32 0.0, %v2569
      %v2571 = vpop.f32.mrf.mxu0
      %v2572 = vadd.f32 0.0, %v2571
      %2573 = vmatmul.bf16.gmra.mxu0 %v2528
      %v2574 = vpop.f32.mrf.mxu0
      %v2575 = vadd.f32 0.0, %v2574
      %v2576 = vpop.f32.mrf.mxu0
      %v2577 = vadd.f32 0.0, %v2576
      %2578 = vdwg.mxu0
      %v2583 = vunpack.c.l.b16 %v2426
      %v2584 = vunpack.c.l.b16 %v2427
      %v2585 = vunpack.c.l.b16 %v2428
      %v2586 = vunpack.c.l.b16 %v2429
      %v2587 = vpack.c.b16 %v2584, %v2583
      %v2588 = vpack.c.b16 %v2586, %v2585
      %v2592 = vsel %vm1172, %v2470, 0
      %v2595 = vsel %vm1172, %v2471, 0
      %v2598 = vsel %vm1172, %v2472, 0
      %v2601 = vsel %vm1172, %v2473, 0
      %v2604 = vsel %vm1172, %v2474, 0
      %v2607 = vsel %vm1172, %v2475, 0
      %v2610 = vsel %vm1172, %v2476, 0
      %v2613 = vsel %vm1172, %v2477, 0
      %2615 = vmatpush.bf16.msra.mxu0 0
      %2616 = vmatpush.bf16.msra.mxu0 0
      %2617 = vmatpush.bf16.msra.mxu0 0
      %2618 = vmatpush.bf16.msra.mxu0 0
      %2619 = vmatpush.bf16.msra.mxu0 0
      %2620 = vmatpush.bf16.msra.mxu0 0
      %2621 = vmatpush.bf16.msra.mxu0 %v2588
      %2622 = vmatpush.bf16.msra.mxu0 %v2587
      %2623 = vmatmul.bf16.gmra.mxu0 %v2592
      %v2624 = vpop.f32.mrf.mxu0
      %v2625 = vadd.f32 %v2540, %v2624
      %v2626 = vpop.f32.mrf.mxu0
      %v2627 = vadd.f32 %v2542, %v2626
      %2628 = vmatmul.bf16.gmra.mxu0 %v2595
      %v2629 = vpop.f32.mrf.mxu0
      %v2630 = vadd.f32 %v2545, %v2629
      %v2631 = vpop.f32.mrf.mxu0
      %v2632 = vadd.f32 %v2547, %v2631
      %2633 = vmatmul.bf16.gmra.mxu0 %v2598
      %v2634 = vpop.f32.mrf.mxu0
      %v2635 = vadd.f32 %v2550, %v2634
      %v2636 = vpop.f32.mrf.mxu0
      %v2637 = vadd.f32 %v2552, %v2636
      %2638 = vmatmul.bf16.gmra.mxu0 %v2601
      %v2639 = vpop.f32.mrf.mxu0
      %v2640 = vadd.f32 %v2555, %v2639
      %v2641 = vpop.f32.mrf.mxu0
      %v2642 = vadd.f32 %v2557, %v2641
      %2643 = vmatmul.bf16.gmra.mxu0 %v2604
      %v2644 = vpop.f32.mrf.mxu0
      %v2645 = vadd.f32 %v2560, %v2644
      %v2646 = vpop.f32.mrf.mxu0
      %v2647 = vadd.f32 %v2562, %v2646
      %2648 = vmatmul.bf16.gmra.mxu0 %v2607
      %v2649 = vpop.f32.mrf.mxu0
      %v2650 = vadd.f32 %v2565, %v2649
      %v2651 = vpop.f32.mrf.mxu0
      %v2652 = vadd.f32 %v2567, %v2651
      %2653 = vmatmul.bf16.gmra.mxu0 %v2610
      %v2654 = vpop.f32.mrf.mxu0
      %v2655 = vadd.f32 %v2570, %v2654
      %v2656 = vpop.f32.mrf.mxu0
      %v2657 = vadd.f32 %v2572, %v2656
      %2658 = vmatmul.bf16.gmra.mxu0 %v2613
      %v2659 = vpop.f32.mrf.mxu0
      %v2660 = vadd.f32 %v2575, %v2659
      %v2661 = vpop.f32.mrf.mxu0
      %v2662 = vadd.f32 %v2577, %v2661
      %2663 = vdwg.mxu0
      %v2664 = vld [vmem:[%s15 + $0x10] sm:$0xf]
      %v2665 = vld [vmem:[%s15 + $0x14] sm:$0xf]
      %v2666 = vld [vmem:[%s15 + $0x18] sm:$0xf]
      %v2667 = vld [vmem:[%s15 + $0x1c] sm:$0xf]
      %v2672 = vunpack.c.l.b16 %v2664
      %v2673 = vunpack.c.l.b16 %v2665
      %v2674 = vunpack.c.l.b16 %v2666
      %v2675 = vunpack.c.l.b16 %v2667
      %v2676 = vpack.c.b16 %v2673, %v2672
      %v2677 = vpack.c.b16 %v2675, %v2674
      %2680 = vmatpush.bf16.msra.mxu0 0
      %2681 = vmatpush.bf16.msra.mxu0 0
      %2682 = vmatpush.bf16.msra.mxu0 0
      %2683 = vmatpush.bf16.msra.mxu0 0
      %2684 = vmatpush.bf16.msra.mxu0 0
      %2685 = vmatpush.bf16.msra.mxu0 0
      %2686 = vmatpush.bf16.msra.mxu0 %v2677
      %2687 = vmatpush.bf16.msra.mxu0 %v2676
      %2688 = vmatmul.bf16.gmra.mxu0 %v2507
      %v2689 = vpop.f32.mrf.mxu0
      %v2690 = vadd.f32 0.0, %v2689
      %v2691 = vpop.f32.mrf.mxu0
      %v2692 = vadd.f32 0.0, %v2691
      %2693 = vmatmul.bf16.gmra.mxu0 %v2510
      %v2694 = vpop.f32.mrf.mxu0
      %v2695 = vadd.f32 0.0, %v2694
      %v2696 = vpop.f32.mrf.mxu0
      %v2697 = vadd.f32 0.0, %v2696
      %2698 = vmatmul.bf16.gmra.mxu0 %v2513
      %v2699 = vpop.f32.mrf.mxu0
      %v2700 = vadd.f32 0.0, %v2699
      %v2701 = vpop.f32.mrf.mxu0
      %v2702 = vadd.f32 0.0, %v2701
      %2703 = vmatmul.bf16.gmra.mxu0 %v2516
      %v2704 = vpop.f32.mrf.mxu0
      %v2705 = vadd.f32 0.0, %v2704
      %v2706 = vpop.f32.mrf.mxu0
      %v2707 = vadd.f32 0.0, %v2706
      %2708 = vmatmul.bf16.gmra.mxu0 %v2519
      %v2709 = vpop.f32.mrf.mxu0
      %v2710 = vadd.f32 0.0, %v2709
      %v2711 = vpop.f32.mrf.mxu0
      %v2712 = vadd.f32 0.0, %v2711
      %2713 = vmatmul.bf16.gmra.mxu0 %v2522
      %v2714 = vpop.f32.mrf.mxu0
      %v2715 = vadd.f32 0.0, %v2714
      %v2716 = vpop.f32.mrf.mxu0
      %v2717 = vadd.f32 0.0, %v2716
      %2718 = vmatmul.bf16.gmra.mxu0 %v2525
      %v2719 = vpop.f32.mrf.mxu0
      %v2720 = vadd.f32 0.0, %v2719
      %v2721 = vpop.f32.mrf.mxu0
      %v2722 = vadd.f32 0.0, %v2721
      %2723 = vmatmul.bf16.gmra.mxu0 %v2528
      %v2724 = vpop.f32.mrf.mxu0
      %v2725 = vadd.f32 0.0, %v2724
      %v2726 = vpop.f32.mrf.mxu0
      %v2727 = vadd.f32 0.0, %v2726
      %2728 = vdwg.mxu0
      %v2733 = vunpack.c.l.b16 %v2430
      %v2734 = vunpack.c.l.b16 %v2431
      %v2735 = vunpack.c.l.b16 %v2432
      %v2736 = vunpack.c.l.b16 %v2433
      %v2737 = vpack.c.b16 %v2734, %v2733
      %v2738 = vpack.c.b16 %v2736, %v2735
      %2741 = vmatpush.bf16.msra.mxu0 0
      %2742 = vmatpush.bf16.msra.mxu0 0
      %2743 = vmatpush.bf16.msra.mxu0 0
      %2744 = vmatpush.bf16.msra.mxu0 0
      %2745 = vmatpush.bf16.msra.mxu0 0
      %2746 = vmatpush.bf16.msra.mxu0 0
      %2747 = vmatpush.bf16.msra.mxu0 %v2738
      %2748 = vmatpush.bf16.msra.mxu0 %v2737
      %2749 = vmatmul.bf16.gmra.mxu0 %v2592
      %v2750 = vpop.f32.mrf.mxu0
      %v2751 = vadd.f32 %v2690, %v2750
      %v2752 = vpop.f32.mrf.mxu0
      %v2753 = vadd.f32 %v2692, %v2752
      %2754 = vmatmul.bf16.gmra.mxu0 %v2595
      %v2755 = vpop.f32.mrf.mxu0
      %v2756 = vadd.f32 %v2695, %v2755
      %v2757 = vpop.f32.mrf.mxu0
      %v2758 = vadd.f32 %v2697, %v2757
      %2759 = vmatmul.bf16.gmra.mxu0 %v2598
      %v2760 = vpop.f32.mrf.mxu0
      %v2761 = vadd.f32 %v2700, %v2760
      %v2762 = vpop.f32.mrf.mxu0
      %v2763 = vadd.f32 %v2702, %v2762
      %2764 = vmatmul.bf16.gmra.mxu0 %v2601
      %v2765 = vpop.f32.mrf.mxu0
      %v2766 = vadd.f32 %v2705, %v2765
      %v2767 = vpop.f32.mrf.mxu0
      %v2768 = vadd.f32 %v2707, %v2767
      %2769 = vmatmul.bf16.gmra.mxu0 %v2604
      %v2770 = vpop.f32.mrf.mxu0
      %v2771 = vadd.f32 %v2710, %v2770
      %v2772 = vpop.f32.mrf.mxu0
      %v2773 = vadd.f32 %v2712, %v2772
      %2774 = vmatmul.bf16.gmra.mxu0 %v2607
      %v2775 = vpop.f32.mrf.mxu0
      %v2776 = vadd.f32 %v2715, %v2775
      %v2777 = vpop.f32.mrf.mxu0
      %v2778 = vadd.f32 %v2717, %v2777
      %2779 = vmatmul.bf16.gmra.mxu0 %v2610
      %v2780 = vpop.f32.mrf.mxu0
      %v2781 = vadd.f32 %v2720, %v2780
      %v2782 = vpop.f32.mrf.mxu0
      %v2783 = vadd.f32 %v2722, %v2782
      %2784 = vmatmul.bf16.gmra.mxu0 %v2613
      %v2785 = vpop.f32.mrf.mxu0
      %v2786 = vadd.f32 %v2725, %v2785
      %v2787 = vpop.f32.mrf.mxu0
      %v2788 = vadd.f32 %v2727, %v2787
      %2789 = vdwg.mxu0
      %v2790 = vld [vmem:[%s14 + $0x20] sm:$0xf]
      %v2791 = vld [vmem:[%s14 + $0x24] sm:$0xf]
      %v2792 = vld [vmem:[%s14 + $0x28] sm:$0xf]
      %v2793 = vld [vmem:[%s14 + $0x2c] sm:$0xf]
      %2794 = vrot.lane.b32.xlu0 %v2470, 64
      %v2795 = vpop.permute.xlu0 %2794
      %2796 = vrot.lane.b32.xlu0 %v2471, 64
      %v2797 = vpop.permute.xlu0 %2796
      %2798 = vrot.lane.b32.xlu0 %v2472, 64
      %v2799 = vpop.permute.xlu0 %2798
      %2800 = vrot.lane.b32.xlu0 %v2473, 64
      %v2801 = vpop.permute.xlu0 %2800
      %2802 = vrot.lane.b32.xlu0 %v2474, 64
      %v2803 = vpop.permute.xlu0 %2802
      %2804 = vrot.lane.b32.xlu0 %v2475, 64
      %v2805 = vpop.permute.xlu0 %2804
      %2806 = vrot.lane.b32.xlu0 %v2476, 64
      %v2807 = vpop.permute.xlu0 %2806
      %2808 = vrot.lane.b32.xlu0 %v2477, 64
      %v2809 = vpop.permute.xlu0 %2808
      %v2814 = vunpack.c.l.b16 %v2790
      %v2815 = vunpack.c.l.b16 %v2791
      %v2816 = vunpack.c.l.b16 %v2792
      %v2817 = vunpack.c.l.b16 %v2793
      %v2818 = vpack.c.b16 %v2815, %v2814
      %v2819 = vpack.c.b16 %v2817, %v2816
      %v2823 = vsel %vm1172, %v2795, 0
      %v2826 = vsel %vm1172, %v2797, 0
      %v2829 = vsel %vm1172, %v2799, 0
      %v2832 = vsel %vm1172, %v2801, 0
      %v2835 = vsel %vm1172, %v2803, 0
      %v2838 = vsel %vm1172, %v2805, 0
      %v2841 = vsel %vm1172, %v2807, 0
      %v2844 = vsel %vm1172, %v2809, 0
      %2846 = vmatpush.bf16.msra.mxu0 0
      %2847 = vmatpush.bf16.msra.mxu0 0
      %2848 = vmatpush.bf16.msra.mxu0 0
      %2849 = vmatpush.bf16.msra.mxu0 0
      %2850 = vmatpush.bf16.msra.mxu0 0
      %2851 = vmatpush.bf16.msra.mxu0 0
      %2852 = vmatpush.bf16.msra.mxu0 %v2819
      %2853 = vmatpush.bf16.msra.mxu0 %v2818
      %2854 = vmatmul.bf16.gmra.mxu0 %v2823
      %v2855 = vpop.f32.mrf.mxu0
      %v2856 = vadd.f32 0.0, %v2855
      %v2857 = vpop.f32.mrf.mxu0
      %v2858 = vadd.f32 0.0, %v2857
      %2859 = vmatmul.bf16.gmra.mxu0 %v2826
      %v2860 = vpop.f32.mrf.mxu0
      %v2861 = vadd.f32 0.0, %v2860
      %v2862 = vpop.f32.mrf.mxu0
      %v2863 = vadd.f32 0.0, %v2862
      %2864 = vmatmul.bf16.gmra.mxu0 %v2829
      %v2865 = vpop.f32.mrf.mxu0
      %v2866 = vadd.f32 0.0, %v2865
      %v2867 = vpop.f32.mrf.mxu0
      %v2868 = vadd.f32 0.0, %v2867
      %2869 = vmatmul.bf16.gmra.mxu0 %v2832
      %v2870 = vpop.f32.mrf.mxu0
      %v2871 = vadd.f32 0.0, %v2870
      %v2872 = vpop.f32.mrf.mxu0
      %v2873 = vadd.f32 0.0, %v2872
      %2874 = vmatmul.bf16.gmra.mxu0 %v2835
      %v2875 = vpop.f32.mrf.mxu0
      %v2876 = vadd.f32 0.0, %v2875
      %v2877 = vpop.f32.mrf.mxu0
      %v2878 = vadd.f32 0.0, %v2877
      %2879 = vmatmul.bf16.gmra.mxu0 %v2838
      %v2880 = vpop.f32.mrf.mxu0
      %v2881 = vadd.f32 0.0, %v2880
      %v2882 = vpop.f32.mrf.mxu0
      %v2883 = vadd.f32 0.0, %v2882
      %2884 = vmatmul.bf16.gmra.mxu0 %v2841
      %v2885 = vpop.f32.mrf.mxu0
      %v2886 = vadd.f32 0.0, %v2885
      %v2887 = vpop.f32.mrf.mxu0
      %v2888 = vadd.f32 0.0, %v2887
      %2889 = vmatmul.bf16.gmra.mxu0 %v2844
      %v2890 = vpop.f32.mrf.mxu0
      %v2891 = vadd.f32 0.0, %v2890
      %v2892 = vpop.f32.mrf.mxu0
      %v2893 = vadd.f32 0.0, %v2892
      %2894 = vdwg.mxu0
      %v2895 = vadd.f32 %v2625, %v2856
      %v2896 = vadd.f32 %v2627, %v2858
      %v2897 = vadd.f32 %v2630, %v2861
      %v2898 = vadd.f32 %v2632, %v2863
      %v2899 = vadd.f32 %v2635, %v2866
      %v2900 = vadd.f32 %v2637, %v2868
      %v2901 = vadd.f32 %v2640, %v2871
      %v2902 = vadd.f32 %v2642, %v2873
      %v2903 = vadd.f32 %v2645, %v2876
      %v2904 = vadd.f32 %v2647, %v2878
      %v2905 = vadd.f32 %v2650, %v2881
      %v2906 = vadd.f32 %v2652, %v2883
      %v2907 = vadd.f32 %v2655, %v2886
      %v2908 = vadd.f32 %v2657, %v2888
      %v2909 = vadd.f32 %v2660, %v2891
      %v2910 = vadd.f32 %v2662, %v2893
      %v2911 = vld [vmem:[%s15 + $0x20] sm:$0xf]
      %v2912 = vld [vmem:[%s15 + $0x24] sm:$0xf]
      %v2913 = vld [vmem:[%s15 + $0x28] sm:$0xf]
      %v2914 = vld [vmem:[%s15 + $0x2c] sm:$0xf]
      %v2919 = vunpack.c.l.b16 %v2911
      %v2920 = vunpack.c.l.b16 %v2912
      %v2921 = vunpack.c.l.b16 %v2913
      %v2922 = vunpack.c.l.b16 %v2914
      %v2923 = vpack.c.b16 %v2920, %v2919
      %v2924 = vpack.c.b16 %v2922, %v2921
      %2927 = vmatpush.bf16.msra.mxu0 0
      %2928 = vmatpush.bf16.msra.mxu0 0
      %2929 = vmatpush.bf16.msra.mxu0 0
      %2930 = vmatpush.bf16.msra.mxu0 0
      %2931 = vmatpush.bf16.msra.mxu0 0
      %2932 = vmatpush.bf16.msra.mxu0 0
      %2933 = vmatpush.bf16.msra.mxu0 %v2924
      %2934 = vmatpush.bf16.msra.mxu0 %v2923
      %2935 = vmatmul.bf16.gmra.mxu0 %v2823
      %v2936 = vpop.f32.mrf.mxu0
      %v2937 = vadd.f32 0.0, %v2936
      %v2938 = vpop.f32.mrf.mxu0
      %v2939 = vadd.f32 0.0, %v2938
      %2940 = vmatmul.bf16.gmra.mxu0 %v2826
      %v2941 = vpop.f32.mrf.mxu0
      %v2942 = vadd.f32 0.0, %v2941
      %v2943 = vpop.f32.mrf.mxu0
      %v2944 = vadd.f32 0.0, %v2943
      %2945 = vmatmul.bf16.gmra.mxu0 %v2829
      %v2946 = vpop.f32.mrf.mxu0
      %v2947 = vadd.f32 0.0, %v2946
      %v2948 = vpop.f32.mrf.mxu0
      %v2949 = vadd.f32 0.0, %v2948
      %2950 = vmatmul.bf16.gmra.mxu0 %v2832
      %v2951 = vpop.f32.mrf.mxu0
      %v2952 = vadd.f32 0.0, %v2951
      %v2953 = vpop.f32.mrf.mxu0
      %v2954 = vadd.f32 0.0, %v2953
      %2955 = vmatmul.bf16.gmra.mxu0 %v2835
      %v2956 = vpop.f32.mrf.mxu0
      %v2957 = vadd.f32 0.0, %v2956
      %v2958 = vpop.f32.mrf.mxu0
      %v2959 = vadd.f32 0.0, %v2958
      %2960 = vmatmul.bf16.gmra.mxu0 %v2838
      %v2961 = vpop.f32.mrf.mxu0
      %v2962 = vadd.f32 0.0, %v2961
      %v2963 = vpop.f32.mrf.mxu0
      %v2964 = vadd.f32 0.0, %v2963
      %2965 = vmatmul.bf16.gmra.mxu0 %v2841
      %v2966 = vpop.f32.mrf.mxu0
      %v2967 = vadd.f32 0.0, %v2966
      %v2968 = vpop.f32.mrf.mxu0
      %v2969 = vadd.f32 0.0, %v2968
      %2970 = vmatmul.bf16.gmra.mxu0 %v2844
      %v2971 = vpop.f32.mrf.mxu0
      %v2972 = vadd.f32 0.0, %v2971
      %v2973 = vpop.f32.mrf.mxu0
      %v2974 = vadd.f32 0.0, %v2973
      %2975 = vdwg.mxu0
      %v2976 = vadd.f32 %v2751, %v2937
      %v2977 = vadd.f32 %v2753, %v2939
      %v2978 = vadd.f32 %v2756, %v2942
      %v2979 = vadd.f32 %v2758, %v2944
      %v2980 = vadd.f32 %v2761, %v2947
      %v2981 = vadd.f32 %v2763, %v2949
      %v2982 = vadd.f32 %v2766, %v2952
      %v2983 = vadd.f32 %v2768, %v2954
      %v2984 = vadd.f32 %v2771, %v2957
      %v2985 = vadd.f32 %v2773, %v2959
      %v2986 = vadd.f32 %v2776, %v2962
      %v2987 = vadd.f32 %v2778, %v2964
      %v2988 = vadd.f32 %v2781, %v2967
      %v2989 = vadd.f32 %v2783, %v2969
      %v2990 = vadd.f32 %v2786, %v2972
      %v2991 = vadd.f32 %v2788, %v2974
      %v2992 = vld [vmem:[%s14 + $0x30] sm:$0xf]
      %v2993 = vld [vmem:[%s14 + $0x34] sm:$0xf]
      %v2994 = vld [vmem:[%s14 + $0x38] sm:$0xf]
      %v2995 = vld [vmem:[%s14 + $0x3c] sm:$0xf]
      %2996 = vrot.lane.b32.xlu0 %v2470, 32
      %v2997 = vpop.permute.xlu0 %2996
      %2998 = vrot.lane.b32.xlu0 %v2471, 32
      %v2999 = vpop.permute.xlu0 %2998
      %3000 = vrot.lane.b32.xlu0 %v2472, 32
      %v3001 = vpop.permute.xlu0 %3000
      %3002 = vrot.lane.b32.xlu0 %v2473, 32
      %v3003 = vpop.permute.xlu0 %3002
      %3004 = vrot.lane.b32.xlu0 %v2474, 32
      %v3005 = vpop.permute.xlu0 %3004
      %3006 = vrot.lane.b32.xlu0 %v2475, 32
      %v3007 = vpop.permute.xlu0 %3006
      %3008 = vrot.lane.b32.xlu0 %v2476, 32
      %v3009 = vpop.permute.xlu0 %3008
      %3010 = vrot.lane.b32.xlu0 %v2477, 32
      %v3011 = vpop.permute.xlu0 %3010
      %v3016 = vunpack.c.l.b16 %v2992
      %v3017 = vunpack.c.l.b16 %v2993
      %v3018 = vunpack.c.l.b16 %v2994
      %v3019 = vunpack.c.l.b16 %v2995
      %v3020 = vpack.c.b16 %v3017, %v3016
      %v3021 = vpack.c.b16 %v3019, %v3018
      %v3025 = vsel %vm1172, %v2997, 0
      %v3028 = vsel %vm1172, %v2999, 0
      %v3031 = vsel %vm1172, %v3001, 0
      %v3034 = vsel %vm1172, %v3003, 0
      %v3037 = vsel %vm1172, %v3005, 0
      %v3040 = vsel %vm1172, %v3007, 0
      %v3043 = vsel %vm1172, %v3009, 0
      %v3046 = vsel %vm1172, %v3011, 0
      %3048 = vmatpush.bf16.msra.mxu0 0
      %3049 = vmatpush.bf16.msra.mxu0 0
      %3050 = vmatpush.bf16.msra.mxu0 0
      %3051 = vmatpush.bf16.msra.mxu0 0
      %3052 = vmatpush.bf16.msra.mxu0 0
      %3053 = vmatpush.bf16.msra.mxu0 0
      %3054 = vmatpush.bf16.msra.mxu0 %v3021
      %3055 = vmatpush.bf16.msra.mxu0 %v3020
      %3056 = vmatmul.bf16.gmra.mxu0 %v3025
      %v3057 = vpop.f32.mrf.mxu0
      %v3058 = vadd.f32 0.0, %v3057
      %v3059 = vpop.f32.mrf.mxu0
      %v3060 = vadd.f32 0.0, %v3059
      %3061 = vmatmul.bf16.gmra.mxu0 %v3028
      %v3062 = vpop.f32.mrf.mxu0
      %v3063 = vadd.f32 0.0, %v3062
      %v3064 = vpop.f32.mrf.mxu0
      %v3065 = vadd.f32 0.0, %v3064
      %3066 = vmatmul.bf16.gmra.mxu0 %v3031
      %v3067 = vpop.f32.mrf.mxu0
      %v3068 = vadd.f32 0.0, %v3067
      %v3069 = vpop.f32.mrf.mxu0
      %v3070 = vadd.f32 0.0, %v3069
      %3071 = vmatmul.bf16.gmra.mxu0 %v3034
      %v3072 = vpop.f32.mrf.mxu0
      %v3073 = vadd.f32 0.0, %v3072
      %v3074 = vpop.f32.mrf.mxu0
      %v3075 = vadd.f32 0.0, %v3074
      %3076 = vmatmul.bf16.gmra.mxu0 %v3037
      %v3077 = vpop.f32.mrf.mxu0
      %v3078 = vadd.f32 0.0, %v3077
      %v3079 = vpop.f32.mrf.mxu0
      %v3080 = vadd.f32 0.0, %v3079
      %3081 = vmatmul.bf16.gmra.mxu0 %v3040
      %v3082 = vpop.f32.mrf.mxu0
      %v3083 = vadd.f32 0.0, %v3082
      %v3084 = vpop.f32.mrf.mxu0
      %v3085 = vadd.f32 0.0, %v3084
      %3086 = vmatmul.bf16.gmra.mxu0 %v3043
      %v3087 = vpop.f32.mrf.mxu0
      %v3088 = vadd.f32 0.0, %v3087
      %v3089 = vpop.f32.mrf.mxu0
      %v3090 = vadd.f32 0.0, %v3089
      %3091 = vmatmul.bf16.gmra.mxu0 %v3046
      %v3092 = vpop.f32.mrf.mxu0
      %v3093 = vadd.f32 0.0, %v3092
      %v3094 = vpop.f32.mrf.mxu0
      %v3095 = vadd.f32 0.0, %v3094
      %3096 = vdwg.mxu0
      %v3097 = vadd.f32 %v2895, %v3058
      %v3098 = vadd.f32 %v2896, %v3060
      %v3099 = vadd.f32 %v2897, %v3063
      %v3100 = vadd.f32 %v2898, %v3065
      %v3101 = vadd.f32 %v2899, %v3068
      %v3102 = vadd.f32 %v2900, %v3070
      %v3103 = vadd.f32 %v2901, %v3073
      %v3104 = vadd.f32 %v2902, %v3075
      %v3105 = vadd.f32 %v2903, %v3078
      %v3106 = vadd.f32 %v2904, %v3080
      %v3107 = vadd.f32 %v2905, %v3083
      %v3108 = vadd.f32 %v2906, %v3085
      %v3109 = vadd.f32 %v2907, %v3088
      %v3110 = vadd.f32 %v2908, %v3090
      %v3111 = vadd.f32 %v2909, %v3093
      %v3112 = vadd.f32 %v2910, %v3095
      %v3113 = vld [vmem:[%s15 + $0x30] sm:$0xf]
      %v3114 = vld [vmem:[%s15 + $0x34] sm:$0xf]
      %v3115 = vld [vmem:[%s15 + $0x38] sm:$0xf]
      %v3116 = vld [vmem:[%s15 + $0x3c] sm:$0xf]
      %v3121 = vunpack.c.l.b16 %v3113
      %v3122 = vunpack.c.l.b16 %v3114
      %v3123 = vunpack.c.l.b16 %v3115
      %v3124 = vunpack.c.l.b16 %v3116
      %v3125 = vpack.c.b16 %v3122, %v3121
      %v3126 = vpack.c.b16 %v3124, %v3123
      %3129 = vmatpush.bf16.msra.mxu0 0
      %3130 = vmatpush.bf16.msra.mxu0 0
      %3131 = vmatpush.bf16.msra.mxu0 0
      %3132 = vmatpush.bf16.msra.mxu0 0
      %3133 = vmatpush.bf16.msra.mxu0 0
      %3134 = vmatpush.bf16.msra.mxu0 0
      %3135 = vmatpush.bf16.msra.mxu0 %v3126
      %3136 = vmatpush.bf16.msra.mxu0 %v3125
      %3137 = vmatmul.bf16.gmra.mxu0 %v3025
      %v3138 = vpop.f32.mrf.mxu0
      %v3139 = vadd.f32 0.0, %v3138
      %v3140 = vpop.f32.mrf.mxu0
      %v3141 = vadd.f32 0.0, %v3140
      %3142 = vmatmul.bf16.gmra.mxu0 %v3028
      %v3143 = vpop.f32.mrf.mxu0
      %v3144 = vadd.f32 0.0, %v3143
      %v3145 = vpop.f32.mrf.mxu0
      %v3146 = vadd.f32 0.0, %v3145
      %3147 = vmatmul.bf16.gmra.mxu0 %v3031
      %v3148 = vpop.f32.mrf.mxu0
      %v3149 = vadd.f32 0.0, %v3148
      %v3150 = vpop.f32.mrf.mxu0
      %v3151 = vadd.f32 0.0, %v3150
      %3152 = vmatmul.bf16.gmra.mxu0 %v3034
      %v3153 = vpop.f32.mrf.mxu0
      %v3154 = vadd.f32 0.0, %v3153
      %v3155 = vpop.f32.mrf.mxu0
      %v3156 = vadd.f32 0.0, %v3155
      %3157 = vmatmul.bf16.gmra.mxu0 %v3037
      %v3158 = vpop.f32.mrf.mxu0
      %v3159 = vadd.f32 0.0, %v3158
      %v3160 = vpop.f32.mrf.mxu0
      %v3161 = vadd.f32 0.0, %v3160
      %3162 = vmatmul.bf16.gmra.mxu0 %v3040
      %v3163 = vpop.f32.mrf.mxu0
      %v3164 = vadd.f32 0.0, %v3163
      %v3165 = vpop.f32.mrf.mxu0
      %v3166 = vadd.f32 0.0, %v3165
      %3167 = vmatmul.bf16.gmra.mxu0 %v3043
      %v3168 = vpop.f32.mrf.mxu0
      %v3169 = vadd.f32 0.0, %v3168
      %v3170 = vpop.f32.mrf.mxu0
      %v3171 = vadd.f32 0.0, %v3170
      %3172 = vmatmul.bf16.gmra.mxu0 %v3046
      %v3173 = vpop.f32.mrf.mxu0
      %v3174 = vadd.f32 0.0, %v3173
      %v3175 = vpop.f32.mrf.mxu0
      %v3176 = vadd.f32 0.0, %v3175
      %3177 = vdwg.mxu0
      %v3178 = vadd.f32 %v2976, %v3139
      %v3179 = vadd.f32 %v2977, %v3141
      %v3180 = vadd.f32 %v2978, %v3144
      %v3181 = vadd.f32 %v2979, %v3146
      %v3182 = vadd.f32 %v2980, %v3149
      %v3183 = vadd.f32 %v2981, %v3151
      %v3184 = vadd.f32 %v2982, %v3154
      %v3185 = vadd.f32 %v2983, %v3156
      %v3186 = vadd.f32 %v2984, %v3159
      %v3187 = vadd.f32 %v2985, %v3161
      %v3188 = vadd.f32 %v2986, %v3164
      %v3189 = vadd.f32 %v2987, %v3166
      %v3190 = vadd.f32 %v2988, %v3169
      %v3191 = vadd.f32 %v2989, %v3171
      %v3192 = vadd.f32 %v2990, %v3174
      %v3193 = vadd.f32 %v2991, %v3176
      %v3194 = vpack.c.bf16 %v3178, %v3178
      %v3195 = vpack.c.bf16 %v3179, %v3179
      %v3196 = vpack.c.bf16 %v3180, %v3180
      %v3197 = vpack.c.bf16 %v3181, %v3181
      %v3198 = vpack.c.bf16 %v3182, %v3182
      %v3199 = vpack.c.bf16 %v3183, %v3183
      %v3200 = vpack.c.bf16 %v3184, %v3184
      %v3201 = vpack.c.bf16 %v3185, %v3185
      %v3202 = vpack.c.bf16 %v3186, %v3186
      %v3203 = vpack.c.bf16 %v3187, %v3187
      %v3204 = vpack.c.bf16 %v3188, %v3188
      %v3205 = vpack.c.bf16 %v3189, %v3189
      %v3206 = vpack.c.bf16 %v3190, %v3190
      %v3207 = vpack.c.bf16 %v3191, %v3191
      %v3208 = vpack.c.bf16 %v3192, %v3192
      %v3209 = vpack.c.bf16 %v3193, %v3193
      %v3210 = vld [vmem:[%s1] sm:$0xf]
      %v3211 = vld [vmem:[%s1 + $0x4] sm:$0xf]
      %v3214 = vunpack.c.l.b16 %v3210
      %v3215 = vunpack.c.l.b16 %v3211
      %v3216 = vpack.c.b16 %v3215, %v3214
      %v3219 = vunpack.c.l.b16 %v3194
      %v3220 = vunpack.c.l.b16 %v3195
      %v3221 = vpack.c.b16 %v3220, %v3219
      %v3224 = vsel %vm579, %v3216, 0
      %3226 = vmatpush.bf16.msra.mxu0 0
      %3227 = vmatpush.bf16.msra.mxu0 0
      %3228 = vmatpush.bf16.msra.mxu0 0
      %3229 = vmatpush.bf16.msra.mxu0 0
      %3230 = vmatpush.bf16.msra.mxu0 0
      %3231 = vmatpush.bf16.msra.mxu0 0
      %3232 = vmatpush.bf16.msra.mxu0 0
      %3233 = vmatpush.bf16.msra.mxu0 %v3221
      %3234 = vmatmul.bf16.gmra.mxu0 %v3224
      %v3235 = vpop.f32.mrf.mxu0
      %v3236 = vadd.f32 0.0, %v3235
      %v3237 = vpop.f32.mrf.mxu0
      %v3238 = vadd.f32 0.0, %v3237
      %3239 = vdwg.mxu0
      %v3242 = vunpack.c.l.b16 %v3196
      %v3243 = vunpack.c.l.b16 %v3197
      %v3244 = vpack.c.b16 %v3243, %v3242
      %3246 = vmatpush.bf16.msra.mxu0 0
      %3247 = vmatpush.bf16.msra.mxu0 0
      %3248 = vmatpush.bf16.msra.mxu0 0
      %3249 = vmatpush.bf16.msra.mxu0 0
      %3250 = vmatpush.bf16.msra.mxu0 0
      %3251 = vmatpush.bf16.msra.mxu0 0
      %3252 = vmatpush.bf16.msra.mxu0 0
      %3253 = vmatpush.bf16.msra.mxu0 %v3244
      %3254 = vmatmul.bf16.gmra.mxu0 %v3224
      %v3255 = vpop.f32.mrf.mxu0
      %v3256 = vadd.f32 0.0, %v3255
      %v3257 = vpop.f32.mrf.mxu0
      %v3258 = vadd.f32 0.0, %v3257
      %3259 = vdwg.mxu0
      %v3262 = vunpack.c.l.b16 %v3198
      %v3263 = vunpack.c.l.b16 %v3199
      %v3264 = vpack.c.b16 %v3263, %v3262
      %3266 = vmatpush.bf16.msra.mxu0 0
      %3267 = vmatpush.bf16.msra.mxu0 0
      %3268 = vmatpush.bf16.msra.mxu0 0
      %3269 = vmatpush.bf16.msra.mxu0 0
      %3270 = vmatpush.bf16.msra.mxu0 0
      %3271 = vmatpush.bf16.msra.mxu0 0
      %3272 = vmatpush.bf16.msra.mxu0 0
      %3273 = vmatpush.bf16.msra.mxu0 %v3264
      %3274 = vmatmul.bf16.gmra.mxu0 %v3224
      %v3275 = vpop.f32.mrf.mxu0
      %v3276 = vadd.f32 0.0, %v3275
      %v3277 = vpop.f32.mrf.mxu0
      %v3278 = vadd.f32 0.0, %v3277
      %3279 = vdwg.mxu0
      %v3282 = vunpack.c.l.b16 %v3200
      %v3283 = vunpack.c.l.b16 %v3201
      %v3284 = vpack.c.b16 %v3283, %v3282
      %3286 = vmatpush.bf16.msra.mxu0 0
      %3287 = vmatpush.bf16.msra.mxu0 0
      %3288 = vmatpush.bf16.msra.mxu0 0
      %3289 = vmatpush.bf16.msra.mxu0 0
      %3290 = vmatpush.bf16.msra.mxu0 0
      %3291 = vmatpush.bf16.msra.mxu0 0
      %3292 = vmatpush.bf16.msra.mxu0 0
      %3293 = vmatpush.bf16.msra.mxu0 %v3284
      %3294 = vmatmul.bf16.gmra.mxu0 %v3224
      %v3295 = vpop.f32.mrf.mxu0
      %v3296 = vadd.f32 0.0, %v3295
      %v3297 = vpop.f32.mrf.mxu0
      %v3298 = vadd.f32 0.0, %v3297
      %3299 = vdwg.mxu0
      %v3302 = vunpack.c.l.b16 %v3202
      %v3303 = vunpack.c.l.b16 %v3203
      %v3304 = vpack.c.b16 %v3303, %v3302
      %3306 = vmatpush.bf16.msra.mxu0 0
      %3307 = vmatpush.bf16.msra.mxu0 0
      %3308 = vmatpush.bf16.msra.mxu0 0
      %3309 = vmatpush.bf16.msra.mxu0 0
      %3310 = vmatpush.bf16.msra.mxu0 0
      %3311 = vmatpush.bf16.msra.mxu0 0
      %3312 = vmatpush.bf16.msra.mxu0 0
      %3313 = vmatpush.bf16.msra.mxu0 %v3304
      %3314 = vmatmul.bf16.gmra.mxu0 %v3224
      %v3315 = vpop.f32.mrf.mxu0
      %v3316 = vadd.f32 0.0, %v3315
      %v3317 = vpop.f32.mrf.mxu0
      %v3318 = vadd.f32 0.0, %v3317
      %3319 = vdwg.mxu0
      %v3322 = vunpack.c.l.b16 %v3204
      %v3323 = vunpack.c.l.b16 %v3205
      %v3324 = vpack.c.b16 %v3323, %v3322
      %3326 = vmatpush.bf16.msra.mxu0 0
      %3327 = vmatpush.bf16.msra.mxu0 0
      %3328 = vmatpush.bf16.msra.mxu0 0
      %3329 = vmatpush.bf16.msra.mxu0 0
      %3330 = vmatpush.bf16.msra.mxu0 0
      %3331 = vmatpush.bf16.msra.mxu0 0
      %3332 = vmatpush.bf16.msra.mxu0 0
      %3333 = vmatpush.bf16.msra.mxu0 %v3324
      %3334 = vmatmul.bf16.gmra.mxu0 %v3224
      %v3335 = vpop.f32.mrf.mxu0
      %v3336 = vadd.f32 0.0, %v3335
      %v3337 = vpop.f32.mrf.mxu0
      %v3338 = vadd.f32 0.0, %v3337
      %3339 = vdwg.mxu0
      %v3342 = vunpack.c.l.b16 %v3206
      %v3343 = vunpack.c.l.b16 %v3207
      %v3344 = vpack.c.b16 %v3343, %v3342
      %3346 = vmatpush.bf16.msra.mxu0 0
      %3347 = vmatpush.bf16.msra.mxu0 0
      %3348 = vmatpush.bf16.msra.mxu0 0
      %3349 = vmatpush.bf16.msra.mxu0 0
      %3350 = vmatpush.bf16.msra.mxu0 0
      %3351 = vmatpush.bf16.msra.mxu0 0
      %3352 = vmatpush.bf16.msra.mxu0 0
      %3353 = vmatpush.bf16.msra.mxu0 %v3344
      %3354 = vmatmul.bf16.gmra.mxu0 %v3224
      %v3355 = vpop.f32.mrf.mxu0
      %v3356 = vadd.f32 0.0, %v3355
      %v3357 = vpop.f32.mrf.mxu0
      %v3358 = vadd.f32 0.0, %v3357
      %3359 = vdwg.mxu0
      %v3362 = vunpack.c.l.b16 %v3208
      %v3363 = vunpack.c.l.b16 %v3209
      %v3364 = vpack.c.b16 %v3363, %v3362
      %3366 = vmatpush.bf16.msra.mxu0 0
      %3367 = vmatpush.bf16.msra.mxu0 0
      %3368 = vmatpush.bf16.msra.mxu0 0
      %3369 = vmatpush.bf16.msra.mxu0 0
      %3370 = vmatpush.bf16.msra.mxu0 0
      %3371 = vmatpush.bf16.msra.mxu0 0
      %3372 = vmatpush.bf16.msra.mxu0 0
      %3373 = vmatpush.bf16.msra.mxu0 %v3364
      %3374 = vmatmul.bf16.gmra.mxu0 %v3224
      %v3375 = vpop.f32.mrf.mxu0
      %v3376 = vadd.f32 0.0, %v3375
      %v3377 = vpop.f32.mrf.mxu0
      %v3378 = vadd.f32 0.0, %v3377
      %3379 = vdwg.mxu0
      %v3380 = vadd.f32 %v3097, %v3236
      %v3381 = vadd.f32 %v3098, %v3238
      %v3382 = vadd.f32 %v3099, %v3256
      %v3383 = vadd.f32 %v3100, %v3258
      %v3384 = vadd.f32 %v3101, %v3276
      %v3385 = vadd.f32 %v3102, %v3278
      %v3386 = vadd.f32 %v3103, %v3296
      %v3387 = vadd.f32 %v3104, %v3298
      %v3388 = vadd.f32 %v3105, %v3316
      %v3389 = vadd.f32 %v3106, %v3318
      %v3390 = vadd.f32 %v3107, %v3336
      %v3391 = vadd.f32 %v3108, %v3338
      %v3392 = vadd.f32 %v3109, %v3356
      %v3393 = vadd.f32 %v3110, %v3358
      %v3394 = vadd.f32 %v3111, %v3376
      %v3395 = vadd.f32 %v3112, %v3378
      %v3396 = vld [vmem:[%s16] sm:$0x1]
      %v3398 = vperm.slane %v3396, 0
      %v3400 = vadd.f32 %v3380, %v3398
      %v3401 = vadd.f32 %v3381, %v3398
      %v3402 = vadd.f32 %v3382, %v3398
      %v3403 = vadd.f32 %v3383, %v3398
      %v3404 = vadd.f32 %v3384, %v3398
      %v3405 = vadd.f32 %v3385, %v3398
      %v3406 = vadd.f32 %v3386, %v3398
      %v3407 = vadd.f32 %v3387, %v3398
      %v3408 = vadd.f32 %v3388, %v3398
      %v3409 = vadd.f32 %v3389, %v3398
      %v3410 = vadd.f32 %v3390, %v3398
      %v3411 = vadd.f32 %v3391, %v3398
      %v3412 = vadd.f32 %v3392, %v3398
      %v3413 = vadd.f32 %v3393, %v3398
      %v3414 = vadd.f32 %v3394, %v3398
      %v3415 = vadd.f32 %v3395, %v3398
      %v3416 = vsel %vm1172, %v3400, 0.0
      %v3417 = vsel %vm1172, %v3401, 0.0
      %v3418 = vadd.f32 %v3416, %v3417
      %v3419 = vrot.slane %v3418, 4
      %v3420 = vadd.f32 %v3418, %v3419
      %v3421 = vrot.slane %v3420, 2
      %v3422 = vadd.f32 %v3420, %v3421
      %v3423 = vrot.slane %v3422, 1
      %v3424 = vadd.f32 %v3422, %v3423
      %v3425 = vrcp.pop 16.0
      %v3426 = vmul.f32 16.0, %v3425
      %v3427 = vsub.f32 1.0, %v3426
      %v3428 = vmul.f32 %v3425, %v3427
      %v3429 = vadd.f32 %v3425, %v3428
      %vm3430 = vweird.f32 %v3425
      %v3431 = vsel %vm3430, %v3425, %v3429
      %v3432 = vmul.f32 %v3424, %v3431
      %vm3433 = vcmask 253952
      %3434 = vst.msk [vmem:[%s546] sm:$0x1] %vm3433, %v3432
      %v3435 = vsel %vm1172, %v3402, 0.0
      %v3436 = vsel %vm1172, %v3403, 0.0
      %v3437 = vadd.f32 %v3435, %v3436
      %v3438 = vrot.slane %v3437, 4
      %v3439 = vadd.f32 %v3437, %v3438
      %v3440 = vrot.slane %v3439, 2
      %v3441 = vadd.f32 %v3439, %v3440
      %v3442 = vrot.slane %v3441, 1
      %v3443 = vadd.f32 %v3441, %v3442
      %v3444 = vmul.f32 %v3443, %v3431
      %3445 = vst.msk [vmem:[%s546 + $0x1] sm:$0x1] %vm3433, %v3444
      %v3446 = vsel %vm1172, %v3404, 0.0
      %v3447 = vsel %vm1172, %v3405, 0.0
      %v3448 = vadd.f32 %v3446, %v3447
      %v3449 = vrot.slane %v3448, 4
      %v3450 = vadd.f32 %v3448, %v3449
      %v3451 = vrot.slane %v3450, 2
      %v3452 = vadd.f32 %v3450, %v3451
      %v3453 = vrot.slane %v3452, 1
      %v3454 = vadd.f32 %v3452, %v3453
      %v3455 = vmul.f32 %v3454, %v3431
      %3456 = vst.msk [vmem:[%s546 + $0x2] sm:$0x1] %vm3433, %v3455
      %v3457 = vsel %vm1172, %v3406, 0.0
      %v3458 = vsel %vm1172, %v3407, 0.0
      %v3459 = vadd.f32 %v3457, %v3458
      %v3460 = vrot.slane %v3459, 4
      %v3461 = vadd.f32 %v3459, %v3460
      %v3462 = vrot.slane %v3461, 2
      %v3463 = vadd.f32 %v3461, %v3462
      %v3464 = vrot.slane %v3463, 1
      %v3465 = vadd.f32 %v3463, %v3464
      %v3466 = vmul.f32 %v3465, %v3431
      %3467 = vst.msk [vmem:[%s546 + $0x3] sm:$0x1] %vm3433, %v3466
      %v3468 = vsel %vm1172, %v3408, 0.0
      %v3469 = vsel %vm1172, %v3409, 0.0
      %v3470 = vadd.f32 %v3468, %v3469
      %v3471 = vrot.slane %v3470, 4
      %v3472 = vadd.f32 %v3470, %v3471
      %v3473 = vrot.slane %v3472, 2
      %v3474 = vadd.f32 %v3472, %v3473
      %v3475 = vrot.slane %v3474, 1
      %v3476 = vadd.f32 %v3474, %v3475
      %v3477 = vmul.f32 %v3476, %v3431
      %3478 = vst.msk [vmem:[%s546 + $0x4] sm:$0x1] %vm3433, %v3477
      %v3479 = vsel %vm1172, %v3410, 0.0
      %v3480 = vsel %vm1172, %v3411, 0.0
      %v3481 = vadd.f32 %v3479, %v3480
      %v3482 = vrot.slane %v3481, 4
      %v3483 = vadd.f32 %v3481, %v3482
      %v3484 = vrot.slane %v3483, 2
      %v3485 = vadd.f32 %v3483, %v3484
      %v3486 = vrot.slane %v3485, 1
      %v3487 = vadd.f32 %v3485, %v3486
      %v3488 = vmul.f32 %v3487, %v3431
      %3489 = vst.msk [vmem:[%s546 + $0x5] sm:$0x1] %vm3433, %v3488
      %v3490 = vsel %vm1172, %v3412, 0.0
      %v3491 = vsel %vm1172, %v3413, 0.0
      %v3492 = vadd.f32 %v3490, %v3491
      %v3493 = vrot.slane %v3492, 4
      %v3494 = vadd.f32 %v3492, %v3493
      %v3495 = vrot.slane %v3494, 2
      %v3496 = vadd.f32 %v3494, %v3495
      %v3497 = vrot.slane %v3496, 1
      %v3498 = vadd.f32 %v3496, %v3497
      %v3499 = vmul.f32 %v3498, %v3431
      %3500 = vst.msk [vmem:[%s546 + $0x6] sm:$0x1] %vm3433, %v3499
      %v3501 = vsel %vm1172, %v3414, 0.0
      %v3502 = vsel %vm1172, %v3415, 0.0
      %v3503 = vadd.f32 %v3501, %v3502
      %v3504 = vrot.slane %v3503, 4
      %v3505 = vadd.f32 %v3503, %v3504
      %v3506 = vrot.slane %v3505, 2
      %v3507 = vadd.f32 %v3505, %v3506
      %v3508 = vrot.slane %v3507, 1
      %v3509 = vadd.f32 %v3507, %v3508
      %v3510 = vmul.f32 %v3509, %v3431
      %3511 = vst.msk [vmem:[%s546 + $0x7] sm:$0x1] %vm3433, %v3510
      %p3512 = scmp.lt.s32.totalorder %s28, 1
      %s3513 = scalar_select %p3512, %s28, 1
      %s3514 = smul.addr %s3513, 8
      %s3515 = scalar_lea.vmem %s17, %s3514
      // Predicated region
      $region89: #{fc_based_gcn_forward.1} parent=87 // pred_check
        %p3516 = pneg %p408
      $region90: #{fc_based_gcn_forward.1} parent=87 // pred_check_branch
        %3518 = sbr.rel (%p3516) target = $region92
      $region91: #{fc_based_gcn_forward.1} parent=87 // pred_region
        _
      $region92: #{fc_based_gcn_forward.1} parent=87 // pred_fallthru
        _
    $region88: #{fc_based_gcn_forward.1} parent=5 // pred_fallthru
      _
    %p3519 = scmp.le.s32.totalorder 2, %s23
    // Predicated region
    $region93: #{fc_based_gcn_forward.1} parent=5 // pred_check
      %p3520 = pneg %p3519
    $region94: #{fc_based_gcn_forward.1} parent=5 // pred_check_branch
      %3522 = sbr.rel (%p3520) target = $region96
    $region95: #{fc_based_gcn_forward.1} parent=5 // pred_region
      %s3523 = ssub.s32 %s23, 2
      // Predicated region
      $region97: #{fc_based_gcn_forward.1} parent=95 // pred_check
        %p3524 = pneg %p414
      $region98: #{fc_based_gcn_forward.1} parent=95 // pred_check_branch
        %3526 = sbr.rel (%p3524) target = $region100
      $region99: #{fc_based_gcn_forward.1} parent=95 // pred_region
        %p3527 = scmp.lt.s32.totalorder %s29, 1
        %s3528 = scalar_select %p3527, %s29, 1
        %s3529 = smul.addr %s3528, 8
        %s3530 = scalar_lea.vmem %s17, %s3529
      $region100: #{fc_based_gcn_forward.1} parent=95 // pred_fallthru
        _
    $region96: #{fc_based_gcn_forward.1} parent=5 // pred_fallthru
      _
  $region6: #{fc_based_gcn_forward.1} parent=0 // loop_footer
    %s27 = sadd.s32 1, %s23
  $region7: #{fc_based_gcn_forward.1} parent=0 // loop_footer_branch
    %22 = sbr.rel target = $region3
  $region8: #{fc_based_gcn_forward.1} parent=0 // loop_exit
    _

</llo_original>
